<compile_context>
chip_gen: v7x
topology: tpu7x:2x2x1
jax: 0.10.0
libtpu: 0.0.40
codegen_flags: <defaults>
</compile_context>

<pallas_src>
import numpy as np
import jax
import jax.numpy as jnp
from jax import lax
from jax.experimental import pallas as pl
from jax.experimental.pallas import tpu as pltpu

NEG_SLOPE = 0.01                 # nn.LeakyReLU default
BN_EPS = 1e-5                    # nn.BatchNorm2d default
_VMEM_LIMIT = 32 * 1024 * 1024   # explicit (v5e default scoped limit is 16 MiB)
_VMEM_BUDGET = 12 * 1024 * 1024  # per-step working-set target; leaves headroom
                                 # for double buffering even on v7x (64 MiB VMEM)


def _leaky(x):
    return jnp.where(x >= 0, x, NEG_SLOPE * x)


def _pick_bt(B, H, W, c_in, c_mid, c_out):
    """Largest divisor of B whose per-step working set fits the VMEM budget."""
    hw = H * W
    per_img = (2 * 4 * hw * c_in          # input block, double-buffered
               + 2 * 4 * hw * c_out       # output block, double-buffered
               + 2 * (H + 2) * (W + 2) * c_in   # padded bf16 scratch
               + 2 * hw * 9 * c_in        # im2col slab (bf16)
               + 4 * hw * c_mid           # conv result u (f32)
               + 4 * hw * c_out)          # y (f32)
    bt = max(1, min(B, _VMEM_BUDGET // max(per_img, 1)))
    while B % bt != 0:
        bt -= 1
    if (H * W) % 8 != 0:          # keep (Bt*H*W, C) blocks sublane-aligned
        bt = B
    return bt


# ----------------------------------------------------------------------------
# Shared conv helper: u = conv3x3(leaky(x), pad=1) as ONE im2col GEMM.
# ----------------------------------------------------------------------------
def _conv3x3_im2col(x_f32, w1_ref, xpad_ref):
    """x_f32: (Bt, H, W, Cin) f32; xpad_ref: (Bt, H+2, W+2, Cin) bf16 scratch.
    Returns u: (Bt*H*W, Cmid) f32."""
    Bt, H, W, Cin = x_f32.shape
    # Zero-pad leaky(x) into VMEM (zeroed every step: cheap, and correct under
    # megacore sharding where a program_id==0 gate would miss one core).
    xpad_ref[...] = jnp.zeros_like(xpad_ref)
    xpad_ref[:, 1:H + 1, 1:W + 1, :] = _leaky(x_f32).astype(xpad_ref.dtype)
    xpad = xpad_ref[...]                                   # (Bt, H+2, W+2, Cin)
    # Patch slab: tap-major, channel-minor (matches w1 layout in the wrapper).
    cols = [xpad[:, di:di + H, dj:dj + W, :].reshape(Bt * H * W, Cin)
            for di in range(3) for dj in range(3)]
    patches = jnp.concatenate(cols, axis=-1)               # (Bt*H*W, 9*Cin) bf16
    return jnp.dot(patches, w1_ref[...], preferred_element_type=jnp.float32)


# ----------------------------------------------------------------------------
# bn=False: single fully fused kernel
#   conv3x3 -> +b1 -> LeakyReLU -> conv1x1 + b2 -> + residual x
# ----------------------------------------------------------------------------
def _fused_kernel(x_ref, w1_ref, b1_ref, w2_ref, b2_ref, out_ref, xpad_ref):
    x = x_ref[...]                                         # (Bt, H, W, Cin) f32
    u = _conv3x3_im2col(x, w1_ref, xpad_ref)               # (Bt*H*W, Cmid) f32
    t = _leaky(u + b1_ref[...])
    v = jnp.dot(t.astype(jnp.bfloat16), w2_ref[...],
                preferred_element_type=jnp.float32) + b2_ref[...]
    y = x.reshape(v.shape[0], -1) + v                      # residual (raw x)
    out_ref[...] = y.reshape(out_ref.shape).astype(out_ref.dtype)


# ----------------------------------------------------------------------------
# bn=True pass 1: u = conv3x3(leaky(x)) -> HBM, plus per-block (mean, M2).
# ----------------------------------------------------------------------------
def _conv_stats_kernel(x_ref, w1_ref, u_ref, stats_ref, xpad_ref):
    x = x_ref[...]
    u = _conv3x3_im2col(x, w1_ref, xpad_ref)               # (Bt*H*W, Cmid) f32
    u_ref[...] = u
    n = u.shape[0]
    mean = jnp.sum(u, axis=0, keepdims=True) * (1.0 / n)   # (1, Cmid)
    d = u - mean
    m2 = jnp.sum(d * d, axis=0, keepdims=True)             # centered partial SS
    stats_ref[...] = jnp.concatenate([mean, m2], axis=0).reshape(stats_ref.shape)


# ----------------------------------------------------------------------------
# bn=True pass 2: BN affine -> LeakyReLU -> conv1x1 + b2 -> + residual x
# (consumes the persisted u; no conv recompute).
# ----------------------------------------------------------------------------
def _bn_apply_kernel(x_ref, u_ref, scale_ref, shift_ref, w2_ref, b2_ref, out_ref):
    x = x_ref[...]                                         # (Bt, H, W, Cin) f32
    t = _leaky(u_ref[...] * scale_ref[...] + shift_ref[...])
    v = jnp.dot(t.astype(jnp.bfloat16), w2_ref[...],
                preferred_element_type=jnp.float32) + b2_ref[...]
    y = x.reshape(v.shape[0], -1) + v
    out_ref[...] = y.reshape(out_ref.shape).astype(out_ref.dtype)


# ----------------------------------------------------------------------------
# pallas_call wrappers
# ----------------------------------------------------------------------------
def _fused_call(x, w1b, b1, w2b, b2, bt):
    B, H, W, c_in = x.shape
    c_mid, c_out = w1b.shape[1], w2b.shape[1]
    return pl.pallas_call(
        _fused_kernel,
        out_shape=jax.ShapeDtypeStruct((B, H, W, c_out), jnp.float32),
        grid=(B // bt,),
        in_specs=[
            pl.BlockSpec((bt, H, W, c_in), lambda b: (b, 0, 0, 0)),
            pl.BlockSpec((9 * c_in, c_mid), lambda b: (0, 0)),
            pl.BlockSpec((1, c_mid), lambda b: (0, 0)),
            pl.BlockSpec((c_mid, c_out), lambda b: (0, 0)),
            pl.BlockSpec((1, c_out), lambda b: (0, 0)),
        ],
        out_specs=pl.BlockSpec((bt, H, W, c_out), lambda b: (b, 0, 0, 0)),
        scratch_shapes=[pltpu.VMEM((bt, H + 2, W + 2, c_in), jnp.bfloat16)],
        compiler_params=pltpu.CompilerParams(
            dimension_semantics=("parallel",),
            vmem_limit_bytes=_VMEM_LIMIT),
    )(x, w1b, b1, w2b, b2)


def _conv_stats_call(x, w1b, bt):
    B, H, W, c_in = x.shape
    c_mid = w1b.shape[1]
    nb = B // bt
    return pl.pallas_call(
        _conv_stats_kernel,
        out_shape=(jax.ShapeDtypeStruct((B * H * W, c_mid), jnp.float32),
                   jax.ShapeDtypeStruct((nb, 2, c_mid), jnp.float32)),
        grid=(nb,),
        in_specs=[
            pl.BlockSpec((bt, H, W, c_in), lambda b: (b, 0, 0, 0)),
            pl.BlockSpec((9 * c_in, c_mid), lambda b: (0, 0)),
        ],
        out_specs=(pl.BlockSpec((bt * H * W, c_mid), lambda b: (b, 0)),
                   pl.BlockSpec((1, 2, c_mid), lambda b: (b, 0, 0))),
        scratch_shapes=[pltpu.VMEM((bt, H + 2, W + 2, c_in), jnp.bfloat16)],
        compiler_params=pltpu.CompilerParams(
            dimension_semantics=("parallel",),   # per-block partials: no reduction axis
            vmem_limit_bytes=_VMEM_LIMIT),
    )(x, w1b)


def _bn_apply_call(x, u, scale, shift, w2b, b2, bt):
    B, H, W, c_in = x.shape
    c_mid, c_out = u.shape[1], w2b.shape[1]
    return pl.pallas_call(
        _bn_apply_kernel,
        out_shape=jax.ShapeDtypeStruct((B, H, W, c_out), jnp.float32),
        grid=(B // bt,),
        in_specs=[
            pl.BlockSpec((bt, H, W, c_in), lambda b: (b, 0, 0, 0)),
            pl.BlockSpec((bt * H * W, c_mid), lambda b: (b, 0)),
            pl.BlockSpec((1, c_mid), lambda b: (0, 0)),
            pl.BlockSpec((1, c_mid), lambda b: (0, 0)),
            pl.BlockSpec((c_mid, c_out), lambda b: (0, 0)),
            pl.BlockSpec((1, c_out), lambda b: (0, 0)),
        ],
        out_specs=pl.BlockSpec((bt, H, W, c_out), lambda b: (b, 0, 0, 0)),
        compiler_params=pltpu.CompilerParams(
            dimension_semantics=("parallel",),
            vmem_limit_bytes=_VMEM_LIMIT),
    )(x, u, scale, shift, w2b, b2)


# ----------------------------------------------------------------------------
# Forward (NCHW in / NCHW out, like the PyTorch module)
# ----------------------------------------------------------------------------
def resblock_forward(x_nchw, params, bn=False):
    w1, b1 = params["w1"], params["b1"]
    w2, b2 = params["w2"], params["b2"]
    c_mid, c_in = w1.shape[0], w1.shape[1]
    c_out = w2.shape[0]
    assert c_in == c_out, "residual add requires in_channels == out_channels"
    if bn:
        assert c_mid == c_out, "BatchNorm2d(out_channels) requires mid == out"

    x = jnp.transpose(x_nchw, (0, 2, 3, 1)).astype(jnp.float32)     # NHWC
    B, H, W, _ = x.shape
    bt = _pick_bt(B, H, W, c_in, c_mid, c_out)

    # (Cmid, Cin, 3, 3) -> (3, 3, Cin, Cmid) -> (9*Cin, Cmid): tap-major rows,
    # channel-minor — matches the in-kernel im2col column order.
    w1b = jnp.transpose(w1, (2, 3, 1, 0)).reshape(9 * c_in, c_mid).astype(jnp.bfloat16)
    # (Cout, Cmid, 1, 1) -> (Cmid, Cout)
    w2b = jnp.transpose(w2[:, :, 0, 0], (1, 0)).astype(jnp.bfloat16)
    b2r = b2.reshape(1, c_out).astype(jnp.float32)

    if bn:
        # Pass 1: conv output u (persisted) + per-block centered partial stats.
        u, stats = _conv_stats_call(x, w1b, bt)
        means, m2s = stats[:, 0, :], stats[:, 1, :]                  # (nb, Cmid)
        n_total = B * H * W
        n_per = n_total // stats.shape[0]
        mu = jnp.mean(means, axis=0)
        var = (jnp.sum(m2s, axis=0)
               + n_per * jnp.sum((means - mu) ** 2, axis=0)) / n_total
        var = jnp.maximum(var, 0.0)
        inv = lax.rsqrt(var + BN_EPS)
        scale = (params["gamma"] * inv).reshape(1, c_mid).astype(jnp.float32)
        shift = (params["beta"] - mu * params["gamma"] * inv).reshape(1, c_mid).astype(jnp.float32)
        # conv bias b1 dropped: train-mode batch-stat BN cancels it exactly.
        y = _bn_apply_call(x, u, scale, shift, w2b, b2r, bt)
    else:
        y = _fused_call(x, w1b, b1.reshape(1, c_mid).astype(jnp.float32),
                        w2b, b2r, bt)
    return jnp.transpose(y, (0, 3, 1, 2))                            # back to NCHW


# TODO(synk): BatchNorm2d running-stats update (training-time side effect) and
# eval-mode normalization with running statistics are not reproduced; the
# kernel implements train-mode batch statistics only.


# ----------------------------------------------------------------------------
# Pure-JAX f32 reference and parameter init
# ----------------------------------------------------------------------------
def resblock_reference(x_nchw, params, bn=False):
    a = _leaky(x_nchw)
    u = lax.conv_general_dilated(a, params["w1"], (1, 1), ((1, 1), (1, 1)),
                                 dimension_numbers=("NCHW", "OIHW", "NCHW"))
    u = u + params["b1"][None, :, None, None]
    if bn:
        mu = jnp.mean(u, axis=(0, 2, 3), keepdims=True)
        var = jnp.mean((u - mu) ** 2, axis=(0, 2, 3), keepdims=True)
        u = (u - mu) * lax.rsqrt(var + BN_EPS)
        u = u * params["gamma"][None, :, None, None] + params["beta"][None, :, None, None]
    t = _leaky(u)
    v = lax.conv_general_dilated(t, params["w2"], (1, 1), ((0, 0), (0, 0)),
                                 dimension_numbers=("NCHW", "OIHW", "NCHW"))
    v = v + params["b2"][None, :, None, None]
    return x_nchw + v


def init_params(key, c_in, c_out, c_mid=None):
    if c_mid is None:
        c_mid = c_out
    k1, k2, k3, k4, k5, k6 = jax.random.split(key, 6)
    w1 = jax.random.normal(k1, (c_mid, c_in, 3, 3), jnp.float32) / np.sqrt(9 * c_in)
    b1 = 0.1 * jax.random.normal(k2, (c_mid,), jnp.float32)
    w2 = jax.random.normal(k3, (c_out, c_mid, 1, 1), jnp.float32) / np.sqrt(c_mid)
    b2 = 0.1 * jax.random.normal(k4, (c_out,), jnp.float32)
    gamma = 1.0 + 0.1 * jax.random.normal(k5, (c_out,), jnp.float32)
    beta = 0.1 * jax.random.normal(k6, (c_out,), jnp.float32)
    return {"w1": w1, "b1": b1, "w2": w2, "b2": b2, "gamma": gamma, "beta": beta}


if __name__ == "__main__":
    B, C, H, W = 2, 32, 16, 16           # residual add => in_channels == out_channels

    key = jax.random.PRNGKey(0)
    kx, kp = jax.random.split(key)
    x = jax.random.normal(kx, (B, C, H, W), jnp.float32)
    params = init_params(kp, C, C)

    fwd = jax.jit(resblock_forward, static_argnames=("bn",))

    out_bn = jax.block_until_ready(fwd(x, params, bn=True))
    out_nobn = jax.block_until_ready(fwd(x, params, bn=False))

    assert out_bn.shape == (B, C, H, W), out_bn.shape
    assert out_nobn.shape == (B, C, H, W), out_nobn.shape
    assert bool(jnp.all(jnp.isfinite(out_bn)))
    assert bool(jnp.all(jnp.isfinite(out_nobn)))

    # structural check vs a pure-JAX f32 reference (kernel uses bf16 MXU
    # operands, hence the generous tolerance)
    err_bn = float(jnp.max(jnp.abs(out_bn - resblock_reference(x, params, bn=True))))
    err_nobn = float(jnp.max(jnp.abs(out_nobn - resblock_reference(x, params, bn=False))))
    assert err_bn < 0.15 and err_nobn < 0.15, (err_bn, err_nobn)

    print("KERNEL_OK")
</pallas_src>

<mosaic_0001>
module attributes {stable_mosaic.version = 11 : i64} {
  func.func @_conv_stats_kernel(%arg0: i32, %arg1: memref<2x16x16x32xf32, #tpu.memory_space<vmem>>, %arg2: memref<288x32xbf16, #tpu.memory_space<vmem>>, %arg3: memref<512x32xf32, #tpu.memory_space<vmem>>, %arg4: memref<1x2x32xf32, #tpu.memory_space<vmem>>, %arg5: memref<2x18x18x32xbf16, #tpu.memory_space<vmem>>) attributes {dimension_semantics = [#tpu.dimension_semantics<parallel>], iteration_bounds = array<i64: 1>, scalar_prefetch = 0 : i64, scratch_operands = 1 : i64, tpu.core_type = #tpu.core_type<tc>, window_params = [{transform_indices = @transform_0, window_bounds = array<i64: 2, 16, 16, 32>}, {pipeline_mode = #tpu.pipeline_mode<synchronous>, transform_indices = @transform_1, window_bounds = array<i64: 288, 32>}, {transform_indices = @transform_2, window_bounds = array<i64: 512, 32>}, {transform_indices = @transform_3, window_bounds = array<i64: 1, 2, 32>}]} {
    %c0 = arith.constant 0 : index
    %c0_0 = arith.constant 0 : index
    %c0_1 = arith.constant 0 : index
    %c0_2 = arith.constant 0 : index
    %0 = vector.load %arg1[%c0, %c0_0, %c0_1, %c0_2] : memref<2x16x16x32xf32, #tpu.memory_space<vmem>>, vector<2x16x16x32xf32>
    %cst = arith.constant 0.000000e+00 : bf16
    %1 = vector.broadcast %cst : bf16 to vector<2x18x18x32xbf16>
    %c0_3 = arith.constant 0 : index
    %c0_4 = arith.constant 0 : index
    %c0_5 = arith.constant 0 : index
    %c0_6 = arith.constant 0 : index
    %2 = vector.load %arg5[%c0_3, %c0_4, %c0_5, %c0_6] : memref<2x18x18x32xbf16, #tpu.memory_space<vmem>>, vector<2x18x18x32xbf16>
    tpu.vector_store %arg5[%c0_3, %c0_4, %c0_5, %c0_6], %1 {strides = array<i32>} : memref<2x18x18x32xbf16, #tpu.memory_space<vmem>>, vector<2x18x18x32xbf16>,
    %cst_7 = arith.constant 0.000000e+00 : f32
    %3 = vector.broadcast %cst_7 : f32 to vector<2x16x16x32xf32>
    %4 = arith.cmpf oge, %0, %3 : vector<2x16x16x32xf32>
    %cst_8 = arith.constant 0.00999999977 : f32
    %5 = vector.broadcast %cst_8 : f32 to vector<2x16x16x32xf32>
    %6 = arith.mulf %5, %0 : vector<2x16x16x32xf32>
    %7 = arith.select %4, %0, %6 : vector<2x16x16x32xi1>, vector<2x16x16x32xf32>
    %8 = arith.truncf %7 : vector<2x16x16x32xf32> to vector<2x16x16x32xbf16>
    %c0_9 = arith.constant 0 : index
    %c1 = arith.constant 1 : index
    %c1_10 = arith.constant 1 : index
    %c0_11 = arith.constant 0 : index
    %9 = vector.load %arg5[%c0_9, %c1, %c1_10, %c0_11] : memref<2x18x18x32xbf16, #tpu.memory_space<vmem>>, vector<2x16x16x32xbf16>
    tpu.vector_store %arg5[%c0_9, %c1, %c1_10, %c0_11], %8 {strides = array<i32>} : memref<2x18x18x32xbf16, #tpu.memory_space<vmem>>, vector<2x16x16x32xbf16>,
    %c0_12 = arith.constant 0 : index
    %c0_13 = arith.constant 0 : index
    %c0_14 = arith.constant 0 : index
    %c0_15 = arith.constant 0 : index
    %10 = vector.load %arg5[%c0_12, %c0_13, %c0_14, %c0_15] : memref<2x18x18x32xbf16, #tpu.memory_space<vmem>>, vector<2x18x18x32xbf16>
    %11 = vector.extract_strided_slice %10 {offsets = [0, 0, 0, 0], sizes = [2, 16, 16, 32], strides = [1, 1, 1, 1]} : vector<2x18x18x32xbf16> to vector<2x16x16x32xbf16>
    %12 = vector.shape_cast %11 : vector<2x16x16x32xbf16> to vector<512x32xbf16>
    %13 = vector.extract_strided_slice %10 {offsets = [0, 0, 1, 0], sizes = [2, 16, 16, 32], strides = [1, 1, 1, 1]} : vector<2x18x18x32xbf16> to vector<2x16x16x32xbf16>
    %14 = vector.shape_cast %13 : vector<2x16x16x32xbf16> to vector<512x32xbf16>
    %15 = vector.extract_strided_slice %10 {offsets = [0, 0, 2, 0], sizes = [2, 16, 16, 32], strides = [1, 1, 1, 1]} : vector<2x18x18x32xbf16> to vector<2x16x16x32xbf16>
    %16 = vector.shape_cast %15 : vector<2x16x16x32xbf16> to vector<512x32xbf16>
    %17 = vector.extract_strided_slice %10 {offsets = [0, 1, 0, 0], sizes = [2, 16, 16, 32], strides = [1, 1, 1, 1]} : vector<2x18x18x32xbf16> to vector<2x16x16x32xbf16>
    %18 = vector.shape_cast %17 : vector<2x16x16x32xbf16> to vector<512x32xbf16>
    %19 = vector.extract_strided_slice %10 {offsets = [0, 1, 1, 0], sizes = [2, 16, 16, 32], strides = [1, 1, 1, 1]} : vector<2x18x18x32xbf16> to vector<2x16x16x32xbf16>
    %20 = vector.shape_cast %19 : vector<2x16x16x32xbf16> to vector<512x32xbf16>
    %21 = vector.extract_strided_slice %10 {offsets = [0, 1, 2, 0], sizes = [2, 16, 16, 32], strides = [1, 1, 1, 1]} : vector<2x18x18x32xbf16> to vector<2x16x16x32xbf16>
    %22 = vector.shape_cast %21 : vector<2x16x16x32xbf16> to vector<512x32xbf16>
    %23 = vector.extract_strided_slice %10 {offsets = [0, 2, 0, 0], sizes = [2, 16, 16, 32], strides = [1, 1, 1, 1]} : vector<2x18x18x32xbf16> to vector<2x16x16x32xbf16>
    %24 = vector.shape_cast %23 : vector<2x16x16x32xbf16> to vector<512x32xbf16>
    %25 = vector.extract_strided_slice %10 {offsets = [0, 2, 1, 0], sizes = [2, 16, 16, 32], strides = [1, 1, 1, 1]} : vector<2x18x18x32xbf16> to vector<2x16x16x32xbf16>
    %26 = vector.shape_cast %25 : vector<2x16x16x32xbf16> to vector<512x32xbf16>
    %27 = vector.extract_strided_slice %10 {offsets = [0, 2, 2, 0], sizes = [2, 16, 16, 32], strides = [1, 1, 1, 1]} : vector<2x18x18x32xbf16> to vector<2x16x16x32xbf16>
    %28 = vector.shape_cast %27 : vector<2x16x16x32xbf16> to vector<512x32xbf16>
    %29 = tpu.concatenate %12, %14, %16, %18, %20, %22, %24, %26, %28 in 1 : vector<512x32xbf16>, vector<512x32xbf16>, vector<512x32xbf16>, vector<512x32xbf16>, vector<512x32xbf16>, vector<512x32xbf16>, vector<512x32xbf16>, vector<512x32xbf16>, vector<512x32xbf16> -> vector<512x288xbf16>
    %c0_16 = arith.constant 0 : index
    %c0_17 = arith.constant 0 : index
    %30 = vector.load %arg2[%c0_16, %c0_17] : memref<288x32xbf16, #tpu.memory_space<vmem>>, vector<288x32xbf16>
    %cst_18 = arith.constant dense<0.000000e+00> : vector<512x32xf32>
    %31 = tpu.matmul %29, %30, %cst_18 {dimension_numbers = #tpu.dot_dimension_numbers<[1], [0], [0], [1], [0, 0, 1, 1], [], []>} : vector<512x288xbf16>, vector<288x32xbf16>, vector<512x32xf32> -> vector<512x32xf32>
    %c0_19 = arith.constant 0 : index
    %c0_20 = arith.constant 0 : index
    %32 = vector.load %arg3[%c0_19, %c0_20] : memref<512x32xf32, #tpu.memory_space<vmem>>, vector<512x32xf32>
    tpu.vector_store %arg3[%c0_19, %c0_20], %31 {strides = array<i32>} : memref<512x32xf32, #tpu.memory_space<vmem>>, vector<512x32xf32>,
    %cst_21 = arith.constant dense<0.000000e+00> : vector<32xf32>
    %33 = vector.multi_reduction <add>, %31, %cst_21 [0] : vector<512x32xf32> to vector<32xf32>
    %34 = vector.shape_cast %33 : vector<32xf32> to vector<1x32xf32>
    %cst_22 = arith.constant 0.001953125 : f32
    %35 = vector.broadcast %cst_22 : f32 to vector<1x32xf32>
    %36 = arith.mulf %34, %35 : vector<1x32xf32>
    %37 = vector.broadcast %36 : vector<1x32xf32> to vector<512x32xf32>
    %38 = arith.subf %31, %37 : vector<512x32xf32>
    %39 = arith.mulf %38, %38 : vector<512x32xf32>
    %cst_23 = arith.constant dense<0.000000e+00> : vector<32xf32>
    %40 = vector.multi_reduction <add>, %39, %cst_23 [0] : vector<512x32xf32> to vector<32xf32>
    %41 = vector.shape_cast %40 : vector<32xf32> to vector<1x32xf32>
    %42 = tpu.concatenate %36, %41 in 0 : vector<1x32xf32>, vector<1x32xf32> -> vector<2x32xf32>
    %43 = vector.shape_cast %42 : vector<2x32xf32> to vector<1x2x32xf32>
    %c0_24 = arith.constant 0 : index
    %c0_25 = arith.constant 0 : index
    %c0_26 = arith.constant 0 : index
    %44 = vector.load %arg4[%c0_24, %c0_25, %c0_26] : memref<1x2x32xf32, #tpu.memory_space<vmem>>, vector<1x2x32xf32>
    tpu.vector_store %arg4[%c0_24, %c0_25, %c0_26], %43 {strides = array<i32>} : memref<1x2x32xf32, #tpu.memory_space<vmem>>, vector<1x2x32xf32>,
    return
  }
  func.func @transform_0(%arg0: i32) -> (i32, i32, i32, i32) {
    %c0_i32 = arith.constant 0 : i32
    %c0_i32_0 = arith.constant 0 : i32
    %c0_i32_1 = arith.constant 0 : i32
    %c0_i32_2 = arith.constant 0 : i32
    return %arg0, %c0_i32, %c0_i32_0, %c0_i32_1 : i32, i32, i32, i32
  }
  func.func @transform_1(%arg0: i32) -> (i32, i32) {
    %c0_i32 = arith.constant 0 : i32
    %c0_i32_0 = arith.constant 0 : i32
    %c0_i32_1 = arith.constant 0 : i32
    return %c0_i32, %c0_i32_0 : i32, i32
  }
  func.func @transform_2(%arg0: i32) -> (i32, i32) {
    %c0_i32 = arith.constant 0 : i32
    %c0_i32_0 = arith.constant 0 : i32
    return %arg0, %c0_i32 : i32, i32
  }
  func.func @transform_3(%arg0: i32) -> (i32, i32, i32) {
    %c0_i32 = arith.constant 0 : i32
    %c0_i32_0 = arith.constant 0 : i32
    %c0_i32_1 = arith.constant 0 : i32
    return %arg0, %c0_i32, %c0_i32_0 : i32, i32, i32
  }
}

module attributes {stable_mosaic.version = 11 : i64} {
  func.func @_bn_apply_kernel(%arg0: i32, %arg1: memref<2x16x16x32xf32, #tpu.memory_space<vmem>>, %arg2: memref<512x32xf32, #tpu.memory_space<vmem>>, %arg3: memref<1x32xf32, #tpu.memory_space<vmem>>, %arg4: memref<1x32xf32, #tpu.memory_space<vmem>>, %arg5: memref<32x32xbf16, #tpu.memory_space<vmem>>, %arg6: memref<1x32xf32, #tpu.memory_space<vmem>>, %arg7: memref<2x16x16x32xf32, #tpu.memory_space<vmem>>) attributes {dimension_semantics = [#tpu.dimension_semantics<parallel>], iteration_bounds = array<i64: 1>, scalar_prefetch = 0 : i64, scratch_operands = 0 : i64, tpu.core_type = #tpu.core_type<tc>, window_params = [{transform_indices = @transform_0, window_bounds = array<i64: 2, 16, 16, 32>}, {transform_indices = @transform_1, window_bounds = array<i64: 512, 32>}, {pipeline_mode = #tpu.pipeline_mode<synchronous>, transform_indices = @transform_2, window_bounds = array<i64: 1, 32>}, {pipeline_mode = #tpu.pipeline_mode<synchronous>, transform_indices = @transform_3, window_bounds = array<i64: 1, 32>}, {pipeline_mode = #tpu.pipeline_mode<synchronous>, transform_indices = @transform_4, window_bounds = array<i64: 32, 32>}, {pipeline_mode = #tpu.pipeline_mode<synchronous>, transform_indices = @transform_5, window_bounds = array<i64: 1, 32>}, {transform_indices = @transform_6, window_bounds = array<i64: 2, 16, 16, 32>}]} {
    %c0 = arith.constant 0 : index
    %c0_0 = arith.constant 0 : index
    %c0_1 = arith.constant 0 : index
    %c0_2 = arith.constant 0 : index
    %0 = vector.load %arg1[%c0, %c0_0, %c0_1, %c0_2] : memref<2x16x16x32xf32, #tpu.memory_space<vmem>>, vector<2x16x16x32xf32>
    %c0_3 = arith.constant 0 : index
    %c0_4 = arith.constant 0 : index
    %1 = vector.load %arg2[%c0_3, %c0_4] : memref<512x32xf32, #tpu.memory_space<vmem>>, vector<512x32xf32>
    %c0_5 = arith.constant 0 : index
    %c0_6 = arith.constant 0 : index
    %2 = vector.load %arg3[%c0_5, %c0_6] : memref<1x32xf32, #tpu.memory_space<vmem>>, vector<1x32xf32>
    %3 = vector.broadcast %2 : vector<1x32xf32> to vector<512x32xf32>
    %4 = arith.mulf %1, %3 : vector<512x32xf32>
    %c0_7 = arith.constant 0 : index
    %c0_8 = arith.constant 0 : index
    %5 = vector.load %arg4[%c0_7, %c0_8] : memref<1x32xf32, #tpu.memory_space<vmem>>, vector<1x32xf32>
    %6 = vector.broadcast %5 : vector<1x32xf32> to vector<512x32xf32>
    %7 = arith.addf %4, %6 : vector<512x32xf32>
    %cst = arith.constant 0.000000e+00 : f32
    %8 = vector.broadcast %cst : f32 to vector<512x32xf32>
    %9 = arith.cmpf oge, %7, %8 : vector<512x32xf32>
    %cst_9 = arith.constant 0.00999999977 : f32
    %10 = vector.broadcast %cst_9 : f32 to vector<512x32xf32>
    %11 = arith.mulf %10, %7 : vector<512x32xf32>
    %12 = arith.select %9, %7, %11 : vector<512x32xi1>, vector<512x32xf32>
    %13 = arith.truncf %12 : vector<512x32xf32> to vector<512x32xbf16>
    %c0_10 = arith.constant 0 : index
    %c0_11 = arith.constant 0 : index
    %14 = vector.load %arg5[%c0_10, %c0_11] : memref<32x32xbf16, #tpu.memory_space<vmem>>, vector<32x32xbf16>
    %cst_12 = arith.constant dense<0.000000e+00> : vector<512x32xf32>
    %15 = tpu.matmul %13, %14, %cst_12 {dimension_numbers = #tpu.dot_dimension_numbers<[1], [0], [0], [1], [0, 0, 1, 1], [], []>} : vector<512x32xbf16>, vector<32x32xbf16>, vector<512x32xf32> -> vector<512x32xf32>
    %c0_13 = arith.constant 0 : index
    %c0_14 = arith.constant 0 : index
    %16 = vector.load %arg6[%c0_13, %c0_14] : memref<1x32xf32, #tpu.memory_space<vmem>>, vector<1x32xf32>
    %17 = vector.broadcast %16 : vector<1x32xf32> to vector<512x32xf32>
    %18 = arith.addf %15, %17 : vector<512x32xf32>
    %19 = vector.shape_cast %0 : vector<2x16x16x32xf32> to vector<512x32xf32>
    %20 = arith.addf %19, %18 : vector<512x32xf32>
    %21 = vector.shape_cast %20 : vector<512x32xf32> to vector<2x16x16x32xf32>
    %c0_15 = arith.constant 0 : index
    %c0_16 = arith.constant 0 : index
    %c0_17 = arith.constant 0 : index
    %c0_18 = arith.constant 0 : index
    %22 = vector.load %arg7[%c0_15, %c0_16, %c0_17, %c0_18] : memref<2x16x16x32xf32, #tpu.memory_space<vmem>>, vector<2x16x16x32xf32>
    tpu.vector_store %arg7[%c0_15, %c0_16, %c0_17, %c0_18], %21 {strides = array<i32>} : memref<2x16x16x32xf32, #tpu.memory_space<vmem>>, vector<2x16x16x32xf32>,
    return
  }
  func.func @transform_0(%arg0: i32) -> (i32, i32, i32, i32) {
    %c0_i32 = arith.constant 0 : i32
    %c0_i32_0 = arith.constant 0 : i32
    %c0_i32_1 = arith.constant 0 : i32
    %c0_i32_2 = arith.constant 0 : i32
    return %arg0, %c0_i32, %c0_i32_0, %c0_i32_1 : i32, i32, i32, i32
  }
  func.func @transform_1(%arg0: i32) -> (i32, i32) {
    %c0_i32 = arith.constant 0 : i32
    %c0_i32_0 = arith.constant 0 : i32
    return %arg0, %c0_i32 : i32, i32
  }
  func.func @transform_2(%arg0: i32) -> (i32, i32) {
    %c0_i32 = arith.constant 0 : i32
    %c0_i32_0 = arith.constant 0 : i32
    %c0_i32_1 = arith.constant 0 : i32
    return %c0_i32, %c0_i32_0 : i32, i32
  }
  func.func @transform_3(%arg0: i32) -> (i32, i32) {
    %c0_i32 = arith.constant 0 : i32
    %c0_i32_0 = arith.constant 0 : i32
    %c0_i32_1 = arith.constant 0 : i32
    return %c0_i32, %c0_i32_0 : i32, i32
  }
  func.func @transform_4(%arg0: i32) -> (i32, i32) {
    %c0_i32 = arith.constant 0 : i32
    %c0_i32_0 = arith.constant 0 : i32
    %c0_i32_1 = arith.constant 0 : i32
    return %c0_i32, %c0_i32_0 : i32, i32
  }
  func.func @transform_5(%arg0: i32) -> (i32, i32) {
    %c0_i32 = arith.constant 0 : i32
    %c0_i32_0 = arith.constant 0 : i32
    %c0_i32_1 = arith.constant 0 : i32
    return %c0_i32, %c0_i32_0 : i32, i32
  }
  func.func @transform_6(%arg0: i32) -> (i32, i32, i32, i32) {
    %c0_i32 = arith.constant 0 : i32
    %c0_i32_0 = arith.constant 0 : i32
    %c0_i32_1 = arith.constant 0 : i32
    %c0_i32_2 = arith.constant 0 : i32
    return %arg0, %c0_i32, %c0_i32_0, %c0_i32_1 : i32, i32, i32, i32
  }
}

</mosaic_0001>

<llo_original>
// kernel: resblock_forward.3
$region0: #{resblock_forward.3}
  #allocation0 [shape = 'u32[]', space=smem, size = 0x4, offset = 0x4, fixed_abs, tag = 'smem constant byte address 0x4 - core index']
  #allocation1 [shape = 'u32[144,128]{1,0:T(1,128)}', space=vmem, size = 0x12000, scoped, tag = 'internal scratch']
  %s0 = inlined_call_operand.vmem [shape: f32[2,16,16,32], index: 0, kind: input, shape index: {}]
  %s1 = inlined_call_operand.vmem [shape: f32[512,32], index: 1, kind: input, shape index: {}]
  %s2 = inlined_call_operand.vmem [shape: f32[1,32], index: 2, kind: input, shape index: {}]
  %s3 = inlined_call_operand.vmem [shape: f32[1,32], index: 3, kind: input, shape index: {}]
  %s4 = inlined_call_operand.vmem [shape: bf16[32,32], index: 4, kind: input, shape index: {}]
  %s5 = inlined_call_operand.vmem [shape: f32[1,32], index: 5, kind: input, shape index: {}]
  %s6 = inlined_call_operand.hbm [shape: f32[2,16,16,32], index: 6, kind: output, shape index: {}]
  %s7 = sld [smem:[#allocation0]]
  $region34: #{resblock_forward.3} parent=0
    _
  %s9 = ssub.s32 1, %s7
  %s10 = scalar_select 0, %s9, %s7
  $region1: #{resblock_forward.3} parent=0
    #allocation2 [shape = 'u8[262144]{0}', space=vmem, size = 0x40000, scoped, tag = 'output window, operand 0, single buffered']
    #allocation3 [shape = 's32[1]{0}', space=sflag, size = 0x4, scoped, tag = 'scoped memory for resblock_forward.3']
    %11 = vsyncpa [#allocation3], 0
    // Predicated region
    $region2: #{resblock_forward.3} parent=1 // pred_check
      _
    $region3: #{resblock_forward.3} parent=1 // pred_check_branch
      %13 = sbr.rel (0) target = $region5
    $region4: #{resblock_forward.3} parent=1 // pred_region
      _
    $region5: #{resblock_forward.3} parent=1 // pred_fallthru
      _
    // Predicated region
    $region6: #{resblock_forward.3} parent=1 // pred_check
      _
    $region7: #{resblock_forward.3} parent=1 // pred_check_branch
      %15 = sbr.rel (0) target = $region9
    $region8: #{resblock_forward.3} parent=1 // pred_region
      _
    $region9: #{resblock_forward.3} parent=1 // pred_fallthru
      _
    // Predicated region
    $region10: #{resblock_forward.3} parent=1 // pred_check
      _
    $region11: #{resblock_forward.3} parent=1 // pred_check_branch
      %17 = sbr.rel (0) target = $region13
    $region12: #{resblock_forward.3} parent=1 // pred_region
      _
    $region13: #{resblock_forward.3} parent=1 // pred_fallthru
      _
    // Predicated region
    $region14: #{resblock_forward.3} parent=1 // pred_check
      _
    $region15: #{resblock_forward.3} parent=1 // pred_check_branch
      %19 = sbr.rel (0) target = $region17
    $region16: #{resblock_forward.3} parent=1 // pred_region
      _
    $region17: #{resblock_forward.3} parent=1 // pred_fallthru
      _
    // Predicated region
    $region18: #{resblock_forward.3} parent=1 // pred_check
      _
    $region19: #{resblock_forward.3} parent=1 // pred_check_branch
      %21 = sbr.rel (0) target = $region21
    $region20: #{resblock_forward.3} parent=1 // pred_region
      _
    $region21: #{resblock_forward.3} parent=1 // pred_fallthru
      _
    // Predicated region
    $region22: #{resblock_forward.3} parent=1 // pred_check
      _
    $region23: #{resblock_forward.3} parent=1 // pred_check_branch
      %23 = sbr.rel (0) target = $region25
    $region24: #{resblock_forward.3} parent=1 // pred_region
      _
    $region25: #{resblock_forward.3} parent=1 // pred_fallthru
      _
    %v25 = vld [vmem:[%s0] sm:$0xff]
    %v26 = vld [vmem:[%s0 + $0x8] sm:$0xff]
    %v27 = vld [vmem:[%s0 + $0x10] sm:$0xff]
    %v28 = vld [vmem:[%s0 + $0x18] sm:$0xff]
    %v29 = vld [vmem:[%s0 + $0x20] sm:$0xff]
    %v30 = vld [vmem:[%s0 + $0x28] sm:$0xff]
    %v31 = vld [vmem:[%s0 + $0x30] sm:$0xff]
    %v32 = vld [vmem:[%s0 + $0x38] sm:$0xff]
    %v33 = vld [vmem:[%s0 + $0x40] sm:$0xff]
    %v34 = vld [vmem:[%s0 + $0x48] sm:$0xff]
    %v35 = vld [vmem:[%s0 + $0x50] sm:$0xff]
    %v36 = vld [vmem:[%s0 + $0x58] sm:$0xff]
    %v37 = vld [vmem:[%s0 + $0x60] sm:$0xff]
    %v38 = vld [vmem:[%s0 + $0x68] sm:$0xff]
    %v39 = vld [vmem:[%s0 + $0x70] sm:$0xff]
    %v40 = vld [vmem:[%s0 + $0x78] sm:$0xff]
    %v41 = vld [vmem:[%s0 + $0x80] sm:$0xff]
    %v42 = vld [vmem:[%s0 + $0x88] sm:$0xff]
    %v43 = vld [vmem:[%s0 + $0x90] sm:$0xff]
    %v44 = vld [vmem:[%s0 + $0x98] sm:$0xff]
    %v45 = vld [vmem:[%s0 + $0xa0] sm:$0xff]
    %v46 = vld [vmem:[%s0 + $0xa8] sm:$0xff]
    %v47 = vld [vmem:[%s0 + $0xb0] sm:$0xff]
    %v48 = vld [vmem:[%s0 + $0xb8] sm:$0xff]
    %v49 = vld [vmem:[%s0 + $0xc0] sm:$0xff]
    %v50 = vld [vmem:[%s0 + $0xc8] sm:$0xff]
    %v51 = vld [vmem:[%s0 + $0xd0] sm:$0xff]
    %v52 = vld [vmem:[%s0 + $0xd8] sm:$0xff]
    %v53 = vld [vmem:[%s0 + $0xe0] sm:$0xff]
    %v54 = vld [vmem:[%s0 + $0xe8] sm:$0xff]
    %v55 = vld [vmem:[%s0 + $0xf0] sm:$0xff]
    %v56 = vld [vmem:[%s0 + $0xf8] sm:$0xff]
    %v57 = vld [vmem:[%s0 + $0x100] sm:$0xff]
    %v58 = vld [vmem:[%s0 + $0x108] sm:$0xff]
    %v59 = vld [vmem:[%s0 + $0x110] sm:$0xff]
    %v60 = vld [vmem:[%s0 + $0x118] sm:$0xff]
    %v61 = vld [vmem:[%s0 + $0x120] sm:$0xff]
    %v62 = vld [vmem:[%s0 + $0x128] sm:$0xff]
    %v63 = vld [vmem:[%s0 + $0x130] sm:$0xff]
    %v64 = vld [vmem:[%s0 + $0x138] sm:$0xff]
    %v65 = vld [vmem:[%s0 + $0x140] sm:$0xff]
    %v66 = vld [vmem:[%s0 + $0x148] sm:$0xff]
    %v67 = vld [vmem:[%s0 + $0x150] sm:$0xff]
    %v68 = vld [vmem:[%s0 + $0x158] sm:$0xff]
    %v69 = vld [vmem:[%s0 + $0x160] sm:$0xff]
    %v70 = vld [vmem:[%s0 + $0x168] sm:$0xff]
    %v71 = vld [vmem:[%s0 + $0x170] sm:$0xff]
    %v72 = vld [vmem:[%s0 + $0x178] sm:$0xff]
    %v73 = vld [vmem:[%s0 + $0x180] sm:$0xff]
    %v74 = vld [vmem:[%s0 + $0x188] sm:$0xff]
    %v75 = vld [vmem:[%s0 + $0x190] sm:$0xff]
    %v76 = vld [vmem:[%s0 + $0x198] sm:$0xff]
    %v77 = vld [vmem:[%s0 + $0x1a0] sm:$0xff]
    %v78 = vld [vmem:[%s0 + $0x1a8] sm:$0xff]
    %v79 = vld [vmem:[%s0 + $0x1b0] sm:$0xff]
    %v80 = vld [vmem:[%s0 + $0x1b8] sm:$0xff]
    %v81 = vld [vmem:[%s0 + $0x1c0] sm:$0xff]
    %v82 = vld [vmem:[%s0 + $0x1c8] sm:$0xff]
    %v83 = vld [vmem:[%s0 + $0x1d0] sm:$0xff]
    %v84 = vld [vmem:[%s0 + $0x1d8] sm:$0xff]
    %v85 = vld [vmem:[%s0 + $0x1e0] sm:$0xff]
    %v86 = vld [vmem:[%s0 + $0x1e8] sm:$0xff]
    %v87 = vld [vmem:[%s0 + $0x1f0] sm:$0xff]
    %v88 = vld [vmem:[%s0 + $0x1f8] sm:$0xff]
    %v89 = vld [vmem:[%s1] sm:$0xff]
    %v90 = vld [vmem:[%s1 + $0x8] sm:$0xff]
    %v91 = vld [vmem:[%s1 + $0x10] sm:$0xff]
    %v92 = vld [vmem:[%s1 + $0x18] sm:$0xff]
    %v93 = vld [vmem:[%s1 + $0x20] sm:$0xff]
    %v94 = vld [vmem:[%s1 + $0x28] sm:$0xff]
    %v95 = vld [vmem:[%s1 + $0x30] sm:$0xff]
    %v96 = vld [vmem:[%s1 + $0x38] sm:$0xff]
    %v97 = vld [vmem:[%s1 + $0x40] sm:$0xff]
    %v98 = vld [vmem:[%s1 + $0x48] sm:$0xff]
    %v99 = vld [vmem:[%s1 + $0x50] sm:$0xff]
    %v100 = vld [vmem:[%s1 + $0x58] sm:$0xff]
    %v101 = vld [vmem:[%s1 + $0x60] sm:$0xff]
    %v102 = vld [vmem:[%s1 + $0x68] sm:$0xff]
    %v103 = vld [vmem:[%s1 + $0x70] sm:$0xff]
    %v104 = vld [vmem:[%s1 + $0x78] sm:$0xff]
    %v105 = vld [vmem:[%s1 + $0x80] sm:$0xff]
    %v106 = vld [vmem:[%s1 + $0x88] sm:$0xff]
    %v107 = vld [vmem:[%s1 + $0x90] sm:$0xff]
    %v108 = vld [vmem:[%s1 + $0x98] sm:$0xff]
    %v109 = vld [vmem:[%s1 + $0xa0] sm:$0xff]
    %v110 = vld [vmem:[%s1 + $0xa8] sm:$0xff]
    %v111 = vld [vmem:[%s1 + $0xb0] sm:$0xff]
    %v112 = vld [vmem:[%s1 + $0xb8] sm:$0xff]
    %v113 = vld [vmem:[%s1 + $0xc0] sm:$0xff]
    %v114 = vld [vmem:[%s1 + $0xc8] sm:$0xff]
    %v115 = vld [vmem:[%s1 + $0xd0] sm:$0xff]
    %v116 = vld [vmem:[%s1 + $0xd8] sm:$0xff]
    %v117 = vld [vmem:[%s1 + $0xe0] sm:$0xff]
    %v118 = vld [vmem:[%s1 + $0xe8] sm:$0xff]
    %v119 = vld [vmem:[%s1 + $0xf0] sm:$0xff]
    %v120 = vld [vmem:[%s1 + $0xf8] sm:$0xff]
    %v121 = vld [vmem:[%s1 + $0x100] sm:$0xff]
    %v122 = vld [vmem:[%s1 + $0x108] sm:$0xff]
    %v123 = vld [vmem:[%s1 + $0x110] sm:$0xff]
    %v124 = vld [vmem:[%s1 + $0x118] sm:$0xff]
    %v125 = vld [vmem:[%s1 + $0x120] sm:$0xff]
    %v126 = vld [vmem:[%s1 + $0x128] sm:$0xff]
    %v127 = vld [vmem:[%s1 + $0x130] sm:$0xff]
    %v128 = vld [vmem:[%s1 + $0x138] sm:$0xff]
    %v129 = vld [vmem:[%s1 + $0x140] sm:$0xff]
    %v130 = vld [vmem:[%s1 + $0x148] sm:$0xff]
    %v131 = vld [vmem:[%s1 + $0x150] sm:$0xff]
    %v132 = vld [vmem:[%s1 + $0x158] sm:$0xff]
    %v133 = vld [vmem:[%s1 + $0x160] sm:$0xff]
    %v134 = vld [vmem:[%s1 + $0x168] sm:$0xff]
    %v135 = vld [vmem:[%s1 + $0x170] sm:$0xff]
    %v136 = vld [vmem:[%s1 + $0x178] sm:$0xff]
    %v137 = vld [vmem:[%s1 + $0x180] sm:$0xff]
    %v138 = vld [vmem:[%s1 + $0x188] sm:$0xff]
    %v139 = vld [vmem:[%s1 + $0x190] sm:$0xff]
    %v140 = vld [vmem:[%s1 + $0x198] sm:$0xff]
    %v141 = vld [vmem:[%s1 + $0x1a0] sm:$0xff]
    %v142 = vld [vmem:[%s1 + $0x1a8] sm:$0xff]
    %v143 = vld [vmem:[%s1 + $0x1b0] sm:$0xff]
    %v144 = vld [vmem:[%s1 + $0x1b8] sm:$0xff]
    %v145 = vld [vmem:[%s1 + $0x1c0] sm:$0xff]
    %v146 = vld [vmem:[%s1 + $0x1c8] sm:$0xff]
    %v147 = vld [vmem:[%s1 + $0x1d0] sm:$0xff]
    %v148 = vld [vmem:[%s1 + $0x1d8] sm:$0xff]
    %v149 = vld [vmem:[%s1 + $0x1e0] sm:$0xff]
    %v150 = vld [vmem:[%s1 + $0x1e8] sm:$0xff]
    %v151 = vld [vmem:[%s1 + $0x1f0] sm:$0xff]
    %v152 = vld [vmem:[%s1 + $0x1f8] sm:$0xff]
    %v153 = vld [vmem:[%s2] sm:$0x1]
    %v155 = vlaneseq
    %v156 = vshrl.u32 %v155, 7
    %v157 = vsub.s32 0, %v156
    %v158 = vrot.slane %v153, %v157
    %v160 = vmul.f32 %v89, %v158
    %v161 = vmul.f32 %v90, %v158
    %v162 = vmul.f32 %v91, %v158
    %v163 = vmul.f32 %v92, %v158
    %v164 = vmul.f32 %v93, %v158
    %v165 = vmul.f32 %v94, %v158
    %v166 = vmul.f32 %v95, %v158
    %v167 = vmul.f32 %v96, %v158
    %v168 = vmul.f32 %v97, %v158
    %v169 = vmul.f32 %v98, %v158
    %v170 = vmul.f32 %v99, %v158
    %v171 = vmul.f32 %v100, %v158
    %v172 = vmul.f32 %v101, %v158
    %v173 = vmul.f32 %v102, %v158
    %v174 = vmul.f32 %v103, %v158
    %v175 = vmul.f32 %v104, %v158
    %v176 = vmul.f32 %v105, %v158
    %v177 = vmul.f32 %v106, %v158
    %v178 = vmul.f32 %v107, %v158
    %v179 = vmul.f32 %v108, %v158
    %v180 = vmul.f32 %v109, %v158
    %v181 = vmul.f32 %v110, %v158
    %v182 = vmul.f32 %v111, %v158
    %v183 = vmul.f32 %v112, %v158
    %v184 = vmul.f32 %v113, %v158
    %v185 = vmul.f32 %v114, %v158
    %v186 = vmul.f32 %v115, %v158
    %v187 = vmul.f32 %v116, %v158
    %v188 = vmul.f32 %v117, %v158
    %v189 = vmul.f32 %v118, %v158
    %v190 = vmul.f32 %v119, %v158
    %v191 = vmul.f32 %v120, %v158
    %v192 = vmul.f32 %v121, %v158
    %v193 = vmul.f32 %v122, %v158
    %v194 = vmul.f32 %v123, %v158
    %v195 = vmul.f32 %v124, %v158
    %v196 = vmul.f32 %v125, %v158
    %v197 = vmul.f32 %v126, %v158
    %v198 = vmul.f32 %v127, %v158
    %v199 = vmul.f32 %v128, %v158
    %v200 = vmul.f32 %v129, %v158
    %v201 = vmul.f32 %v130, %v158
    %v202 = vmul.f32 %v131, %v158
    %v203 = vmul.f32 %v132, %v158
    %v204 = vmul.f32 %v133, %v158
    %v205 = vmul.f32 %v134, %v158
    %v206 = vmul.f32 %v135, %v158
    %v207 = vmul.f32 %v136, %v158
    %v208 = vmul.f32 %v137, %v158
    %v209 = vmul.f32 %v138, %v158
    %v210 = vmul.f32 %v139, %v158
    %v211 = vmul.f32 %v140, %v158
    %v212 = vmul.f32 %v141, %v158
    %v213 = vmul.f32 %v142, %v158
    %v214 = vmul.f32 %v143, %v158
    %v215 = vmul.f32 %v144, %v158
    %v216 = vmul.f32 %v145, %v158
    %v217 = vmul.f32 %v146, %v158
    %v218 = vmul.f32 %v147, %v158
    %v219 = vmul.f32 %v148, %v158
    %v220 = vmul.f32 %v149, %v158
    %v221 = vmul.f32 %v150, %v158
    %v222 = vmul.f32 %v151, %v158
    %v223 = vmul.f32 %v152, %v158
    %v224 = vld [vmem:[%s3] sm:$0x1]
    %v226 = vlaneseq
    %v227 = vshrl.u32 %v226, 7
    %v228 = vsub.s32 0, %v227
    %v229 = vrot.slane %v224, %v228
    %v231 = vadd.f32 %v160, %v229
    %v232 = vadd.f32 %v161, %v229
    %v233 = vadd.f32 %v162, %v229
    %v234 = vadd.f32 %v163, %v229
    %v235 = vadd.f32 %v164, %v229
    %v236 = vadd.f32 %v165, %v229
    %v237 = vadd.f32 %v166, %v229
    %v238 = vadd.f32 %v167, %v229
    %v239 = vadd.f32 %v168, %v229
    %v240 = vadd.f32 %v169, %v229
    %v241 = vadd.f32 %v170, %v229
    %v242 = vadd.f32 %v171, %v229
    %v243 = vadd.f32 %v172, %v229
    %v244 = vadd.f32 %v173, %v229
    %v245 = vadd.f32 %v174, %v229
    %v246 = vadd.f32 %v175, %v229
    %v247 = vadd.f32 %v176, %v229
    %v248 = vadd.f32 %v177, %v229
    %v249 = vadd.f32 %v178, %v229
    %v250 = vadd.f32 %v179, %v229
    %v251 = vadd.f32 %v180, %v229
    %v252 = vadd.f32 %v181, %v229
    %v253 = vadd.f32 %v182, %v229
    %v254 = vadd.f32 %v183, %v229
    %v255 = vadd.f32 %v184, %v229
    %v256 = vadd.f32 %v185, %v229
    %v257 = vadd.f32 %v186, %v229
    %v258 = vadd.f32 %v187, %v229
    %v259 = vadd.f32 %v188, %v229
    %v260 = vadd.f32 %v189, %v229
    %v261 = vadd.f32 %v190, %v229
    %v262 = vadd.f32 %v191, %v229
    %v263 = vadd.f32 %v192, %v229
    %v264 = vadd.f32 %v193, %v229
    %v265 = vadd.f32 %v194, %v229
    %v266 = vadd.f32 %v195, %v229
    %v267 = vadd.f32 %v196, %v229
    %v268 = vadd.f32 %v197, %v229
    %v269 = vadd.f32 %v198, %v229
    %v270 = vadd.f32 %v199, %v229
    %v271 = vadd.f32 %v200, %v229
    %v272 = vadd.f32 %v201, %v229
    %v273 = vadd.f32 %v202, %v229
    %v274 = vadd.f32 %v203, %v229
    %v275 = vadd.f32 %v204, %v229
    %v276 = vadd.f32 %v205, %v229
    %v277 = vadd.f32 %v206, %v229
    %v278 = vadd.f32 %v207, %v229
    %v279 = vadd.f32 %v208, %v229
    %v280 = vadd.f32 %v209, %v229
    %v281 = vadd.f32 %v210, %v229
    %v282 = vadd.f32 %v211, %v229
    %v283 = vadd.f32 %v212, %v229
    %v284 = vadd.f32 %v213, %v229
    %v285 = vadd.f32 %v214, %v229
    %v286 = vadd.f32 %v215, %v229
    %v287 = vadd.f32 %v216, %v229
    %v288 = vadd.f32 %v217, %v229
    %v289 = vadd.f32 %v218, %v229
    %v290 = vadd.f32 %v219, %v229
    %v291 = vadd.f32 %v220, %v229
    %v292 = vadd.f32 %v221, %v229
    %v293 = vadd.f32 %v222, %v229
    %v294 = vadd.f32 %v223, %v229
    %vm295 = vcmp.ge.f32.partialorder %v231, 0.0
    %vm296 = vcmp.ge.f32.partialorder %v232, 0.0
    %vm297 = vcmp.ge.f32.partialorder %v233, 0.0
    %vm298 = vcmp.ge.f32.partialorder %v234, 0.0
    %vm299 = vcmp.ge.f32.partialorder %v235, 0.0
    %vm300 = vcmp.ge.f32.partialorder %v236, 0.0
    %vm301 = vcmp.ge.f32.partialorder %v237, 0.0
    %vm302 = vcmp.ge.f32.partialorder %v238, 0.0
    %vm303 = vcmp.ge.f32.partialorder %v239, 0.0
    %vm304 = vcmp.ge.f32.partialorder %v240, 0.0
    %vm305 = vcmp.ge.f32.partialorder %v241, 0.0
    %vm306 = vcmp.ge.f32.partialorder %v242, 0.0
    %vm307 = vcmp.ge.f32.partialorder %v243, 0.0
    %vm308 = vcmp.ge.f32.partialorder %v244, 0.0
    %vm309 = vcmp.ge.f32.partialorder %v245, 0.0
    %vm310 = vcmp.ge.f32.partialorder %v246, 0.0
    %vm311 = vcmp.ge.f32.partialorder %v247, 0.0
    %vm312 = vcmp.ge.f32.partialorder %v248, 0.0
    %vm313 = vcmp.ge.f32.partialorder %v249, 0.0
    %vm314 = vcmp.ge.f32.partialorder %v250, 0.0
    %vm315 = vcmp.ge.f32.partialorder %v251, 0.0
    %vm316 = vcmp.ge.f32.partialorder %v252, 0.0
    %vm317 = vcmp.ge.f32.partialorder %v253, 0.0
    %vm318 = vcmp.ge.f32.partialorder %v254, 0.0
    %vm319 = vcmp.ge.f32.partialorder %v255, 0.0
    %vm320 = vcmp.ge.f32.partialorder %v256, 0.0
    %vm321 = vcmp.ge.f32.partialorder %v257, 0.0
    %vm322 = vcmp.ge.f32.partialorder %v258, 0.0
    %vm323 = vcmp.ge.f32.partialorder %v259, 0.0
    %vm324 = vcmp.ge.f32.partialorder %v260, 0.0
    %vm325 = vcmp.ge.f32.partialorder %v261, 0.0
    %vm326 = vcmp.ge.f32.partialorder %v262, 0.0
    %vm327 = vcmp.ge.f32.partialorder %v263, 0.0
    %vm328 = vcmp.ge.f32.partialorder %v264, 0.0
    %vm329 = vcmp.ge.f32.partialorder %v265, 0.0
    %vm330 = vcmp.ge.f32.partialorder %v266, 0.0
    %vm331 = vcmp.ge.f32.partialorder %v267, 0.0
    %vm332 = vcmp.ge.f32.partialorder %v268, 0.0
    %vm333 = vcmp.ge.f32.partialorder %v269, 0.0
    %vm334 = vcmp.ge.f32.partialorder %v270, 0.0
    %vm335 = vcmp.ge.f32.partialorder %v271, 0.0
    %vm336 = vcmp.ge.f32.partialorder %v272, 0.0
    %vm337 = vcmp.ge.f32.partialorder %v273, 0.0
    %vm338 = vcmp.ge.f32.partialorder %v274, 0.0
    %vm339 = vcmp.ge.f32.partialorder %v275, 0.0
    %vm340 = vcmp.ge.f32.partialorder %v276, 0.0
    %vm341 = vcmp.ge.f32.partialorder %v277, 0.0
    %vm342 = vcmp.ge.f32.partialorder %v278, 0.0
    %vm343 = vcmp.ge.f32.partialorder %v279, 0.0
    %vm344 = vcmp.ge.f32.partialorder %v280, 0.0
    %vm345 = vcmp.ge.f32.partialorder %v281, 0.0
    %vm346 = vcmp.ge.f32.partialorder %v282, 0.0
    %vm347 = vcmp.ge.f32.partialorder %v283, 0.0
    %vm348 = vcmp.ge.f32.partialorder %v284, 0.0
    %vm349 = vcmp.ge.f32.partialorder %v285, 0.0
    %vm350 = vcmp.ge.f32.partialorder %v286, 0.0
    %vm351 = vcmp.ge.f32.partialorder %v287, 0.0
    %vm352 = vcmp.ge.f32.partialorder %v288, 0.0
    %vm353 = vcmp.ge.f32.partialorder %v289, 0.0
    %vm354 = vcmp.ge.f32.partialorder %v290, 0.0
    %vm355 = vcmp.ge.f32.partialorder %v291, 0.0
    %vm356 = vcmp.ge.f32.partialorder %v292, 0.0
    %vm357 = vcmp.ge.f32.partialorder %v293, 0.0
    %vm358 = vcmp.ge.f32.partialorder %v294, 0.0
    %v359 = vmul.f32 %v231, 0.01
    %v360 = vmul.f32 %v232, 0.01
    %v361 = vmul.f32 %v233, 0.01
    %v362 = vmul.f32 %v234, 0.01
    %v363 = vmul.f32 %v235, 0.01
    %v364 = vmul.f32 %v236, 0.01
    %v365 = vmul.f32 %v237, 0.01
    %v366 = vmul.f32 %v238, 0.01
    %v367 = vmul.f32 %v239, 0.01
    %v368 = vmul.f32 %v240, 0.01
    %v369 = vmul.f32 %v241, 0.01
    %v370 = vmul.f32 %v242, 0.01
    %v371 = vmul.f32 %v243, 0.01
    %v372 = vmul.f32 %v244, 0.01
    %v373 = vmul.f32 %v245, 0.01
    %v374 = vmul.f32 %v246, 0.01
    %v375 = vmul.f32 %v247, 0.01
    %v376 = vmul.f32 %v248, 0.01
    %v377 = vmul.f32 %v249, 0.01
    %v378 = vmul.f32 %v250, 0.01
    %v379 = vmul.f32 %v251, 0.01
    %v380 = vmul.f32 %v252, 0.01
    %v381 = vmul.f32 %v253, 0.01
    %v382 = vmul.f32 %v254, 0.01
    %v383 = vmul.f32 %v255, 0.01
    %v384 = vmul.f32 %v256, 0.01
    %v385 = vmul.f32 %v257, 0.01
    %v386 = vmul.f32 %v258, 0.01
    %v387 = vmul.f32 %v259, 0.01
    %v388 = vmul.f32 %v260, 0.01
    %v389 = vmul.f32 %v261, 0.01
    %v390 = vmul.f32 %v262, 0.01
    %v391 = vmul.f32 %v263, 0.01
    %v392 = vmul.f32 %v264, 0.01
    %v393 = vmul.f32 %v265, 0.01
    %v394 = vmul.f32 %v266, 0.01
    %v395 = vmul.f32 %v267, 0.01
    %v396 = vmul.f32 %v268, 0.01
    %v397 = vmul.f32 %v269, 0.01
    %v398 = vmul.f32 %v270, 0.01
    %v399 = vmul.f32 %v271, 0.01
    %v400 = vmul.f32 %v272, 0.01
    %v401 = vmul.f32 %v273, 0.01
    %v402 = vmul.f32 %v274, 0.01
    %v403 = vmul.f32 %v275, 0.01
    %v404 = vmul.f32 %v276, 0.01
    %v405 = vmul.f32 %v277, 0.01
    %v406 = vmul.f32 %v278, 0.01
    %v407 = vmul.f32 %v279, 0.01
    %v408 = vmul.f32 %v280, 0.01
    %v409 = vmul.f32 %v281, 0.01
    %v410 = vmul.f32 %v282, 0.01
    %v411 = vmul.f32 %v283, 0.01
    %v412 = vmul.f32 %v284, 0.01
    %v413 = vmul.f32 %v285, 0.01
    %v414 = vmul.f32 %v286, 0.01
    %v415 = vmul.f32 %v287, 0.01
    %v416 = vmul.f32 %v288, 0.01
    %v417 = vmul.f32 %v289, 0.01
    %v418 = vmul.f32 %v290, 0.01
    %v419 = vmul.f32 %v291, 0.01
    %v420 = vmul.f32 %v292, 0.01
    %v421 = vmul.f32 %v293, 0.01
    %v422 = vmul.f32 %v294, 0.01
    %v423 = vsel %vm295, %v231, %v359
    %v424 = vsel %vm296, %v232, %v360
    %v425 = vsel %vm297, %v233, %v361
    %v426 = vsel %vm298, %v234, %v362
    %v427 = vsel %vm299, %v235, %v363
    %v428 = vsel %vm300, %v236, %v364
    %v429 = vsel %vm301, %v237, %v365
    %v430 = vsel %vm302, %v238, %v366
    %v431 = vsel %vm303, %v239, %v367
    %v432 = vsel %vm304, %v240, %v368
    %v433 = vsel %vm305, %v241, %v369
    %v434 = vsel %vm306, %v242, %v370
    %v435 = vsel %vm307, %v243, %v371
    %v436 = vsel %vm308, %v244, %v372
    %v437 = vsel %vm309, %v245, %v373
    %v438 = vsel %vm310, %v246, %v374
    %v439 = vsel %vm311, %v247, %v375
    %v440 = vsel %vm312, %v248, %v376
    %v441 = vsel %vm313, %v249, %v377
    %v442 = vsel %vm314, %v250, %v378
    %v443 = vsel %vm315, %v251, %v379
    %v444 = vsel %vm316, %v252, %v380
    %v445 = vsel %vm317, %v253, %v381
    %v446 = vsel %vm318, %v254, %v382
    %v447 = vsel %vm319, %v255, %v383
    %v448 = vsel %vm320, %v256, %v384
    %v449 = vsel %vm321, %v257, %v385
    %v450 = vsel %vm322, %v258, %v386
    %v451 = vsel %vm323, %v259, %v387
    %v452 = vsel %vm324, %v260, %v388
    %v453 = vsel %vm325, %v261, %v389
    %v454 = vsel %vm326, %v262, %v390
    %v455 = vsel %vm327, %v263, %v391
    %v456 = vsel %vm328, %v264, %v392
    %v457 = vsel %vm329, %v265, %v393
    %v458 = vsel %vm330, %v266, %v394
    %v459 = vsel %vm331, %v267, %v395
    %v460 = vsel %vm332, %v268, %v396
    %v461 = vsel %vm333, %v269, %v397
    %v462 = vsel %vm334, %v270, %v398
    %v463 = vsel %vm335, %v271, %v399
    %v464 = vsel %vm336, %v272, %v400
    %v465 = vsel %vm337, %v273, %v401
    %v466 = vsel %vm338, %v274, %v402
    %v467 = vsel %vm339, %v275, %v403
    %v468 = vsel %vm340, %v276, %v404
    %v469 = vsel %vm341, %v277, %v405
    %v470 = vsel %vm342, %v278, %v406
    %v471 = vsel %vm343, %v279, %v407
    %v472 = vsel %vm344, %v280, %v408
    %v473 = vsel %vm345, %v281, %v409
    %v474 = vsel %vm346, %v282, %v410
    %v475 = vsel %vm347, %v283, %v411
    %v476 = vsel %vm348, %v284, %v412
    %v477 = vsel %vm349, %v285, %v413
    %v478 = vsel %vm350, %v286, %v414
    %v479 = vsel %vm351, %v287, %v415
    %v480 = vsel %vm352, %v288, %v416
    %v481 = vsel %vm353, %v289, %v417
    %v482 = vsel %vm354, %v290, %v418
    %v483 = vsel %vm355, %v291, %v419
    %v484 = vsel %vm356, %v292, %v420
    %v485 = vsel %vm357, %v293, %v421
    %v486 = vsel %vm358, %v294, %v422
    %v487 = vpack.c.bf16 %v424, %v423
    %v488 = vpack.c.bf16 %v426, %v425
    %v489 = vpack.c.bf16 %v428, %v427
    %v490 = vpack.c.bf16 %v430, %v429
    %v491 = vpack.c.bf16 %v432, %v431
    %v492 = vpack.c.bf16 %v434, %v433
    %v493 = vpack.c.bf16 %v436, %v435
    %v494 = vpack.c.bf16 %v438, %v437
    %v495 = vpack.c.bf16 %v440, %v439
    %v496 = vpack.c.bf16 %v442, %v441
    %v497 = vpack.c.bf16 %v444, %v443
    %v498 = vpack.c.bf16 %v446, %v445
    %v499 = vpack.c.bf16 %v448, %v447
    %v500 = vpack.c.bf16 %v450, %v449
    %v501 = vpack.c.bf16 %v452, %v451
    %v502 = vpack.c.bf16 %v454, %v453
    %v503 = vpack.c.bf16 %v456, %v455
    %v504 = vpack.c.bf16 %v458, %v457
    %v505 = vpack.c.bf16 %v460, %v459
    %v506 = vpack.c.bf16 %v462, %v461
    %v507 = vpack.c.bf16 %v464, %v463
    %v508 = vpack.c.bf16 %v466, %v465
    %v509 = vpack.c.bf16 %v468, %v467
    %v510 = vpack.c.bf16 %v470, %v469
    %v511 = vpack.c.bf16 %v472, %v471
    %v512 = vpack.c.bf16 %v474, %v473
    %v513 = vpack.c.bf16 %v476, %v475
    %v514 = vpack.c.bf16 %v478, %v477
    %v515 = vpack.c.bf16 %v480, %v479
    %v516 = vpack.c.bf16 %v482, %v481
    %v517 = vpack.c.bf16 %v484, %v483
    %v518 = vpack.c.bf16 %v486, %v485
    %v519 = vld [vmem:[%s4] sm:$0xf]
    %v520 = vld [vmem:[%s4 + $0x4] sm:$0xf]
    %v521 = vld [vmem:[%s4 + $0x8] sm:$0xf]
    %v522 = vld [vmem:[%s4 + $0xc] sm:$0xf]
    %v523 = vld [vmem:[%s5] sm:$0x1]
    %v525 = vlaneseq
    %v526 = vshrl.u32 %v525, 7
    %v527 = vsub.s32 0, %v526
    %v528 = vrot.slane %v523, %v527
    %v534 = vunpack.c.l.b16 %v519
    %v535 = vunpack.c.l.b16 %v520
    %v536 = vunpack.c.l.b16 %v521
    %v537 = vunpack.c.l.b16 %v522
    %v538 = vpack.c.b16 %v535, %v534
    %v539 = vpack.c.b16 %v537, %v536
    %vm542 = vcmask 261120
    %v544 = vsel %vm542, %v487, 0
    %v547 = vsel %vm542, %v488, 0
    %v550 = vsel %vm542, %v489, 0
    %v553 = vsel %vm542, %v490, 0
    %v556 = vsel %vm542, %v491, 0
    %v559 = vsel %vm542, %v492, 0
    %v562 = vsel %vm542, %v493, 0
    %v565 = vsel %vm542, %v494, 0
    %v568 = vsel %vm542, %v495, 0
    %v571 = vsel %vm542, %v496, 0
    %v574 = vsel %vm542, %v497, 0
    %v577 = vsel %vm542, %v498, 0
    %v580 = vsel %vm542, %v499, 0
    %v583 = vsel %vm542, %v500, 0
    %v586 = vsel %vm542, %v501, 0
    %v589 = vsel %vm542, %v502, 0
    %v592 = vsel %vm542, %v503, 0
    %v595 = vsel %vm542, %v504, 0
    %v598 = vsel %vm542, %v505, 0
    %v601 = vsel %vm542, %v506, 0
    %v604 = vsel %vm542, %v507, 0
    %v607 = vsel %vm542, %v508, 0
    %v610 = vsel %vm542, %v509, 0
    %v613 = vsel %vm542, %v510, 0
    %v616 = vsel %vm542, %v511, 0
    %v619 = vsel %vm542, %v512, 0
    %v622 = vsel %vm542, %v513, 0
    %v625 = vsel %vm542, %v514, 0
    %v628 = vsel %vm542, %v515, 0
    %v631 = vsel %vm542, %v516, 0
    %v634 = vsel %vm542, %v517, 0
    %v637 = vsel %vm542, %v518, 0
    %639 = vmatprep.subr.bf16.mxu0 0
    %640 = vmatpush1.bf16.msra.mxu0 %v538
    %641 = vmatprep.subr.bf16.mxu0 0
    %642 = vmatpush1.bf16.msra.mxu0 %v539
    %643 = vmatprep.subr.bf16.mxu0 0
    %644 = vmatpush1.bf16.msra.mxu0 0
    %645 = vmatprep.subr.bf16.mxu0 0
    %646 = vmatpush1.bf16.msra.mxu0 0
    %647 = vmatprep.subr.bf16.mxu0 0
    %648 = vmatpush1.bf16.msra.mxu0 0
    %649 = vmatprep.subr.bf16.mxu0 0
    %650 = vmatpush1.bf16.msra.mxu0 0
    %651 = vmatprep.subr.bf16.mxu0 0
    %652 = vmatpush1.bf16.msra.mxu0 0
    %653 = vmatprep.subr.bf16.mxu0 0
    %654 = vmatpush1.bf16.msra.mxu0 0
    %655 = vmatprep.subr.bf16.mxu0 0
    %656 = vmatpush1.bf16.msra.mxu0 0
    %657 = vmatprep.subr.bf16.mxu0 0
    %658 = vmatpush1.bf16.msra.mxu0 0
    %659 = vmatprep.subr.bf16.mxu0 0
    %660 = vmatpush1.bf16.msra.mxu0 0
    %661 = vmatprep.subr.bf16.mxu0 0
    %662 = vmatpush1.bf16.msra.mxu0 0
    %663 = vmatprep.subr.bf16.mxu0 0
    %664 = vmatpush1.bf16.msra.mxu0 0
    %665 = vmatprep.subr.bf16.mxu0 0
    %666 = vmatpush1.bf16.msra.mxu0 0
    %667 = vmatprep.subr.bf16.mxu0 0
    %668 = vmatpush1.bf16.msra.mxu0 0
    %669 = vmatprep.subr.bf16.mxu0 0
    %670 = vmatpush1.bf16.msra.mxu0 0
    %671 = vmatprep.mubr.bf16.mxu0 0
    %672 = vmatmul.mubr.bf16.gmra.mrb[0].mxu0 %v544
    %v673 = vpop.f32.mrb[0].mxu0
    %v674 = vadd.f32 %v528, %v673
    %v675 = vpop.f32.mrb[0].mxu0
    %v676 = vpop.f32.mrb[0].mxu0
    %v677 = vadd.f32 %v528, %v676
    %v678 = vpop.f32.mrb[0].mxu0
    %679 = vmatprep.mubr.bf16.mxu0 0
    %680 = vmatmul.mubr.bf16.gmra.mrb[0].mxu0 %v547
    %v681 = vpop.f32.mrb[0].mxu0
    %v682 = vadd.f32 %v528, %v681
    %v683 = vpop.f32.mrb[0].mxu0
    %v684 = vpop.f32.mrb[0].mxu0
    %v685 = vadd.f32 %v528, %v684
    %v686 = vpop.f32.mrb[0].mxu0
    %687 = vmatprep.mubr.bf16.mxu0 0
    %688 = vmatmul.mubr.bf16.gmra.mrb[0].mxu0 %v550
    %v689 = vpop.f32.mrb[0].mxu0
    %v690 = vadd.f32 %v528, %v689
    %v691 = vpop.f32.mrb[0].mxu0
    %v692 = vpop.f32.mrb[0].mxu0
    %v693 = vadd.f32 %v528, %v692
    %v694 = vpop.f32.mrb[0].mxu0
    %695 = vmatprep.mubr.bf16.mxu0 0
    %696 = vmatmul.mubr.bf16.gmra.mrb[0].mxu0 %v553
    %v697 = vpop.f32.mrb[0].mxu0
    %v698 = vadd.f32 %v528, %v697
    %v699 = vpop.f32.mrb[0].mxu0
    %v700 = vpop.f32.mrb[0].mxu0
    %v701 = vadd.f32 %v528, %v700
    %v702 = vpop.f32.mrb[0].mxu0
    %703 = vmatprep.mubr.bf16.mxu0 0
    %704 = vmatmul.mubr.bf16.gmra.mrb[0].mxu0 %v556
    %v705 = vpop.f32.mrb[0].mxu0
    %v706 = vadd.f32 %v528, %v705
    %v707 = vpop.f32.mrb[0].mxu0
    %v708 = vpop.f32.mrb[0].mxu0
    %v709 = vadd.f32 %v528, %v708
    %v710 = vpop.f32.mrb[0].mxu0
    %711 = vmatprep.mubr.bf16.mxu0 0
    %712 = vmatmul.mubr.bf16.gmra.mrb[0].mxu0 %v559
    %v713 = vpop.f32.mrb[0].mxu0
    %v714 = vadd.f32 %v528, %v713
    %v715 = vpop.f32.mrb[0].mxu0
    %v716 = vpop.f32.mrb[0].mxu0
    %v717 = vadd.f32 %v528, %v716
    %v718 = vpop.f32.mrb[0].mxu0
    %719 = vmatprep.mubr.bf16.mxu0 0
    %720 = vmatmul.mubr.bf16.gmra.mrb[0].mxu0 %v562
    %v721 = vpop.f32.mrb[0].mxu0
    %v722 = vadd.f32 %v528, %v721
    %v723 = vpop.f32.mrb[0].mxu0
    %v724 = vpop.f32.mrb[0].mxu0
    %v725 = vadd.f32 %v528, %v724
    %v726 = vpop.f32.mrb[0].mxu0
    %727 = vmatprep.mubr.bf16.mxu0 0
    %728 = vmatmul.mubr.bf16.gmra.mrb[0].mxu0 %v565
    %v729 = vpop.f32.mrb[0].mxu0
    %v730 = vadd.f32 %v528, %v729
    %v731 = vpop.f32.mrb[0].mxu0
    %v732 = vpop.f32.mrb[0].mxu0
    %v733 = vadd.f32 %v528, %v732
    %v734 = vpop.f32.mrb[0].mxu0
    %735 = vmatprep.mubr.bf16.mxu0 0
    %736 = vmatmul.mubr.bf16.gmra.mrb[0].mxu0 %v568
    %v737 = vpop.f32.mrb[0].mxu0
    %v738 = vadd.f32 %v528, %v737
    %v739 = vpop.f32.mrb[0].mxu0
    %v740 = vpop.f32.mrb[0].mxu0
    %v741 = vadd.f32 %v528, %v740
    %v742 = vpop.f32.mrb[0].mxu0
    %743 = vmatprep.mubr.bf16.mxu0 0
    %744 = vmatmul.mubr.bf16.gmra.mrb[0].mxu0 %v571
    %v745 = vpop.f32.mrb[0].mxu0
    %v746 = vadd.f32 %v528, %v745
    %v747 = vpop.f32.mrb[0].mxu0
    %v748 = vpop.f32.mrb[0].mxu0
    %v749 = vadd.f32 %v528, %v748
    %v750 = vpop.f32.mrb[0].mxu0
    %751 = vmatprep.mubr.bf16.mxu0 0
    %752 = vmatmul.mubr.bf16.gmra.mrb[0].mxu0 %v574
    %v753 = vpop.f32.mrb[0].mxu0
    %v754 = vadd.f32 %v528, %v753
    %v755 = vpop.f32.mrb[0].mxu0
    %v756 = vpop.f32.mrb[0].mxu0
    %v757 = vadd.f32 %v528, %v756
    %v758 = vpop.f32.mrb[0].mxu0
    %759 = vmatprep.mubr.bf16.mxu0 0
    %760 = vmatmul.mubr.bf16.gmra.mrb[0].mxu0 %v577
    %v761 = vpop.f32.mrb[0].mxu0
    %v762 = vadd.f32 %v528, %v761
    %v763 = vpop.f32.mrb[0].mxu0
    %v764 = vpop.f32.mrb[0].mxu0
    %v765 = vadd.f32 %v528, %v764
    %v766 = vpop.f32.mrb[0].mxu0
    %767 = vmatprep.mubr.bf16.mxu0 0
    %768 = vmatmul.mubr.bf16.gmra.mrb[0].mxu0 %v580
    %v769 = vpop.f32.mrb[0].mxu0
    %v770 = vadd.f32 %v528, %v769
    %v771 = vpop.f32.mrb[0].mxu0
    %v772 = vpop.f32.mrb[0].mxu0
    %v773 = vadd.f32 %v528, %v772
    %v774 = vpop.f32.mrb[0].mxu0
    %775 = vmatprep.mubr.bf16.mxu0 0
    %776 = vmatmul.mubr.bf16.gmra.mrb[0].mxu0 %v583
    %v777 = vpop.f32.mrb[0].mxu0
    %v778 = vadd.f32 %v528, %v777
    %v779 = vpop.f32.mrb[0].mxu0
    %v780 = vpop.f32.mrb[0].mxu0
    %v781 = vadd.f32 %v528, %v780
    %v782 = vpop.f32.mrb[0].mxu0
    %783 = vmatprep.mubr.bf16.mxu0 0
    %784 = vmatmul.mubr.bf16.gmra.mrb[0].mxu0 %v586
    %v785 = vpop.f32.mrb[0].mxu0
    %v786 = vadd.f32 %v528, %v785
    %v787 = vpop.f32.mrb[0].mxu0
    %v788 = vpop.f32.mrb[0].mxu0
    %v789 = vadd.f32 %v528, %v788
    %v790 = vpop.f32.mrb[0].mxu0
    %791 = vmatprep.mubr.bf16.mxu0 0
    %792 = vmatmul.mubr.bf16.gmra.mrb[0].mxu0 %v589
    %v793 = vpop.f32.mrb[0].mxu0
    %v794 = vadd.f32 %v528, %v793
    %v795 = vpop.f32.mrb[0].mxu0
    %v796 = vpop.f32.mrb[0].mxu0
    %v797 = vadd.f32 %v528, %v796
    %v798 = vpop.f32.mrb[0].mxu0
    %799 = vmatprep.mubr.bf16.mxu0 0
    %800 = vmatmul.mubr.bf16.gmra.mrb[0].mxu0 %v592
    %v801 = vpop.f32.mrb[0].mxu0
    %v802 = vadd.f32 %v528, %v801
    %v803 = vpop.f32.mrb[0].mxu0
    %v804 = vpop.f32.mrb[0].mxu0
    %v805 = vadd.f32 %v528, %v804
    %v806 = vpop.f32.mrb[0].mxu0
    %807 = vmatprep.mubr.bf16.mxu0 0
    %808 = vmatmul.mubr.bf16.gmra.mrb[0].mxu0 %v595
    %v809 = vpop.f32.mrb[0].mxu0
    %v810 = vadd.f32 %v528, %v809
    %v811 = vpop.f32.mrb[0].mxu0
    %v812 = vpop.f32.mrb[0].mxu0
    %v813 = vadd.f32 %v528, %v812
    %v814 = vpop.f32.mrb[0].mxu0
    %815 = vmatprep.mubr.bf16.mxu0 0
    %816 = vmatmul.mubr.bf16.gmra.mrb[0].mxu0 %v598
    %v817 = vpop.f32.mrb[0].mxu0
    %v818 = vadd.f32 %v528, %v817
    %v819 = vpop.f32.mrb[0].mxu0
    %v820 = vpop.f32.mrb[0].mxu0
    %v821 = vadd.f32 %v528, %v820
    %v822 = vpop.f32.mrb[0].mxu0
    %823 = vmatprep.mubr.bf16.mxu0 0
    %824 = vmatmul.mubr.bf16.gmra.mrb[0].mxu0 %v601
    %v825 = vpop.f32.mrb[0].mxu0
    %v826 = vadd.f32 %v528, %v825
    %v827 = vpop.f32.mrb[0].mxu0
    %v828 = vpop.f32.mrb[0].mxu0
    %v829 = vadd.f32 %v528, %v828
    %v830 = vpop.f32.mrb[0].mxu0
    %831 = vmatprep.mubr.bf16.mxu0 0
    %832 = vmatmul.mubr.bf16.gmra.mrb[0].mxu0 %v604
    %v833 = vpop.f32.mrb[0].mxu0
    %v834 = vadd.f32 %v528, %v833
    %v835 = vpop.f32.mrb[0].mxu0
    %v836 = vpop.f32.mrb[0].mxu0
    %v837 = vadd.f32 %v528, %v836
    %v838 = vpop.f32.mrb[0].mxu0
    %839 = vmatprep.mubr.bf16.mxu0 0
    %840 = vmatmul.mubr.bf16.gmra.mrb[0].mxu0 %v607
    %v841 = vpop.f32.mrb[0].mxu0
    %v842 = vadd.f32 %v528, %v841
    %v843 = vpop.f32.mrb[0].mxu0
    %v844 = vpop.f32.mrb[0].mxu0
    %v845 = vadd.f32 %v528, %v844
    %v846 = vpop.f32.mrb[0].mxu0
    %847 = vmatprep.mubr.bf16.mxu0 0
    %848 = vmatmul.mubr.bf16.gmra.mrb[0].mxu0 %v610
    %v849 = vpop.f32.mrb[0].mxu0
    %v850 = vadd.f32 %v528, %v849
    %v851 = vpop.f32.mrb[0].mxu0
    %v852 = vpop.f32.mrb[0].mxu0
    %v853 = vadd.f32 %v528, %v852
    %v854 = vpop.f32.mrb[0].mxu0
    %855 = vmatprep.mubr.bf16.mxu0 0
    %856 = vmatmul.mubr.bf16.gmra.mrb[0].mxu0 %v613
    %v857 = vpop.f32.mrb[0].mxu0
    %v858 = vadd.f32 %v528, %v857
    %v859 = vpop.f32.mrb[0].mxu0
    %v860 = vpop.f32.mrb[0].mxu0
    %v861 = vadd.f32 %v528, %v860
    %v862 = vpop.f32.mrb[0].mxu0
    %863 = vmatprep.mubr.bf16.mxu0 0
    %864 = vmatmul.mubr.bf16.gmra.mrb[0].mxu0 %v616
    %v865 = vpop.f32.mrb[0].mxu0
    %v866 = vadd.f32 %v528, %v865
    %v867 = vpop.f32.mrb[0].mxu0
    %v868 = vpop.f32.mrb[0].mxu0
    %v869 = vadd.f32 %v528, %v868
    %v870 = vpop.f32.mrb[0].mxu0
    %871 = vmatprep.mubr.bf16.mxu0 0
    %872 = vmatmul.mubr.bf16.gmra.mrb[0].mxu0 %v619
    %v873 = vpop.f32.mrb[0].mxu0
    %v874 = vadd.f32 %v528, %v873
    %v875 = vpop.f32.mrb[0].mxu0
    %v876 = vpop.f32.mrb[0].mxu0
    %v877 = vadd.f32 %v528, %v876
    %v878 = vpop.f32.mrb[0].mxu0
    %879 = vmatprep.mubr.bf16.mxu0 0
    %880 = vmatmul.mubr.bf16.gmra.mrb[0].mxu0 %v622
    %v881 = vpop.f32.mrb[0].mxu0
    %v882 = vadd.f32 %v528, %v881
    %v883 = vpop.f32.mrb[0].mxu0
    %v884 = vpop.f32.mrb[0].mxu0
    %v885 = vadd.f32 %v528, %v884
    %v886 = vpop.f32.mrb[0].mxu0
    %887 = vmatprep.mubr.bf16.mxu0 0
    %888 = vmatmul.mubr.bf16.gmra.mrb[0].mxu0 %v625
    %v889 = vpop.f32.mrb[0].mxu0
    %v890 = vadd.f32 %v528, %v889
    %v891 = vpop.f32.mrb[0].mxu0
    %v892 = vpop.f32.mrb[0].mxu0
    %v893 = vadd.f32 %v528, %v892
    %v894 = vpop.f32.mrb[0].mxu0
    %895 = vmatprep.mubr.bf16.mxu0 0
    %896 = vmatmul.mubr.bf16.gmra.mrb[0].mxu0 %v628
    %v897 = vpop.f32.mrb[0].mxu0
    %v898 = vadd.f32 %v528, %v897
    %v899 = vpop.f32.mrb[0].mxu0
    %v900 = vpop.f32.mrb[0].mxu0
    %v901 = vadd.f32 %v528, %v900
    %v902 = vpop.f32.mrb[0].mxu0
    %903 = vmatprep.mubr.bf16.mxu0 0
    %904 = vmatmul.mubr.bf16.gmra.mrb[0].mxu0 %v631
    %v905 = vpop.f32.mrb[0].mxu0
    %v906 = vadd.f32 %v528, %v905
    %v907 = vpop.f32.mrb[0].mxu0
    %v908 = vpop.f32.mrb[0].mxu0
    %v909 = vadd.f32 %v528, %v908
    %v910 = vpop.f32.mrb[0].mxu0
    %911 = vmatprep.mubr.bf16.mxu0 0
    %912 = vmatmul.mubr.bf16.gmra.mrb[0].mxu0 %v634
    %v913 = vpop.f32.mrb[0].mxu0
    %v914 = vadd.f32 %v528, %v913
    %v915 = vpop.f32.mrb[0].mxu0
    %v916 = vpop.f32.mrb[0].mxu0
    %v917 = vadd.f32 %v528, %v916
    %v918 = vpop.f32.mrb[0].mxu0
    %919 = vmatprep.mubr.bf16.mxu0 0
    %920 = vmatmul.mubr.bf16.gmra.mrb[0].mxu0 %v637
    %v921 = vpop.f32.mrb[0].mxu0
    %v922 = vadd.f32 %v528, %v921
    %v923 = vpop.f32.mrb[0].mxu0
    %v924 = vpop.f32.mrb[0].mxu0
    %v925 = vadd.f32 %v528, %v924
    %v926 = vpop.f32.mrb[0].mxu0
    %927 = vdwg.mxu0
    %v928 = vadd.f32 %v25, %v674
    %v929 = vadd.f32 %v26, %v677
    %v930 = vadd.f32 %v27, %v682
    %v931 = vadd.f32 %v28, %v685
    %v932 = vadd.f32 %v29, %v690
    %v933 = vadd.f32 %v30, %v693
    %v934 = vadd.f32 %v31, %v698
    %v935 = vadd.f32 %v32, %v701
    %v936 = vadd.f32 %v33, %v706
    %v937 = vadd.f32 %v34, %v709
    %v938 = vadd.f32 %v35, %v714
    %v939 = vadd.f32 %v36, %v717
    %v940 = vadd.f32 %v37, %v722
    %v941 = vadd.f32 %v38, %v725
    %v942 = vadd.f32 %v39, %v730
    %v943 = vadd.f32 %v40, %v733
    %v944 = vadd.f32 %v41, %v738
    %v945 = vadd.f32 %v42, %v741
    %v946 = vadd.f32 %v43, %v746
    %v947 = vadd.f32 %v44, %v749
    %v948 = vadd.f32 %v45, %v754
    %v949 = vadd.f32 %v46, %v757
    %v950 = vadd.f32 %v47, %v762
    %v951 = vadd.f32 %v48, %v765
    %v952 = vadd.f32 %v49, %v770
    %v953 = vadd.f32 %v50, %v773
    %v954 = vadd.f32 %v51, %v778
    %v955 = vadd.f32 %v52, %v781
    %v956 = vadd.f32 %v53, %v786
    %v957 = vadd.f32 %v54, %v789
    %v958 = vadd.f32 %v55, %v794
    %v959 = vadd.f32 %v56, %v797
    %v960 = vadd.f32 %v57, %v802
    %v961 = vadd.f32 %v58, %v805
    %v962 = vadd.f32 %v59, %v810
    %v963 = vadd.f32 %v60, %v813
    %v964 = vadd.f32 %v61, %v818
    %v965 = vadd.f32 %v62, %v821
    %v966 = vadd.f32 %v63, %v826
    %v967 = vadd.f32 %v64, %v829
    %v968 = vadd.f32 %v65, %v834
    %v969 = vadd.f32 %v66, %v837
    %v970 = vadd.f32 %v67, %v842
    %v971 = vadd.f32 %v68, %v845
    %v972 = vadd.f32 %v69, %v850
    %v973 = vadd.f32 %v70, %v853
    %v974 = vadd.f32 %v71, %v858
    %v975 = vadd.f32 %v72, %v861
    %v976 = vadd.f32 %v73, %v866
    %v977 = vadd.f32 %v74, %v869
    %v978 = vadd.f32 %v75, %v874
    %v979 = vadd.f32 %v76, %v877
    %v980 = vadd.f32 %v77, %v882
    %v981 = vadd.f32 %v78, %v885
    %v982 = vadd.f32 %v79, %v890
    %v983 = vadd.f32 %v80, %v893
    %v984 = vadd.f32 %v81, %v898
    %v985 = vadd.f32 %v82, %v901
    %v986 = vadd.f32 %v83, %v906
    %v987 = vadd.f32 %v84, %v909
    %v988 = vadd.f32 %v85, %v914
    %v989 = vadd.f32 %v86, %v917
    %v990 = vadd.f32 %v87, %v922
    %v991 = vadd.f32 %v88, %v925
    %992 = vst.msk [vmem:[#allocation2] sm:$0xff] %vm542, %v928
    %993 = vst.msk [vmem:[#allocation2 + $0x8] sm:$0xff] %vm542, %v929
    %994 = vst.msk [vmem:[#allocation2 + $0x10] sm:$0xff] %vm542, %v930
    %995 = vst.msk [vmem:[#allocation2 + $0x18] sm:$0xff] %vm542, %v931
    %996 = vst.msk [vmem:[#allocation2 + $0x20] sm:$0xff] %vm542, %v932
    %997 = vst.msk [vmem:[#allocation2 + $0x28] sm:$0xff] %vm542, %v933
    %998 = vst.msk [vmem:[#allocation2 + $0x30] sm:$0xff] %vm542, %v934
    %999 = vst.msk [vmem:[#allocation2 + $0x38] sm:$0xff] %vm542, %v935
    %1000 = vst.msk [vmem:[#allocation2 + $0x40] sm:$0xff] %vm542, %v936
    %1001 = vst.msk [vmem:[#allocation2 + $0x48] sm:$0xff] %vm542, %v937
    %1002 = vst.msk [vmem:[#allocation2 + $0x50] sm:$0xff] %vm542, %v938
    %1003 = vst.msk [vmem:[#allocation2 + $0x58] sm:$0xff] %vm542, %v939
    %1004 = vst.msk [vmem:[#allocation2 + $0x60] sm:$0xff] %vm542, %v940
    %1005 = vst.msk [vmem:[#allocation2 + $0x68] sm:$0xff] %vm542, %v941
    %1006 = vst.msk [vmem:[#allocation2 + $0x70] sm:$0xff] %vm542, %v942
    %1007 = vst.msk [vmem:[#allocation2 + $0x78] sm:$0xff] %vm542, %v943
    %1008 = vst.msk [vmem:[#allocation2 + $0x80] sm:$0xff] %vm542, %v944
    %1009 = vst.msk [vmem:[#allocation2 + $0x88] sm:$0xff] %vm542, %v945
    %1010 = vst.msk [vmem:[#allocation2 + $0x90] sm:$0xff] %vm542, %v946
    %1011 = vst.msk [vmem:[#allocation2 + $0x98] sm:$0xff] %vm542, %v947
    %1012 = vst.msk [vmem:[#allocation2 + $0xa0] sm:$0xff] %vm542, %v948
    %1013 = vst.msk [vmem:[#allocation2 + $0xa8] sm:$0xff] %vm542, %v949
    %1014 = vst.msk [vmem:[#allocation2 + $0xb0] sm:$0xff] %vm542, %v950
    %1015 = vst.msk [vmem:[#allocation2 + $0xb8] sm:$0xff] %vm542, %v951
    %1016 = vst.msk [vmem:[#allocation2 + $0xc0] sm:$0xff] %vm542, %v952
    %1017 = vst.msk [vmem:[#allocation2 + $0xc8] sm:$0xff] %vm542, %v953
    %1018 = vst.msk [vmem:[#allocation2 + $0xd0] sm:$0xff] %vm542, %v954
    %1019 = vst.msk [vmem:[#allocation2 + $0xd8] sm:$0xff] %vm542, %v955
    %1020 = vst.msk [vmem:[#allocation2 + $0xe0] sm:$0xff] %vm542, %v956
    %1021 = vst.msk [vmem:[#allocation2 + $0xe8] sm:$0xff] %vm542, %v957
    %1022 = vst.msk [vmem:[#allocation2 + $0xf0] sm:$0xff] %vm542, %v958
    %1023 = vst.msk [vmem:[#allocation2 + $0xf8] sm:$0xff] %vm542, %v959
    %1024 = vst.msk [vmem:[#allocation2 + $0x100] sm:$0xff] %vm542, %v960
    %1025 = vst.msk [vmem:[#allocation2 + $0x108] sm:$0xff] %vm542, %v961
    %1026 = vst.msk [vmem:[#allocation2 + $0x110] sm:$0xff] %vm542, %v962
    %1027 = vst.msk [vmem:[#allocation2 + $0x118] sm:$0xff] %vm542, %v963
    %1028 = vst.msk [vmem:[#allocation2 + $0x120] sm:$0xff] %vm542, %v964
    %1029 = vst.msk [vmem:[#allocation2 + $0x128] sm:$0xff] %vm542, %v965
    %1030 = vst.msk [vmem:[#allocation2 + $0x130] sm:$0xff] %vm542, %v966
    %1031 = vst.msk [vmem:[#allocation2 + $0x138] sm:$0xff] %vm542, %v967
    %1032 = vst.msk [vmem:[#allocation2 + $0x140] sm:$0xff] %vm542, %v968
    %1033 = vst.msk [vmem:[#allocation2 + $0x148] sm:$0xff] %vm542, %v969
    %1034 = vst.msk [vmem:[#allocation2 + $0x150] sm:$0xff] %vm542, %v970
    %1035 = vst.msk [vmem:[#allocation2 + $0x158] sm:$0xff] %vm542, %v971
    %1036 = vst.msk [vmem:[#allocation2 + $0x160] sm:$0xff] %vm542, %v972
    %1037 = vst.msk [vmem:[#allocation2 + $0x168] sm:$0xff] %vm542, %v973
    %1038 = vst.msk [vmem:[#allocation2 + $0x170] sm:$0xff] %vm542, %v974
    %1039 = vst.msk [vmem:[#allocation2 + $0x178] sm:$0xff] %vm542, %v975
    %1040 = vst.msk [vmem:[#allocation2 + $0x180] sm:$0xff] %vm542, %v976
    %1041 = vst.msk [vmem:[#allocation2 + $0x188] sm:$0xff] %vm542, %v977
    %1042 = vst.msk [vmem:[#allocation2 + $0x190] sm:$0xff] %vm542, %v978
    %1043 = vst.msk [vmem:[#allocation2 + $0x198] sm:$0xff] %vm542, %v979
    %1044 = vst.msk [vmem:[#allocation2 + $0x1a0] sm:$0xff] %vm542, %v980
    %1045 = vst.msk [vmem:[#allocation2 + $0x1a8] sm:$0xff] %vm542, %v981
    %1046 = vst.msk [vmem:[#allocation2 + $0x1b0] sm:$0xff] %vm542, %v982
    %1047 = vst.msk [vmem:[#allocation2 + $0x1b8] sm:$0xff] %vm542, %v983
    %1048 = vst.msk [vmem:[#allocation2 + $0x1c0] sm:$0xff] %vm542, %v984
    %1049 = vst.msk [vmem:[#allocation2 + $0x1c8] sm:$0xff] %vm542, %v985
    %1050 = vst.msk [vmem:[#allocation2 + $0x1d0] sm:$0xff] %vm542, %v986
    %1051 = vst.msk [vmem:[#allocation2 + $0x1d8] sm:$0xff] %vm542, %v987
    %1052 = vst.msk [vmem:[#allocation2 + $0x1e0] sm:$0xff] %vm542, %v988
    %1053 = vst.msk [vmem:[#allocation2 + $0x1e8] sm:$0xff] %vm542, %v989
    %1054 = vst.msk [vmem:[#allocation2 + $0x1f0] sm:$0xff] %vm542, %v990
    %1055 = vst.msk [vmem:[#allocation2 + $0x1f8] sm:$0xff] %vm542, %v991
    // Predicated region
    $region26: #{resblock_forward.3} parent=1 // pred_check
      _
    $region27: #{resblock_forward.3} parent=1 // pred_check_branch
      %1057 = sbr.rel (0) target = $region29
    $region28: #{resblock_forward.3} parent=1 // pred_region
      %s1059 = ssub.s32 8192, 8192
      %1060 = vsyncadd [#allocation3], %s1059
      %s1061 = sshll.u32 [#allocation2], 4
      %s1062 = int_to_ptr.vmem [resolvable:$true] %s1061
      %1067 = dma.vmem_to_hbm [thread:$0]  %s1062, 8192, %s6, [#allocation3], 128, 128, 8
    $region29: #{resblock_forward.3} parent=1 // pred_fallthru
      _
    // Predicated region
    $region30: #{resblock_forward.3} parent=1 // pred_check
      _
    $region31: #{resblock_forward.3} parent=1 // pred_check_branch
      %1069 = sbr.rel (0) target = $region33
    $region32: #{resblock_forward.3} parent=1 // pred_region
      %1070 = dma.done [#allocation3], 8192
    $region33: #{resblock_forward.3} parent=1 // pred_fallthru
      _
    %1071 = vsyncpa [#allocation3], 1

// kernel: resblock_forward.2
$region0: #{resblock_forward.2}
  #allocation0 [shape = 'u32[]', space=smem, size = 0x4, offset = 0x4, fixed_abs, tag = 'smem constant byte address 0x4 - core index']
  #allocation1 [shape = 'u32[144,128]{1,0:T(1,128)}', space=vmem, size = 0x12000, scoped, tag = 'internal scratch']
  #allocation2 [shape = 'bf16[2,18,18,32]{3,2,1,0:T(8,128)(2,1)}', space=vmem, size = 0x36000, scoped, tag = 'scratch operand']
  %s0 = inlined_call_operand.vmem [shape: f32[2,16,16,32], index: 0, kind: input, shape index: {}]
  %s1 = inlined_call_operand.vmem [shape: bf16[288,32], index: 1, kind: input, shape index: {}]
  %s2 = inlined_call_operand.vmem [shape: f32[512,32], index: 2, kind: output, shape index: {0}]
  %s3 = inlined_call_operand.vmem [shape: f32[1,2,32], index: 3, kind: output, shape index: {1}]
  %4 = xla_tuple %s2, %s3
  %s5 = sld [smem:[#allocation0]]
  $region26: #{resblock_forward.2} parent=0
    _
  %s7 = ssub.s32 1, %s5
  %s8 = scalar_select 0, %s7, %s5
  // Predicated region
  $region2: #{resblock_forward.2} parent=0 // pred_check
    _
  $region3: #{resblock_forward.2} parent=0 // pred_check_branch
    %10 = sbr.rel (0) target = $region5
  $region4: #{resblock_forward.2} parent=0 // pred_region
    _
  $region5: #{resblock_forward.2} parent=0 // pred_fallthru
    _
  // Predicated region
  $region6: #{resblock_forward.2} parent=0 // pred_check
    _
  $region7: #{resblock_forward.2} parent=0 // pred_check_branch
    %12 = sbr.rel (0) target = $region9
  $region8: #{resblock_forward.2} parent=0 // pred_region
    _
  $region9: #{resblock_forward.2} parent=0 // pred_fallthru
    _
  %v14 = vld [vmem:[%s0] sm:$0xff]
  %v15 = vld [vmem:[%s0 + $0x8] sm:$0xff]
  %v16 = vld [vmem:[%s0 + $0x10] sm:$0xff]
  %v17 = vld [vmem:[%s0 + $0x18] sm:$0xff]
  %v18 = vld [vmem:[%s0 + $0x20] sm:$0xff]
  %v19 = vld [vmem:[%s0 + $0x28] sm:$0xff]
  %v20 = vld [vmem:[%s0 + $0x30] sm:$0xff]
  %v21 = vld [vmem:[%s0 + $0x38] sm:$0xff]
  %v22 = vld [vmem:[%s0 + $0x40] sm:$0xff]
  %v23 = vld [vmem:[%s0 + $0x48] sm:$0xff]
  %v24 = vld [vmem:[%s0 + $0x50] sm:$0xff]
  %v25 = vld [vmem:[%s0 + $0x58] sm:$0xff]
  %v26 = vld [vmem:[%s0 + $0x60] sm:$0xff]
  %v27 = vld [vmem:[%s0 + $0x68] sm:$0xff]
  %v28 = vld [vmem:[%s0 + $0x70] sm:$0xff]
  %v29 = vld [vmem:[%s0 + $0x78] sm:$0xff]
  %v30 = vld [vmem:[%s0 + $0x80] sm:$0xff]
  %v31 = vld [vmem:[%s0 + $0x88] sm:$0xff]
  %v32 = vld [vmem:[%s0 + $0x90] sm:$0xff]
  %v33 = vld [vmem:[%s0 + $0x98] sm:$0xff]
  %v34 = vld [vmem:[%s0 + $0xa0] sm:$0xff]
  %v35 = vld [vmem:[%s0 + $0xa8] sm:$0xff]
  %v36 = vld [vmem:[%s0 + $0xb0] sm:$0xff]
  %v37 = vld [vmem:[%s0 + $0xb8] sm:$0xff]
  %v38 = vld [vmem:[%s0 + $0xc0] sm:$0xff]
  %v39 = vld [vmem:[%s0 + $0xc8] sm:$0xff]
  %v40 = vld [vmem:[%s0 + $0xd0] sm:$0xff]
  %v41 = vld [vmem:[%s0 + $0xd8] sm:$0xff]
  %v42 = vld [vmem:[%s0 + $0xe0] sm:$0xff]
  %v43 = vld [vmem:[%s0 + $0xe8] sm:$0xff]
  %v44 = vld [vmem:[%s0 + $0xf0] sm:$0xff]
  %v45 = vld [vmem:[%s0 + $0xf8] sm:$0xff]
  %v46 = vld [vmem:[%s0 + $0x100] sm:$0xff]
  %v47 = vld [vmem:[%s0 + $0x108] sm:$0xff]
  %v48 = vld [vmem:[%s0 + $0x110] sm:$0xff]
  %v49 = vld [vmem:[%s0 + $0x118] sm:$0xff]
  %v50 = vld [vmem:[%s0 + $0x120] sm:$0xff]
  %v51 = vld [vmem:[%s0 + $0x128] sm:$0xff]
  %v52 = vld [vmem:[%s0 + $0x130] sm:$0xff]
  %v53 = vld [vmem:[%s0 + $0x138] sm:$0xff]
  %v54 = vld [vmem:[%s0 + $0x140] sm:$0xff]
  %v55 = vld [vmem:[%s0 + $0x148] sm:$0xff]
  %v56 = vld [vmem:[%s0 + $0x150] sm:$0xff]
  %v57 = vld [vmem:[%s0 + $0x158] sm:$0xff]
  %v58 = vld [vmem:[%s0 + $0x160] sm:$0xff]
  %v59 = vld [vmem:[%s0 + $0x168] sm:$0xff]
  %v60 = vld [vmem:[%s0 + $0x170] sm:$0xff]
  %v61 = vld [vmem:[%s0 + $0x178] sm:$0xff]
  %v62 = vld [vmem:[%s0 + $0x180] sm:$0xff]
  %v63 = vld [vmem:[%s0 + $0x188] sm:$0xff]
  %v64 = vld [vmem:[%s0 + $0x190] sm:$0xff]
  %v65 = vld [vmem:[%s0 + $0x198] sm:$0xff]
  %v66 = vld [vmem:[%s0 + $0x1a0] sm:$0xff]
  %v67 = vld [vmem:[%s0 + $0x1a8] sm:$0xff]
  %v68 = vld [vmem:[%s0 + $0x1b0] sm:$0xff]
  %v69 = vld [vmem:[%s0 + $0x1b8] sm:$0xff]
  %v70 = vld [vmem:[%s0 + $0x1c0] sm:$0xff]
  %v71 = vld [vmem:[%s0 + $0x1c8] sm:$0xff]
  %v72 = vld [vmem:[%s0 + $0x1d0] sm:$0xff]
  %v73 = vld [vmem:[%s0 + $0x1d8] sm:$0xff]
  %v74 = vld [vmem:[%s0 + $0x1e0] sm:$0xff]
  %v75 = vld [vmem:[%s0 + $0x1e8] sm:$0xff]
  %v76 = vld [vmem:[%s0 + $0x1f0] sm:$0xff]
  %v77 = vld [vmem:[%s0 + $0x1f8] sm:$0xff]
  %vm78 = vcmask 257024
  %79 = vst.msk [vmem:[#allocation2] sm:$0xf] %vm78, 0
  %80 = vst.msk [vmem:[#allocation2 + $0x4] sm:$0xf] %vm78, 0
  %vm81 = vcmask 253952
  %82 = vst.msk [vmem:[#allocation2 + $0x8] sm:$0x1] %vm81, 0
  %83 = vst.msk [vmem:[#allocation2 + $0xc] sm:$0xf] %vm78, 0
  %84 = vst.msk [vmem:[#allocation2 + $0x10] sm:$0xf] %vm78, 0
  %85 = vst.msk [vmem:[#allocation2 + $0x14] sm:$0x1] %vm81, 0
  %86 = vst.msk [vmem:[#allocation2 + $0x18] sm:$0xf] %vm78, 0
  %87 = vst.msk [vmem:[#allocation2 + $0x1c] sm:$0xf] %vm78, 0
  %88 = vst.msk [vmem:[#allocation2 + $0x20] sm:$0x1] %vm81, 0
  %89 = vst.msk [vmem:[#allocation2 + $0x24] sm:$0xf] %vm78, 0
  %90 = vst.msk [vmem:[#allocation2 + $0x28] sm:$0xf] %vm78, 0
  %91 = vst.msk [vmem:[#allocation2 + $0x2c] sm:$0x1] %vm81, 0
  %92 = vst.msk [vmem:[#allocation2 + $0x30] sm:$0xf] %vm78, 0
  %93 = vst.msk [vmem:[#allocation2 + $0x34] sm:$0xf] %vm78, 0
  %94 = vst.msk [vmem:[#allocation2 + $0x38] sm:$0x1] %vm81, 0
  %95 = vst.msk [vmem:[#allocation2 + $0x3c] sm:$0xf] %vm78, 0
  %96 = vst.msk [vmem:[#allocation2 + $0x40] sm:$0xf] %vm78, 0
  %97 = vst.msk [vmem:[#allocation2 + $0x44] sm:$0x1] %vm81, 0
  %98 = vst.msk [vmem:[#allocation2 + $0x48] sm:$0xf] %vm78, 0
  %99 = vst.msk [vmem:[#allocation2 + $0x4c] sm:$0xf] %vm78, 0
  %100 = vst.msk [vmem:[#allocation2 + $0x50] sm:$0x1] %vm81, 0
  %101 = vst.msk [vmem:[#allocation2 + $0x54] sm:$0xf] %vm78, 0
  %102 = vst.msk [vmem:[#allocation2 + $0x58] sm:$0xf] %vm78, 0
  %103 = vst.msk [vmem:[#allocation2 + $0x5c] sm:$0x1] %vm81, 0
  %104 = vst.msk [vmem:[#allocation2 + $0x60] sm:$0xf] %vm78, 0
  %105 = vst.msk [vmem:[#allocation2 + $0x64] sm:$0xf] %vm78, 0
  %106 = vst.msk [vmem:[#allocation2 + $0x68] sm:$0x1] %vm81, 0
  %107 = vst.msk [vmem:[#allocation2 + $0x6c] sm:$0xf] %vm78, 0
  %108 = vst.msk [vmem:[#allocation2 + $0x70] sm:$0xf] %vm78, 0
  %109 = vst.msk [vmem:[#allocation2 + $0x74] sm:$0x1] %vm81, 0
  %110 = vst.msk [vmem:[#allocation2 + $0x78] sm:$0xf] %vm78, 0
  %111 = vst.msk [vmem:[#allocation2 + $0x7c] sm:$0xf] %vm78, 0
  %112 = vst.msk [vmem:[#allocation2 + $0x80] sm:$0x1] %vm81, 0
  %113 = vst.msk [vmem:[#allocation2 + $0x84] sm:$0xf] %vm78, 0
  %114 = vst.msk [vmem:[#allocation2 + $0x88] sm:$0xf] %vm78, 0
  %115 = vst.msk [vmem:[#allocation2 + $0x8c] sm:$0x1] %vm81, 0
  %116 = vst.msk [vmem:[#allocation2 + $0x90] sm:$0xf] %vm78, 0
  %117 = vst.msk [vmem:[#allocation2 + $0x94] sm:$0xf] %vm78, 0
  %118 = vst.msk [vmem:[#allocation2 + $0x98] sm:$0x1] %vm81, 0
  %119 = vst.msk [vmem:[#allocation2 + $0x9c] sm:$0xf] %vm78, 0
  %120 = vst.msk [vmem:[#allocation2 + $0xa0] sm:$0xf] %vm78, 0
  %121 = vst.msk [vmem:[#allocation2 + $0xa4] sm:$0x1] %vm81, 0
  %122 = vst.msk [vmem:[#allocation2 + $0xa8] sm:$0xf] %vm78, 0
  %123 = vst.msk [vmem:[#allocation2 + $0xac] sm:$0xf] %vm78, 0
  %124 = vst.msk [vmem:[#allocation2 + $0xb0] sm:$0x1] %vm81, 0
  %125 = vst.msk [vmem:[#allocation2 + $0xb4] sm:$0xf] %vm78, 0
  %126 = vst.msk [vmem:[#allocation2 + $0xb8] sm:$0xf] %vm78, 0
  %127 = vst.msk [vmem:[#allocation2 + $0xbc] sm:$0x1] %vm81, 0
  %128 = vst.msk [vmem:[#allocation2 + $0xc0] sm:$0xf] %vm78, 0
  %129 = vst.msk [vmem:[#allocation2 + $0xc4] sm:$0xf] %vm78, 0
  %130 = vst.msk [vmem:[#allocation2 + $0xc8] sm:$0x1] %vm81, 0
  %131 = vst.msk [vmem:[#allocation2 + $0xcc] sm:$0xf] %vm78, 0
  %132 = vst.msk [vmem:[#allocation2 + $0xd0] sm:$0xf] %vm78, 0
  %133 = vst.msk [vmem:[#allocation2 + $0xd4] sm:$0x1] %vm81, 0
  %134 = vst.msk [vmem:[#allocation2 + $0xd8] sm:$0xf] %vm78, 0
  %135 = vst.msk [vmem:[#allocation2 + $0xdc] sm:$0xf] %vm78, 0
  %136 = vst.msk [vmem:[#allocation2 + $0xe0] sm:$0x1] %vm81, 0
  %137 = vst.msk [vmem:[#allocation2 + $0xe4] sm:$0xf] %vm78, 0
  %138 = vst.msk [vmem:[#allocation2 + $0xe8] sm:$0xf] %vm78, 0
  %139 = vst.msk [vmem:[#allocation2 + $0xec] sm:$0x1] %vm81, 0
  %140 = vst.msk [vmem:[#allocation2 + $0xf0] sm:$0xf] %vm78, 0
  %141 = vst.msk [vmem:[#allocation2 + $0xf4] sm:$0xf] %vm78, 0
  %142 = vst.msk [vmem:[#allocation2 + $0xf8] sm:$0x1] %vm81, 0
  %143 = vst.msk [vmem:[#allocation2 + $0xfc] sm:$0xf] %vm78, 0
  %144 = vst.msk [vmem:[#allocation2 + $0x100] sm:$0xf] %vm78, 0
  %145 = vst.msk [vmem:[#allocation2 + $0x104] sm:$0x1] %vm81, 0
  %146 = vst.msk [vmem:[#allocation2 + $0x108] sm:$0xf] %vm78, 0
  %147 = vst.msk [vmem:[#allocation2 + $0x10c] sm:$0xf] %vm78, 0
  %148 = vst.msk [vmem:[#allocation2 + $0x110] sm:$0x1] %vm81, 0
  %149 = vst.msk [vmem:[#allocation2 + $0x114] sm:$0xf] %vm78, 0
  %150 = vst.msk [vmem:[#allocation2 + $0x118] sm:$0xf] %vm78, 0
  %151 = vst.msk [vmem:[#allocation2 + $0x11c] sm:$0x1] %vm81, 0
  %152 = vst.msk [vmem:[#allocation2 + $0x120] sm:$0xf] %vm78, 0
  %153 = vst.msk [vmem:[#allocation2 + $0x124] sm:$0xf] %vm78, 0
  %154 = vst.msk [vmem:[#allocation2 + $0x128] sm:$0x1] %vm81, 0
  %155 = vst.msk [vmem:[#allocation2 + $0x12c] sm:$0xf] %vm78, 0
  %156 = vst.msk [vmem:[#allocation2 + $0x130] sm:$0xf] %vm78, 0
  %157 = vst.msk [vmem:[#allocation2 + $0x134] sm:$0x1] %vm81, 0
  %158 = vst.msk [vmem:[#allocation2 + $0x138] sm:$0xf] %vm78, 0
  %159 = vst.msk [vmem:[#allocation2 + $0x13c] sm:$0xf] %vm78, 0
  %160 = vst.msk [vmem:[#allocation2 + $0x140] sm:$0x1] %vm81, 0
  %161 = vst.msk [vmem:[#allocation2 + $0x144] sm:$0xf] %vm78, 0
  %162 = vst.msk [vmem:[#allocation2 + $0x148] sm:$0xf] %vm78, 0
  %163 = vst.msk [vmem:[#allocation2 + $0x14c] sm:$0x1] %vm81, 0
  %164 = vst.msk [vmem:[#allocation2 + $0x150] sm:$0xf] %vm78, 0
  %165 = vst.msk [vmem:[#allocation2 + $0x154] sm:$0xf] %vm78, 0
  %166 = vst.msk [vmem:[#allocation2 + $0x158] sm:$0x1] %vm81, 0
  %167 = vst.msk [vmem:[#allocation2 + $0x15c] sm:$0xf] %vm78, 0
  %168 = vst.msk [vmem:[#allocation2 + $0x160] sm:$0xf] %vm78, 0
  %169 = vst.msk [vmem:[#allocation2 + $0x164] sm:$0x1] %vm81, 0
  %170 = vst.msk [vmem:[#allocation2 + $0x168] sm:$0xf] %vm78, 0
  %171 = vst.msk [vmem:[#allocation2 + $0x16c] sm:$0xf] %vm78, 0
  %172 = vst.msk [vmem:[#allocation2 + $0x170] sm:$0x1] %vm81, 0
  %173 = vst.msk [vmem:[#allocation2 + $0x174] sm:$0xf] %vm78, 0
  %174 = vst.msk [vmem:[#allocation2 + $0x178] sm:$0xf] %vm78, 0
  %175 = vst.msk [vmem:[#allocation2 + $0x17c] sm:$0x1] %vm81, 0
  %176 = vst.msk [vmem:[#allocation2 + $0x180] sm:$0xf] %vm78, 0
  %177 = vst.msk [vmem:[#allocation2 + $0x184] sm:$0xf] %vm78, 0
  %178 = vst.msk [vmem:[#allocation2 + $0x188] sm:$0x1] %vm81, 0
  %179 = vst.msk [vmem:[#allocation2 + $0x18c] sm:$0xf] %vm78, 0
  %180 = vst.msk [vmem:[#allocation2 + $0x190] sm:$0xf] %vm78, 0
  %181 = vst.msk [vmem:[#allocation2 + $0x194] sm:$0x1] %vm81, 0
  %182 = vst.msk [vmem:[#allocation2 + $0x198] sm:$0xf] %vm78, 0
  %183 = vst.msk [vmem:[#allocation2 + $0x19c] sm:$0xf] %vm78, 0
  %184 = vst.msk [vmem:[#allocation2 + $0x1a0] sm:$0x1] %vm81, 0
  %185 = vst.msk [vmem:[#allocation2 + $0x1a4] sm:$0xf] %vm78, 0
  %186 = vst.msk [vmem:[#allocation2 + $0x1a8] sm:$0xf] %vm78, 0
  %187 = vst.msk [vmem:[#allocation2 + $0x1ac] sm:$0x1] %vm81, 0
  %vm188 = vcmp.ge.f32.partialorder %v14, 0.0
  %vm189 = vcmp.ge.f32.partialorder %v15, 0.0
  %vm190 = vcmp.ge.f32.partialorder %v16, 0.0
  %vm191 = vcmp.ge.f32.partialorder %v17, 0.0
  %vm192 = vcmp.ge.f32.partialorder %v18, 0.0
  %vm193 = vcmp.ge.f32.partialorder %v19, 0.0
  %vm194 = vcmp.ge.f32.partialorder %v20, 0.0
  %vm195 = vcmp.ge.f32.partialorder %v21, 0.0
  %vm196 = vcmp.ge.f32.partialorder %v22, 0.0
  %vm197 = vcmp.ge.f32.partialorder %v23, 0.0
  %vm198 = vcmp.ge.f32.partialorder %v24, 0.0
  %vm199 = vcmp.ge.f32.partialorder %v25, 0.0
  %vm200 = vcmp.ge.f32.partialorder %v26, 0.0
  %vm201 = vcmp.ge.f32.partialorder %v27, 0.0
  %vm202 = vcmp.ge.f32.partialorder %v28, 0.0
  %vm203 = vcmp.ge.f32.partialorder %v29, 0.0
  %vm204 = vcmp.ge.f32.partialorder %v30, 0.0
  %vm205 = vcmp.ge.f32.partialorder %v31, 0.0
  %vm206 = vcmp.ge.f32.partialorder %v32, 0.0
  %vm207 = vcmp.ge.f32.partialorder %v33, 0.0
  %vm208 = vcmp.ge.f32.partialorder %v34, 0.0
  %vm209 = vcmp.ge.f32.partialorder %v35, 0.0
  %vm210 = vcmp.ge.f32.partialorder %v36, 0.0
  %vm211 = vcmp.ge.f32.partialorder %v37, 0.0
  %vm212 = vcmp.ge.f32.partialorder %v38, 0.0
  %vm213 = vcmp.ge.f32.partialorder %v39, 0.0
  %vm214 = vcmp.ge.f32.partialorder %v40, 0.0
  %vm215 = vcmp.ge.f32.partialorder %v41, 0.0
  %vm216 = vcmp.ge.f32.partialorder %v42, 0.0
  %vm217 = vcmp.ge.f32.partialorder %v43, 0.0
  %vm218 = vcmp.ge.f32.partialorder %v44, 0.0
  %vm219 = vcmp.ge.f32.partialorder %v45, 0.0
  %vm220 = vcmp.ge.f32.partialorder %v46, 0.0
  %vm221 = vcmp.ge.f32.partialorder %v47, 0.0
  %vm222 = vcmp.ge.f32.partialorder %v48, 0.0
  %vm223 = vcmp.ge.f32.partialorder %v49, 0.0
  %vm224 = vcmp.ge.f32.partialorder %v50, 0.0
  %vm225 = vcmp.ge.f32.partialorder %v51, 0.0
  %vm226 = vcmp.ge.f32.partialorder %v52, 0.0
  %vm227 = vcmp.ge.f32.partialorder %v53, 0.0
  %vm228 = vcmp.ge.f32.partialorder %v54, 0.0
  %vm229 = vcmp.ge.f32.partialorder %v55, 0.0
  %vm230 = vcmp.ge.f32.partialorder %v56, 0.0
  %vm231 = vcmp.ge.f32.partialorder %v57, 0.0
  %vm232 = vcmp.ge.f32.partialorder %v58, 0.0
  %vm233 = vcmp.ge.f32.partialorder %v59, 0.0
  %vm234 = vcmp.ge.f32.partialorder %v60, 0.0
  %vm235 = vcmp.ge.f32.partialorder %v61, 0.0
  %vm236 = vcmp.ge.f32.partialorder %v62, 0.0
  %vm237 = vcmp.ge.f32.partialorder %v63, 0.0
  %vm238 = vcmp.ge.f32.partialorder %v64, 0.0
  %vm239 = vcmp.ge.f32.partialorder %v65, 0.0
  %vm240 = vcmp.ge.f32.partialorder %v66, 0.0
  %vm241 = vcmp.ge.f32.partialorder %v67, 0.0
  %vm242 = vcmp.ge.f32.partialorder %v68, 0.0
  %vm243 = vcmp.ge.f32.partialorder %v69, 0.0
  %vm244 = vcmp.ge.f32.partialorder %v70, 0.0
  %vm245 = vcmp.ge.f32.partialorder %v71, 0.0
  %vm246 = vcmp.ge.f32.partialorder %v72, 0.0
  %vm247 = vcmp.ge.f32.partialorder %v73, 0.0
  %vm248 = vcmp.ge.f32.partialorder %v74, 0.0
  %vm249 = vcmp.ge.f32.partialorder %v75, 0.0
  %vm250 = vcmp.ge.f32.partialorder %v76, 0.0
  %vm251 = vcmp.ge.f32.partialorder %v77, 0.0
  %v252 = vmul.f32 %v14, 0.01
  %v253 = vmul.f32 %v15, 0.01
  %v254 = vmul.f32 %v16, 0.01
  %v255 = vmul.f32 %v17, 0.01
  %v256 = vmul.f32 %v18, 0.01
  %v257 = vmul.f32 %v19, 0.01
  %v258 = vmul.f32 %v20, 0.01
  %v259 = vmul.f32 %v21, 0.01
  %v260 = vmul.f32 %v22, 0.01
  %v261 = vmul.f32 %v23, 0.01
  %v262 = vmul.f32 %v24, 0.01
  %v263 = vmul.f32 %v25, 0.01
  %v264 = vmul.f32 %v26, 0.01
  %v265 = vmul.f32 %v27, 0.01
  %v266 = vmul.f32 %v28, 0.01
  %v267 = vmul.f32 %v29, 0.01
  %v268 = vmul.f32 %v30, 0.01
  %v269 = vmul.f32 %v31, 0.01
  %v270 = vmul.f32 %v32, 0.01
  %v271 = vmul.f32 %v33, 0.01
  %v272 = vmul.f32 %v34, 0.01
  %v273 = vmul.f32 %v35, 0.01
  %v274 = vmul.f32 %v36, 0.01
  %v275 = vmul.f32 %v37, 0.01
  %v276 = vmul.f32 %v38, 0.01
  %v277 = vmul.f32 %v39, 0.01
  %v278 = vmul.f32 %v40, 0.01
  %v279 = vmul.f32 %v41, 0.01
  %v280 = vmul.f32 %v42, 0.01
  %v281 = vmul.f32 %v43, 0.01
  %v282 = vmul.f32 %v44, 0.01
  %v283 = vmul.f32 %v45, 0.01
  %v284 = vmul.f32 %v46, 0.01
  %v285 = vmul.f32 %v47, 0.01
  %v286 = vmul.f32 %v48, 0.01
  %v287 = vmul.f32 %v49, 0.01
  %v288 = vmul.f32 %v50, 0.01
  %v289 = vmul.f32 %v51, 0.01
  %v290 = vmul.f32 %v52, 0.01
  %v291 = vmul.f32 %v53, 0.01
  %v292 = vmul.f32 %v54, 0.01
  %v293 = vmul.f32 %v55, 0.01
  %v294 = vmul.f32 %v56, 0.01
  %v295 = vmul.f32 %v57, 0.01
  %v296 = vmul.f32 %v58, 0.01
  %v297 = vmul.f32 %v59, 0.01
  %v298 = vmul.f32 %v60, 0.01
  %v299 = vmul.f32 %v61, 0.01
  %v300 = vmul.f32 %v62, 0.01
  %v301 = vmul.f32 %v63, 0.01
  %v302 = vmul.f32 %v64, 0.01
  %v303 = vmul.f32 %v65, 0.01
  %v304 = vmul.f32 %v66, 0.01
  %v305 = vmul.f32 %v67, 0.01
  %v306 = vmul.f32 %v68, 0.01
  %v307 = vmul.f32 %v69, 0.01
  %v308 = vmul.f32 %v70, 0.01
  %v309 = vmul.f32 %v71, 0.01
  %v310 = vmul.f32 %v72, 0.01
  %v311 = vmul.f32 %v73, 0.01
  %v312 = vmul.f32 %v74, 0.01
  %v313 = vmul.f32 %v75, 0.01
  %v314 = vmul.f32 %v76, 0.01
  %v315 = vmul.f32 %v77, 0.01
  %v316 = vsel %vm188, %v14, %v252
  %v317 = vsel %vm189, %v15, %v253
  %v318 = vsel %vm190, %v16, %v254
  %v319 = vsel %vm191, %v17, %v255
  %v320 = vsel %vm192, %v18, %v256
  %v321 = vsel %vm193, %v19, %v257
  %v322 = vsel %vm194, %v20, %v258
  %v323 = vsel %vm195, %v21, %v259
  %v324 = vsel %vm196, %v22, %v260
  %v325 = vsel %vm197, %v23, %v261
  %v326 = vsel %vm198, %v24, %v262
  %v327 = vsel %vm199, %v25, %v263
  %v328 = vsel %vm200, %v26, %v264
  %v329 = vsel %vm201, %v27, %v265
  %v330 = vsel %vm202, %v28, %v266
  %v331 = vsel %vm203, %v29, %v267
  %v332 = vsel %vm204, %v30, %v268
  %v333 = vsel %vm205, %v31, %v269
  %v334 = vsel %vm206, %v32, %v270
  %v335 = vsel %vm207, %v33, %v271
  %v336 = vsel %vm208, %v34, %v272
  %v337 = vsel %vm209, %v35, %v273
  %v338 = vsel %vm210, %v36, %v274
  %v339 = vsel %vm211, %v37, %v275
  %v340 = vsel %vm212, %v38, %v276
  %v341 = vsel %vm213, %v39, %v277
  %v342 = vsel %vm214, %v40, %v278
  %v343 = vsel %vm215, %v41, %v279
  %v344 = vsel %vm216, %v42, %v280
  %v345 = vsel %vm217, %v43, %v281
  %v346 = vsel %vm218, %v44, %v282
  %v347 = vsel %vm219, %v45, %v283
  %v348 = vsel %vm220, %v46, %v284
  %v349 = vsel %vm221, %v47, %v285
  %v350 = vsel %vm222, %v48, %v286
  %v351 = vsel %vm223, %v49, %v287
  %v352 = vsel %vm224, %v50, %v288
  %v353 = vsel %vm225, %v51, %v289
  %v354 = vsel %vm226, %v52, %v290
  %v355 = vsel %vm227, %v53, %v291
  %v356 = vsel %vm228, %v54, %v292
  %v357 = vsel %vm229, %v55, %v293
  %v358 = vsel %vm230, %v56, %v294
  %v359 = vsel %vm231, %v57, %v295
  %v360 = vsel %vm232, %v58, %v296
  %v361 = vsel %vm233, %v59, %v297
  %v362 = vsel %vm234, %v60, %v298
  %v363 = vsel %vm235, %v61, %v299
  %v364 = vsel %vm236, %v62, %v300
  %v365 = vsel %vm237, %v63, %v301
  %v366 = vsel %vm238, %v64, %v302
  %v367 = vsel %vm239, %v65, %v303
  %v368 = vsel %vm240, %v66, %v304
  %v369 = vsel %vm241, %v67, %v305
  %v370 = vsel %vm242, %v68, %v306
  %v371 = vsel %vm243, %v69, %v307
  %v372 = vsel %vm244, %v70, %v308
  %v373 = vsel %vm245, %v71, %v309
  %v374 = vsel %vm246, %v72, %v310
  %v375 = vsel %vm247, %v73, %v311
  %v376 = vsel %vm248, %v74, %v312
  %v377 = vsel %vm249, %v75, %v313
  %v378 = vsel %vm250, %v76, %v314
  %v379 = vsel %vm251, %v77, %v315
  %v380 = vpack.c.bf16 %v317, %v316
  %v381 = vpack.c.bf16 %v319, %v318
  %v382 = vpack.c.bf16 %v321, %v320
  %v383 = vpack.c.bf16 %v323, %v322
  %v384 = vpack.c.bf16 %v325, %v324
  %v385 = vpack.c.bf16 %v327, %v326
  %v386 = vpack.c.bf16 %v329, %v328
  %v387 = vpack.c.bf16 %v331, %v330
  %v388 = vpack.c.bf16 %v333, %v332
  %v389 = vpack.c.bf16 %v335, %v334
  %v390 = vpack.c.bf16 %v337, %v336
  %v391 = vpack.c.bf16 %v339, %v338
  %v392 = vpack.c.bf16 %v341, %v340
  %v393 = vpack.c.bf16 %v343, %v342
  %v394 = vpack.c.bf16 %v345, %v344
  %v395 = vpack.c.bf16 %v347, %v346
  %v396 = vpack.c.bf16 %v349, %v348
  %v397 = vpack.c.bf16 %v351, %v350
  %v398 = vpack.c.bf16 %v353, %v352
  %v399 = vpack.c.bf16 %v355, %v354
  %v400 = vpack.c.bf16 %v357, %v356
  %v401 = vpack.c.bf16 %v359, %v358
  %v402 = vpack.c.bf16 %v361, %v360
  %v403 = vpack.c.bf16 %v363, %v362
  %v404 = vpack.c.bf16 %v365, %v364
  %v405 = vpack.c.bf16 %v367, %v366
  %v406 = vpack.c.bf16 %v369, %v368
  %v407 = vpack.c.bf16 %v371, %v370
  %v408 = vpack.c.bf16 %v373, %v372
  %v409 = vpack.c.bf16 %v375, %v374
  %v410 = vpack.c.bf16 %v377, %v376
  %v411 = vpack.c.bf16 %v379, %v378
  %v444 = vunpack.c.l.b16 %v380
  %v445 = vunpack.c.h.b16 %v380
  %v446 = vunpack.c.l.b16 %v381
  %v447 = vunpack.c.h.b16 %v381
  %v448 = vunpack.c.l.b16 %v382
  %v449 = vunpack.c.h.b16 %v382
  %v450 = vunpack.c.l.b16 %v383
  %v451 = vunpack.c.h.b16 %v383
  %v452 = vunpack.c.l.b16 %v384
  %v453 = vunpack.c.h.b16 %v384
  %v454 = vunpack.c.l.b16 %v385
  %v455 = vunpack.c.h.b16 %v385
  %v456 = vunpack.c.l.b16 %v386
  %v457 = vunpack.c.h.b16 %v386
  %v458 = vunpack.c.l.b16 %v387
  %v459 = vunpack.c.h.b16 %v387
  %v460 = vunpack.c.l.b16 %v388
  %v461 = vunpack.c.h.b16 %v388
  %v462 = vunpack.c.l.b16 %v389
  %v463 = vunpack.c.h.b16 %v389
  %v464 = vunpack.c.l.b16 %v390
  %v465 = vunpack.c.h.b16 %v390
  %v466 = vunpack.c.l.b16 %v391
  %v467 = vunpack.c.h.b16 %v391
  %v468 = vunpack.c.l.b16 %v392
  %v469 = vunpack.c.h.b16 %v392
  %v470 = vunpack.c.l.b16 %v393
  %v471 = vunpack.c.h.b16 %v393
  %v472 = vunpack.c.l.b16 %v394
  %v473 = vunpack.c.h.b16 %v394
  %v474 = vunpack.c.l.b16 %v395
  %v475 = vunpack.c.h.b16 %v395
  %v476 = vunpack.c.l.b16 %v396
  %v477 = vunpack.c.h.b16 %v396
  %v478 = vunpack.c.l.b16 %v397
  %v479 = vunpack.c.h.b16 %v397
  %v480 = vunpack.c.l.b16 %v398
  %v481 = vunpack.c.h.b16 %v398
  %v482 = vunpack.c.l.b16 %v399
  %v483 = vunpack.c.h.b16 %v399
  %v484 = vunpack.c.l.b16 %v400
  %v485 = vunpack.c.h.b16 %v400
  %v486 = vunpack.c.l.b16 %v401
  %v487 = vunpack.c.h.b16 %v401
  %v488 = vunpack.c.l.b16 %v402
  %v489 = vunpack.c.h.b16 %v402
  %v490 = vunpack.c.l.b16 %v403
  %v491 = vunpack.c.h.b16 %v403
  %v492 = vunpack.c.l.b16 %v404
  %v493 = vunpack.c.h.b16 %v404
  %v494 = vunpack.c.l.b16 %v405
  %v495 = vunpack.c.h.b16 %v405
  %v496 = vunpack.c.l.b16 %v406
  %v497 = vunpack.c.h.b16 %v406
  %v498 = vunpack.c.l.b16 %v407
  %v499 = vunpack.c.h.b16 %v407
  %v500 = vunpack.c.l.b16 %v408
  %v501 = vunpack.c.h.b16 %v408
  %v502 = vunpack.c.l.b16 %v409
  %v503 = vunpack.c.h.b16 %v409
  %v504 = vunpack.c.l.b16 %v410
  %v505 = vunpack.c.h.b16 %v410
  %v506 = vunpack.c.l.b16 %v411
  %v507 = vunpack.c.h.b16 %v411
  %v508 = vpack.c.b16 %v444, %v444
  %v509 = vpack.c.b16 %v445, %v445
  %v510 = vpack.c.b16 %v446, %v446
  %v511 = vpack.c.b16 %v447, %v447
  %v512 = vpack.c.b16 %v448, %v448
  %v513 = vpack.c.b16 %v449, %v449
  %v514 = vpack.c.b16 %v450, %v450
  %v515 = vpack.c.b16 %v451, %v451
  %v516 = vpack.c.b16 %v452, %v452
  %v517 = vpack.c.b16 %v453, %v453
  %v518 = vpack.c.b16 %v454, %v454
  %v519 = vpack.c.b16 %v455, %v455
  %v520 = vpack.c.b16 %v456, %v456
  %v521 = vpack.c.b16 %v457, %v457
  %v522 = vpack.c.b16 %v458, %v458
  %v523 = vpack.c.b16 %v459, %v459
  %v524 = vpack.c.b16 %v460, %v460
  %v525 = vpack.c.b16 %v461, %v461
  %v526 = vpack.c.b16 %v462, %v462
  %v527 = vpack.c.b16 %v463, %v463
  %v528 = vpack.c.b16 %v464, %v464
  %v529 = vpack.c.b16 %v465, %v465
  %v530 = vpack.c.b16 %v466, %v466
  %v531 = vpack.c.b16 %v467, %v467
  %v532 = vpack.c.b16 %v468, %v468
  %v533 = vpack.c.b16 %v469, %v469
  %v534 = vpack.c.b16 %v470, %v470
  %v535 = vpack.c.b16 %v471, %v471
  %v536 = vpack.c.b16 %v472, %v472
  %v537 = vpack.c.b16 %v473, %v473
  %v538 = vpack.c.b16 %v474, %v474
  %v539 = vpack.c.b16 %v475, %v475
  %v540 = vpack.c.b16 %v476, %v476
  %v541 = vpack.c.b16 %v477, %v477
  %v542 = vpack.c.b16 %v478, %v478
  %v543 = vpack.c.b16 %v479, %v479
  %v544 = vpack.c.b16 %v480, %v480
  %v545 = vpack.c.b16 %v481, %v481
  %v546 = vpack.c.b16 %v482, %v482
  %v547 = vpack.c.b16 %v483, %v483
  %v548 = vpack.c.b16 %v484, %v484
  %v549 = vpack.c.b16 %v485, %v485
  %v550 = vpack.c.b16 %v486, %v486
  %v551 = vpack.c.b16 %v487, %v487
  %v552 = vpack.c.b16 %v488, %v488
  %v553 = vpack.c.b16 %v489, %v489
  %v554 = vpack.c.b16 %v490, %v490
  %v555 = vpack.c.b16 %v491, %v491
  %v556 = vpack.c.b16 %v492, %v492
  %v557 = vpack.c.b16 %v493, %v493
  %v558 = vpack.c.b16 %v494, %v494
  %v559 = vpack.c.b16 %v495, %v495
  %v560 = vpack.c.b16 %v496, %v496
  %v561 = vpack.c.b16 %v497, %v497
  %v562 = vpack.c.b16 %v498, %v498
  %v563 = vpack.c.b16 %v499, %v499
  %v564 = vpack.c.b16 %v500, %v500
  %v565 = vpack.c.b16 %v501, %v501
  %v566 = vpack.c.b16 %v502, %v502
  %v567 = vpack.c.b16 %v503, %v503
  %v568 = vpack.c.b16 %v504, %v504
  %v569 = vpack.c.b16 %v505, %v505
  %v570 = vpack.c.b16 %v506, %v506
  %v571 = vpack.c.b16 %v507, %v507
  %vm572 = vsmask.f32 256
  %vm573 = vsmask.f32 4368
  %vm574 = vmor %vm572, %vm573
  %v576 = vshrl.u32 %v508, 16
  %v578 = vrot.slane %v576, 7
  %v579 = vshll.u32 %v508, 16
  %v581 = vor.u32 %v578, %v579
  %v582 = vrot.slane %v578, 4
  %v584 = vshrl.u32 %v509, 16
  %v586 = vrot.slane %v584, 7
  %v587 = vshll.u32 %v509, 16
  %v589 = vor.u32 %v586, %v587
  %v590 = vsel %vm574, %v582, %v589
  %v591 = vrot.slane %v586, 4
  %v593 = vshrl.u32 %v510, 16
  %v595 = vrot.slane %v593, 7
  %v596 = vshll.u32 %v510, 16
  %v598 = vor.u32 %v595, %v596
  %v599 = vrot.slane %v595, 4
  %v601 = vshrl.u32 %v511, 16
  %v603 = vrot.slane %v601, 7
  %v604 = vshll.u32 %v511, 16
  %v606 = vor.u32 %v603, %v604
  %v607 = vsel %vm574, %v599, %v606
  %v608 = vrot.slane %v603, 4
  %v610 = vshrl.u32 %v512, 16
  %v612 = vrot.slane %v610, 7
  %v613 = vshll.u32 %v512, 16
  %v615 = vor.u32 %v612, %v613
  %v616 = vrot.slane %v612, 4
  %v618 = vshrl.u32 %v513, 16
  %v620 = vrot.slane %v618, 7
  %v621 = vshll.u32 %v513, 16
  %v623 = vor.u32 %v620, %v621
  %v624 = vsel %vm574, %v616, %v623
  %v625 = vrot.slane %v620, 4
  %v627 = vshrl.u32 %v514, 16
  %v629 = vrot.slane %v627, 7
  %v630 = vshll.u32 %v514, 16
  %v632 = vor.u32 %v629, %v630
  %v633 = vrot.slane %v629, 4
  %v635 = vshrl.u32 %v515, 16
  %v637 = vrot.slane %v635, 7
  %v638 = vshll.u32 %v515, 16
  %v640 = vor.u32 %v637, %v638
  %v641 = vsel %vm574, %v633, %v640
  %v642 = vrot.slane %v637, 4
  %v644 = vshrl.u32 %v516, 16
  %v646 = vrot.slane %v644, 7
  %v647 = vshll.u32 %v516, 16
  %v649 = vor.u32 %v646, %v647
  %v650 = vrot.slane %v646, 4
  %v652 = vshrl.u32 %v517, 16
  %v654 = vrot.slane %v652, 7
  %v655 = vshll.u32 %v517, 16
  %v657 = vor.u32 %v654, %v655
  %v658 = vsel %vm574, %v650, %v657
  %v659 = vrot.slane %v654, 4
  %v661 = vshrl.u32 %v518, 16
  %v663 = vrot.slane %v661, 7
  %v664 = vshll.u32 %v518, 16
  %v666 = vor.u32 %v663, %v664
  %v667 = vrot.slane %v663, 4
  %v669 = vshrl.u32 %v519, 16
  %v671 = vrot.slane %v669, 7
  %v672 = vshll.u32 %v519, 16
  %v674 = vor.u32 %v671, %v672
  %v675 = vsel %vm574, %v667, %v674
  %v676 = vrot.slane %v671, 4
  %v678 = vshrl.u32 %v520, 16
  %v680 = vrot.slane %v678, 7
  %v681 = vshll.u32 %v520, 16
  %v683 = vor.u32 %v680, %v681
  %v684 = vrot.slane %v680, 4
  %v686 = vshrl.u32 %v521, 16
  %v688 = vrot.slane %v686, 7
  %v689 = vshll.u32 %v521, 16
  %v691 = vor.u32 %v688, %v689
  %v692 = vsel %vm574, %v684, %v691
  %v693 = vrot.slane %v688, 4
  %v695 = vshrl.u32 %v522, 16
  %v697 = vrot.slane %v695, 7
  %v698 = vshll.u32 %v522, 16
  %v700 = vor.u32 %v697, %v698
  %v701 = vrot.slane %v697, 4
  %v703 = vshrl.u32 %v523, 16
  %v705 = vrot.slane %v703, 7
  %v706 = vshll.u32 %v523, 16
  %v708 = vor.u32 %v705, %v706
  %v709 = vsel %vm574, %v701, %v708
  %v710 = vrot.slane %v705, 4
  %v712 = vshrl.u32 %v524, 16
  %v714 = vrot.slane %v712, 7
  %v715 = vshll.u32 %v524, 16
  %v717 = vor.u32 %v714, %v715
  %v718 = vrot.slane %v714, 4
  %v720 = vshrl.u32 %v525, 16
  %v722 = vrot.slane %v720, 7
  %v723 = vshll.u32 %v525, 16
  %v725 = vor.u32 %v722, %v723
  %v726 = vsel %vm574, %v718, %v725
  %v727 = vrot.slane %v722, 4
  %v729 = vshrl.u32 %v526, 16
  %v731 = vrot.slane %v729, 7
  %v732 = vshll.u32 %v526, 16
  %v734 = vor.u32 %v731, %v732
  %v735 = vrot.slane %v731, 4
  %v737 = vshrl.u32 %v527, 16
  %v739 = vrot.slane %v737, 7
  %v740 = vshll.u32 %v527, 16
  %v742 = vor.u32 %v739, %v740
  %v743 = vsel %vm574, %v735, %v742
  %v744 = vrot.slane %v739, 4
  %v746 = vshrl.u32 %v528, 16
  %v748 = vrot.slane %v746, 7
  %v749 = vshll.u32 %v528, 16
  %v751 = vor.u32 %v748, %v749
  %v752 = vrot.slane %v748, 4
  %v754 = vshrl.u32 %v529, 16
  %v756 = vrot.slane %v754, 7
  %v757 = vshll.u32 %v529, 16
  %v759 = vor.u32 %v756, %v757
  %v760 = vsel %vm574, %v752, %v759
  %v761 = vrot.slane %v756, 4
  %v763 = vshrl.u32 %v530, 16
  %v765 = vrot.slane %v763, 7
  %v766 = vshll.u32 %v530, 16
  %v768 = vor.u32 %v765, %v766
  %v769 = vrot.slane %v765, 4
  %v771 = vshrl.u32 %v531, 16
  %v773 = vrot.slane %v771, 7
  %v774 = vshll.u32 %v531, 16
  %v776 = vor.u32 %v773, %v774
  %v777 = vsel %vm574, %v769, %v776
  %v778 = vrot.slane %v773, 4
  %v780 = vshrl.u32 %v532, 16
  %v782 = vrot.slane %v780, 7
  %v783 = vshll.u32 %v532, 16
  %v785 = vor.u32 %v782, %v783
  %v786 = vrot.slane %v782, 4
  %v788 = vshrl.u32 %v533, 16
  %v790 = vrot.slane %v788, 7
  %v791 = vshll.u32 %v533, 16
  %v793 = vor.u32 %v790, %v791
  %v794 = vsel %vm574, %v786, %v793
  %v795 = vrot.slane %v790, 4
  %v797 = vshrl.u32 %v534, 16
  %v799 = vrot.slane %v797, 7
  %v800 = vshll.u32 %v534, 16
  %v802 = vor.u32 %v799, %v800
  %v803 = vrot.slane %v799, 4
  %v805 = vshrl.u32 %v535, 16
  %v807 = vrot.slane %v805, 7
  %v808 = vshll.u32 %v535, 16
  %v810 = vor.u32 %v807, %v808
  %v811 = vsel %vm574, %v803, %v810
  %v812 = vrot.slane %v807, 4
  %v814 = vshrl.u32 %v536, 16
  %v816 = vrot.slane %v814, 7
  %v817 = vshll.u32 %v536, 16
  %v819 = vor.u32 %v816, %v817
  %v820 = vrot.slane %v816, 4
  %v822 = vshrl.u32 %v537, 16
  %v824 = vrot.slane %v822, 7
  %v825 = vshll.u32 %v537, 16
  %v827 = vor.u32 %v824, %v825
  %v828 = vsel %vm574, %v820, %v827
  %v829 = vrot.slane %v824, 4
  %v831 = vshrl.u32 %v538, 16
  %v833 = vrot.slane %v831, 7
  %v834 = vshll.u32 %v538, 16
  %v836 = vor.u32 %v833, %v834
  %v837 = vrot.slane %v833, 4
  %v839 = vshrl.u32 %v539, 16
  %v841 = vrot.slane %v839, 7
  %v842 = vshll.u32 %v539, 16
  %v844 = vor.u32 %v841, %v842
  %v845 = vsel %vm574, %v837, %v844
  %v846 = vrot.slane %v841, 4
  %v848 = vshrl.u32 %v540, 16
  %v850 = vrot.slane %v848, 7
  %v851 = vshll.u32 %v540, 16
  %v853 = vor.u32 %v850, %v851
  %v854 = vrot.slane %v850, 4
  %v856 = vshrl.u32 %v541, 16
  %v858 = vrot.slane %v856, 7
  %v859 = vshll.u32 %v541, 16
  %v861 = vor.u32 %v858, %v859
  %v862 = vsel %vm574, %v854, %v861
  %v863 = vrot.slane %v858, 4
  %v865 = vshrl.u32 %v542, 16
  %v867 = vrot.slane %v865, 7
  %v868 = vshll.u32 %v542, 16
  %v870 = vor.u32 %v867, %v868
  %v871 = vrot.slane %v867, 4
  %v873 = vshrl.u32 %v543, 16
  %v875 = vrot.slane %v873, 7
  %v876 = vshll.u32 %v543, 16
  %v878 = vor.u32 %v875, %v876
  %v879 = vsel %vm574, %v871, %v878
  %v880 = vrot.slane %v875, 4
  %v882 = vshrl.u32 %v544, 16
  %v884 = vrot.slane %v882, 7
  %v885 = vshll.u32 %v544, 16
  %v887 = vor.u32 %v884, %v885
  %v888 = vrot.slane %v884, 4
  %v890 = vshrl.u32 %v545, 16
  %v892 = vrot.slane %v890, 7
  %v893 = vshll.u32 %v545, 16
  %v895 = vor.u32 %v892, %v893
  %v896 = vsel %vm574, %v888, %v895
  %v897 = vrot.slane %v892, 4
  %v899 = vshrl.u32 %v546, 16
  %v901 = vrot.slane %v899, 7
  %v902 = vshll.u32 %v546, 16
  %v904 = vor.u32 %v901, %v902
  %v905 = vrot.slane %v901, 4
  %v907 = vshrl.u32 %v547, 16
  %v909 = vrot.slane %v907, 7
  %v910 = vshll.u32 %v547, 16
  %v912 = vor.u32 %v909, %v910
  %v913 = vsel %vm574, %v905, %v912
  %v914 = vrot.slane %v909, 4
  %v916 = vshrl.u32 %v548, 16
  %v918 = vrot.slane %v916, 7
  %v919 = vshll.u32 %v548, 16
  %v921 = vor.u32 %v918, %v919
  %v922 = vrot.slane %v918, 4
  %v924 = vshrl.u32 %v549, 16
  %v926 = vrot.slane %v924, 7
  %v927 = vshll.u32 %v549, 16
  %v929 = vor.u32 %v926, %v927
  %v930 = vsel %vm574, %v922, %v929
  %v931 = vrot.slane %v926, 4
  %v933 = vshrl.u32 %v550, 16
  %v935 = vrot.slane %v933, 7
  %v936 = vshll.u32 %v550, 16
  %v938 = vor.u32 %v935, %v936
  %v939 = vrot.slane %v935, 4
  %v941 = vshrl.u32 %v551, 16
  %v943 = vrot.slane %v941, 7
  %v944 = vshll.u32 %v551, 16
  %v946 = vor.u32 %v943, %v944
  %v947 = vsel %vm574, %v939, %v946
  %v948 = vrot.slane %v943, 4
  %v950 = vshrl.u32 %v552, 16
  %v952 = vrot.slane %v950, 7
  %v953 = vshll.u32 %v552, 16
  %v955 = vor.u32 %v952, %v953
  %v956 = vrot.slane %v952, 4
  %v958 = vshrl.u32 %v553, 16
  %v960 = vrot.slane %v958, 7
  %v961 = vshll.u32 %v553, 16
  %v963 = vor.u32 %v960, %v961
  %v964 = vsel %vm574, %v956, %v963
  %v965 = vrot.slane %v960, 4
  %v967 = vshrl.u32 %v554, 16
  %v969 = vrot.slane %v967, 7
  %v970 = vshll.u32 %v554, 16
  %v972 = vor.u32 %v969, %v970
  %v973 = vrot.slane %v969, 4
  %v975 = vshrl.u32 %v555, 16
  %v977 = vrot.slane %v975, 7
  %v978 = vshll.u32 %v555, 16
  %v980 = vor.u32 %v977, %v978
  %v981 = vsel %vm574, %v973, %v980
  %v982 = vrot.slane %v977, 4
  %v984 = vshrl.u32 %v556, 16
  %v986 = vrot.slane %v984, 7
  %v987 = vshll.u32 %v556, 16
  %v989 = vor.u32 %v986, %v987
  %v990 = vrot.slane %v986, 4
  %v992 = vshrl.u32 %v557, 16
  %v994 = vrot.slane %v992, 7
  %v995 = vshll.u32 %v557, 16
  %v997 = vor.u32 %v994, %v995
  %v998 = vsel %vm574, %v990, %v997
  %v999 = vrot.slane %v994, 4
  %v1001 = vshrl.u32 %v558, 16
  %v1003 = vrot.slane %v1001, 7
  %v1004 = vshll.u32 %v558, 16
  %v1006 = vor.u32 %v1003, %v1004
  %v1007 = vrot.slane %v1003, 4
  %v1009 = vshrl.u32 %v559, 16
  %v1011 = vrot.slane %v1009, 7
  %v1012 = vshll.u32 %v559, 16
  %v1014 = vor.u32 %v1011, %v1012
  %v1015 = vsel %vm574, %v1007, %v1014
  %v1016 = vrot.slane %v1011, 4
  %v1018 = vshrl.u32 %v560, 16
  %v1020 = vrot.slane %v1018, 7
  %v1021 = vshll.u32 %v560, 16
  %v1023 = vor.u32 %v1020, %v1021
  %v1024 = vrot.slane %v1020, 4
  %v1026 = vshrl.u32 %v561, 16
  %v1028 = vrot.slane %v1026, 7
  %v1029 = vshll.u32 %v561, 16
  %v1031 = vor.u32 %v1028, %v1029
  %v1032 = vsel %vm574, %v1024, %v1031
  %v1033 = vrot.slane %v1028, 4
  %v1035 = vshrl.u32 %v562, 16
  %v1037 = vrot.slane %v1035, 7
  %v1038 = vshll.u32 %v562, 16
  %v1040 = vor.u32 %v1037, %v1038
  %v1041 = vrot.slane %v1037, 4
  %v1043 = vshrl.u32 %v563, 16
  %v1045 = vrot.slane %v1043, 7
  %v1046 = vshll.u32 %v563, 16
  %v1048 = vor.u32 %v1045, %v1046
  %v1049 = vsel %vm574, %v1041, %v1048
  %v1050 = vrot.slane %v1045, 4
  %v1052 = vshrl.u32 %v564, 16
  %v1054 = vrot.slane %v1052, 7
  %v1055 = vshll.u32 %v564, 16
  %v1057 = vor.u32 %v1054, %v1055
  %v1058 = vrot.slane %v1054, 4
  %v1060 = vshrl.u32 %v565, 16
  %v1062 = vrot.slane %v1060, 7
  %v1063 = vshll.u32 %v565, 16
  %v1065 = vor.u32 %v1062, %v1063
  %v1066 = vsel %vm574, %v1058, %v1065
  %v1067 = vrot.slane %v1062, 4
  %v1069 = vshrl.u32 %v566, 16
  %v1071 = vrot.slane %v1069, 7
  %v1072 = vshll.u32 %v566, 16
  %v1074 = vor.u32 %v1071, %v1072
  %v1075 = vrot.slane %v1071, 4
  %v1077 = vshrl.u32 %v567, 16
  %v1079 = vrot.slane %v1077, 7
  %v1080 = vshll.u32 %v567, 16
  %v1082 = vor.u32 %v1079, %v1080
  %v1083 = vsel %vm574, %v1075, %v1082
  %v1084 = vrot.slane %v1079, 4
  %v1086 = vshrl.u32 %v568, 16
  %v1088 = vrot.slane %v1086, 7
  %v1089 = vshll.u32 %v568, 16
  %v1091 = vor.u32 %v1088, %v1089
  %v1092 = vrot.slane %v1088, 4
  %v1094 = vshrl.u32 %v569, 16
  %v1096 = vrot.slane %v1094, 7
  %v1097 = vshll.u32 %v569, 16
  %v1099 = vor.u32 %v1096, %v1097
  %v1100 = vsel %vm574, %v1092, %v1099
  %v1101 = vrot.slane %v1096, 4
  %v1103 = vshrl.u32 %v570, 16
  %v1105 = vrot.slane %v1103, 7
  %v1106 = vshll.u32 %v570, 16
  %v1108 = vor.u32 %v1105, %v1106
  %v1109 = vrot.slane %v1105, 4
  %v1111 = vshrl.u32 %v571, 16
  %v1113 = vrot.slane %v1111, 7
  %v1114 = vshll.u32 %v571, 16
  %v1116 = vor.u32 %v1113, %v1114
  %v1117 = vsel %vm574, %v1109, %v1116
  %v1118 = vrot.slane %v1113, 4
  %s1215 = scalar_lea.vmem [#allocation2], 12
  %vm1216 = vcmask 257024
  %vm1217 = vsmask.f32 7938
  %vm1218 = vmand %vm1216, %vm1217
  %v1219 = vld [vmem:[%s1215] sm:$0xf]
  %v1220 = vsel %vm1218, %v581, %v1219
  %1221 = vst [vmem:[%s1215] sm:$0xf] %v1220
  %1222 = vst.msk [vmem:[%s1215 + $0x4] sm:$0xf] %vm78, %v590
  %vm1223 = vcmask 253952
  %vm1224 = vmand %vm1223, %vm572
  %v1225 = vld [vmem:[%s1215 + $0x8] sm:$0x1]
  %v1226 = vsel %vm1224, %v591, %v1225
  %1227 = vst [vmem:[%s1215 + $0x8] sm:$0x1] %v1226
  %v1228 = vld [vmem:[%s1215 + $0xc] sm:$0xf]
  %v1229 = vsel %vm1218, %v598, %v1228
  %1230 = vst [vmem:[%s1215 + $0xc] sm:$0xf] %v1229
  %1231 = vst.msk [vmem:[%s1215 + $0x10] sm:$0xf] %vm78, %v607
  %v1232 = vld [vmem:[%s1215 + $0x14] sm:$0x1]
  %v1233 = vsel %vm1224, %v608, %v1232
  %1234 = vst [vmem:[%s1215 + $0x14] sm:$0x1] %v1233
  %v1235 = vld [vmem:[%s1215 + $0x18] sm:$0xf]
  %v1236 = vsel %vm1218, %v615, %v1235
  %1237 = vst [vmem:[%s1215 + $0x18] sm:$0xf] %v1236
  %1238 = vst.msk [vmem:[%s1215 + $0x1c] sm:$0xf] %vm78, %v624
  %v1239 = vld [vmem:[%s1215 + $0x20] sm:$0x1]
  %v1240 = vsel %vm1224, %v625, %v1239
  %1241 = vst [vmem:[%s1215 + $0x20] sm:$0x1] %v1240
  %v1242 = vld [vmem:[%s1215 + $0x24] sm:$0xf]
  %v1243 = vsel %vm1218, %v632, %v1242
  %1244 = vst [vmem:[%s1215 + $0x24] sm:$0xf] %v1243
  %1245 = vst.msk [vmem:[%s1215 + $0x28] sm:$0xf] %vm78, %v641
  %v1246 = vld [vmem:[%s1215 + $0x2c] sm:$0x1]
  %v1247 = vsel %vm1224, %v642, %v1246
  %1248 = vst [vmem:[%s1215 + $0x2c] sm:$0x1] %v1247
  %v1249 = vld [vmem:[%s1215 + $0x30] sm:$0xf]
  %v1250 = vsel %vm1218, %v649, %v1249
  %1251 = vst [vmem:[%s1215 + $0x30] sm:$0xf] %v1250
  %1252 = vst.msk [vmem:[%s1215 + $0x34] sm:$0xf] %vm78, %v658
  %v1253 = vld [vmem:[%s1215 + $0x38] sm:$0x1]
  %v1254 = vsel %vm1224, %v659, %v1253
  %1255 = vst [vmem:[%s1215 + $0x38] sm:$0x1] %v1254
  %v1256 = vld [vmem:[%s1215 + $0x3c] sm:$0xf]
  %v1257 = vsel %vm1218, %v666, %v1256
  %1258 = vst [vmem:[%s1215 + $0x3c] sm:$0xf] %v1257
  %1259 = vst.msk [vmem:[%s1215 + $0x40] sm:$0xf] %vm78, %v675
  %v1260 = vld [vmem:[%s1215 + $0x44] sm:$0x1]
  %v1261 = vsel %vm1224, %v676, %v1260
  %1262 = vst [vmem:[%s1215 + $0x44] sm:$0x1] %v1261
  %v1263 = vld [vmem:[%s1215 + $0x48] sm:$0xf]
  %v1264 = vsel %vm1218, %v683, %v1263
  %1265 = vst [vmem:[%s1215 + $0x48] sm:$0xf] %v1264
  %1266 = vst.msk [vmem:[%s1215 + $0x4c] sm:$0xf] %vm78, %v692
  %v1267 = vld [vmem:[%s1215 + $0x50] sm:$0x1]
  %v1268 = vsel %vm1224, %v693, %v1267
  %1269 = vst [vmem:[%s1215 + $0x50] sm:$0x1] %v1268
  %v1270 = vld [vmem:[%s1215 + $0x54] sm:$0xf]
  %v1271 = vsel %vm1218, %v700, %v1270
  %1272 = vst [vmem:[%s1215 + $0x54] sm:$0xf] %v1271
  %1273 = vst.msk [vmem:[%s1215 + $0x58] sm:$0xf] %vm78, %v709
  %v1274 = vld [vmem:[%s1215 + $0x5c] sm:$0x1]
  %v1275 = vsel %vm1224, %v710, %v1274
  %1276 = vst [vmem:[%s1215 + $0x5c] sm:$0x1] %v1275
  %v1277 = vld [vmem:[%s1215 + $0x60] sm:$0xf]
  %v1278 = vsel %vm1218, %v717, %v1277
  %1279 = vst [vmem:[%s1215 + $0x60] sm:$0xf] %v1278
  %1280 = vst.msk [vmem:[%s1215 + $0x64] sm:$0xf] %vm78, %v726
  %v1281 = vld [vmem:[%s1215 + $0x68] sm:$0x1]
  %v1282 = vsel %vm1224, %v727, %v1281
  %1283 = vst [vmem:[%s1215 + $0x68] sm:$0x1] %v1282
  %v1284 = vld [vmem:[%s1215 + $0x6c] sm:$0xf]
  %v1285 = vsel %vm1218, %v734, %v1284
  %1286 = vst [vmem:[%s1215 + $0x6c] sm:$0xf] %v1285
  %1287 = vst.msk [vmem:[%s1215 + $0x70] sm:$0xf] %vm78, %v743
  %v1288 = vld [vmem:[%s1215 + $0x74] sm:$0x1]
  %v1289 = vsel %vm1224, %v744, %v1288
  %1290 = vst [vmem:[%s1215 + $0x74] sm:$0x1] %v1289
  %v1291 = vld [vmem:[%s1215 + $0x78] sm:$0xf]
  %v1292 = vsel %vm1218, %v751, %v1291
  %1293 = vst [vmem:[%s1215 + $0x78] sm:$0xf] %v1292
  %1294 = vst.msk [vmem:[%s1215 + $0x7c] sm:$0xf] %vm78, %v760
  %v1295 = vld [vmem:[%s1215 + $0x80] sm:$0x1]
  %v1296 = vsel %vm1224, %v761, %v1295
  %1297 = vst [vmem:[%s1215 + $0x80] sm:$0x1] %v1296
  %v1298 = vld [vmem:[%s1215 + $0x84] sm:$0xf]
  %v1299 = vsel %vm1218, %v768, %v1298
  %1300 = vst [vmem:[%s1215 + $0x84] sm:$0xf] %v1299
  %1301 = vst.msk [vmem:[%s1215 + $0x88] sm:$0xf] %vm78, %v777
  %v1302 = vld [vmem:[%s1215 + $0x8c] sm:$0x1]
  %v1303 = vsel %vm1224, %v778, %v1302
  %1304 = vst [vmem:[%s1215 + $0x8c] sm:$0x1] %v1303
  %v1305 = vld [vmem:[%s1215 + $0x90] sm:$0xf]
  %v1306 = vsel %vm1218, %v785, %v1305
  %1307 = vst [vmem:[%s1215 + $0x90] sm:$0xf] %v1306
  %1308 = vst.msk [vmem:[%s1215 + $0x94] sm:$0xf] %vm78, %v794
  %v1309 = vld [vmem:[%s1215 + $0x98] sm:$0x1]
  %v1310 = vsel %vm1224, %v795, %v1309
  %1311 = vst [vmem:[%s1215 + $0x98] sm:$0x1] %v1310
  %v1312 = vld [vmem:[%s1215 + $0x9c] sm:$0xf]
  %v1313 = vsel %vm1218, %v802, %v1312
  %1314 = vst [vmem:[%s1215 + $0x9c] sm:$0xf] %v1313
  %1315 = vst.msk [vmem:[%s1215 + $0xa0] sm:$0xf] %vm78, %v811
  %v1316 = vld [vmem:[%s1215 + $0xa4] sm:$0x1]
  %v1317 = vsel %vm1224, %v812, %v1316
  %1318 = vst [vmem:[%s1215 + $0xa4] sm:$0x1] %v1317
  %v1319 = vld [vmem:[%s1215 + $0xa8] sm:$0xf]
  %v1320 = vsel %vm1218, %v819, %v1319
  %1321 = vst [vmem:[%s1215 + $0xa8] sm:$0xf] %v1320
  %1322 = vst.msk [vmem:[%s1215 + $0xac] sm:$0xf] %vm78, %v828
  %v1323 = vld [vmem:[%s1215 + $0xb0] sm:$0x1]
  %v1324 = vsel %vm1224, %v829, %v1323
  %1325 = vst [vmem:[%s1215 + $0xb0] sm:$0x1] %v1324
  %v1326 = vld [vmem:[%s1215 + $0xb4] sm:$0xf]
  %v1327 = vsel %vm1218, %v836, %v1326
  %1328 = vst [vmem:[%s1215 + $0xb4] sm:$0xf] %v1327
  %1329 = vst.msk [vmem:[%s1215 + $0xb8] sm:$0xf] %vm78, %v845
  %v1330 = vld [vmem:[%s1215 + $0xbc] sm:$0x1]
  %v1331 = vsel %vm1224, %v846, %v1330
  %1332 = vst [vmem:[%s1215 + $0xbc] sm:$0x1] %v1331
  %v1333 = vld [vmem:[%s1215 + $0xd8] sm:$0xf]
  %v1334 = vsel %vm1218, %v853, %v1333
  %1335 = vst [vmem:[%s1215 + $0xd8] sm:$0xf] %v1334
  %1336 = vst.msk [vmem:[%s1215 + $0xdc] sm:$0xf] %vm78, %v862
  %v1337 = vld [vmem:[%s1215 + $0xe0] sm:$0x1]
  %v1338 = vsel %vm1224, %v863, %v1337
  %1339 = vst [vmem:[%s1215 + $0xe0] sm:$0x1] %v1338
  %v1340 = vld [vmem:[%s1215 + $0xe4] sm:$0xf]
  %v1341 = vsel %vm1218, %v870, %v1340
  %1342 = vst [vmem:[%s1215 + $0xe4] sm:$0xf] %v1341
  %1343 = vst.msk [vmem:[%s1215 + $0xe8] sm:$0xf] %vm78, %v879
  %v1344 = vld [vmem:[%s1215 + $0xec] sm:$0x1]
  %v1345 = vsel %vm1224, %v880, %v1344
  %1346 = vst [vmem:[%s1215 + $0xec] sm:$0x1] %v1345
  %v1347 = vld [vmem:[%s1215 + $0xf0] sm:$0xf]
  %v1348 = vsel %vm1218, %v887, %v1347
  %1349 = vst [vmem:[%s1215 + $0xf0] sm:$0xf] %v1348
  %1350 = vst.msk [vmem:[%s1215 + $0xf4] sm:$0xf] %vm78, %v896
  %v1351 = vld [vmem:[%s1215 + $0xf8] sm:$0x1]
  %v1352 = vsel %vm1224, %v897, %v1351
  %1353 = vst [vmem:[%s1215 + $0xf8] sm:$0x1] %v1352
  %v1354 = vld [vmem:[%s1215 + $0xfc] sm:$0xf]
  %v1355 = vsel %vm1218, %v904, %v1354
  %1356 = vst [vmem:[%s1215 + $0xfc] sm:$0xf] %v1355
  %1357 = vst.msk [vmem:[%s1215 + $0x100] sm:$0xf] %vm78, %v913
  %v1358 = vld [vmem:[%s1215 + $0x104] sm:$0x1]
  %v1359 = vsel %vm1224, %v914, %v1358
  %1360 = vst [vmem:[%s1215 + $0x104] sm:$0x1] %v1359
  %v1361 = vld [vmem:[%s1215 + $0x108] sm:$0xf]
  %v1362 = vsel %vm1218, %v921, %v1361
  %1363 = vst [vmem:[%s1215 + $0x108] sm:$0xf] %v1362
  %1364 = vst.msk [vmem:[%s1215 + $0x10c] sm:$0xf] %vm78, %v930
  %v1365 = vld [vmem:[%s1215 + $0x110] sm:$0x1]
  %v1366 = vsel %vm1224, %v931, %v1365
  %1367 = vst [vmem:[%s1215 + $0x110] sm:$0x1] %v1366
  %v1368 = vld [vmem:[%s1215 + $0x114] sm:$0xf]
  %v1369 = vsel %vm1218, %v938, %v1368
  %1370 = vst [vmem:[%s1215 + $0x114] sm:$0xf] %v1369
  %1371 = vst.msk [vmem:[%s1215 + $0x118] sm:$0xf] %vm78, %v947
  %v1372 = vld [vmem:[%s1215 + $0x11c] sm:$0x1]
  %v1373 = vsel %vm1224, %v948, %v1372
  %1374 = vst [vmem:[%s1215 + $0x11c] sm:$0x1] %v1373
  %v1375 = vld [vmem:[%s1215 + $0x120] sm:$0xf]
  %v1376 = vsel %vm1218, %v955, %v1375
  %1377 = vst [vmem:[%s1215 + $0x120] sm:$0xf] %v1376
  %1378 = vst.msk [vmem:[%s1215 + $0x124] sm:$0xf] %vm78, %v964
  %v1379 = vld [vmem:[%s1215 + $0x128] sm:$0x1]
  %v1380 = vsel %vm1224, %v965, %v1379
  %1381 = vst [vmem:[%s1215 + $0x128] sm:$0x1] %v1380
  %v1382 = vld [vmem:[%s1215 + $0x12c] sm:$0xf]
  %v1383 = vsel %vm1218, %v972, %v1382
  %1384 = vst [vmem:[%s1215 + $0x12c] sm:$0xf] %v1383
  %1385 = vst.msk [vmem:[%s1215 + $0x130] sm:$0xf] %vm78, %v981
  %v1386 = vld [vmem:[%s1215 + $0x134] sm:$0x1]
  %v1387 = vsel %vm1224, %v982, %v1386
  %1388 = vst [vmem:[%s1215 + $0x134] sm:$0x1] %v1387
  %v1389 = vld [vmem:[%s1215 + $0x138] sm:$0xf]
  %v1390 = vsel %vm1218, %v989, %v1389
  %1391 = vst [vmem:[%s1215 + $0x138] sm:$0xf] %v1390
  %1392 = vst.msk [vmem:[%s1215 + $0x13c] sm:$0xf] %vm78, %v998
  %v1393 = vld [vmem:[%s1215 + $0x140] sm:$0x1]
  %v1394 = vsel %vm1224, %v999, %v1393
  %1395 = vst [vmem:[%s1215 + $0x140] sm:$0x1] %v1394
  %v1396 = vld [vmem:[%s1215 + $0x144] sm:$0xf]
  %v1397 = vsel %vm1218, %v1006, %v1396
  %1398 = vst [vmem:[%s1215 + $0x144] sm:$0xf] %v1397
  %1399 = vst.msk [vmem:[%s1215 + $0x148] sm:$0xf] %vm78, %v1015
  %v1400 = vld [vmem:[%s1215 + $0x14c] sm:$0x1]
  %v1401 = vsel %vm1224, %v1016, %v1400
  %1402 = vst [vmem:[%s1215 + $0x14c] sm:$0x1] %v1401
  %v1403 = vld [vmem:[%s1215 + $0x150] sm:$0xf]
  %v1404 = vsel %vm1218, %v1023, %v1403
  %1405 = vst [vmem:[%s1215 + $0x150] sm:$0xf] %v1404
  %1406 = vst.msk [vmem:[%s1215 + $0x154] sm:$0xf] %vm78, %v1032
  %v1407 = vld [vmem:[%s1215 + $0x158] sm:$0x1]
  %v1408 = vsel %vm1224, %v1033, %v1407
  %1409 = vst [vmem:[%s1215 + $0x158] sm:$0x1] %v1408
  %v1410 = vld [vmem:[%s1215 + $0x15c] sm:$0xf]
  %v1411 = vsel %vm1218, %v1040, %v1410
  %1412 = vst [vmem:[%s1215 + $0x15c] sm:$0xf] %v1411
  %1413 = vst.msk [vmem:[%s1215 + $0x160] sm:$0xf] %vm78, %v1049
  %v1414 = vld [vmem:[%s1215 + $0x164] sm:$0x1]
  %v1415 = vsel %vm1224, %v1050, %v1414
  %1416 = vst [vmem:[%s1215 + $0x164] sm:$0x1] %v1415
  %v1417 = vld [vmem:[%s1215 + $0x168] sm:$0xf]
  %v1418 = vsel %vm1218, %v1057, %v1417
  %1419 = vst [vmem:[%s1215 + $0x168] sm:$0xf] %v1418
  %1420 = vst.msk [vmem:[%s1215 + $0x16c] sm:$0xf] %vm78, %v1066
  %v1421 = vld [vmem:[%s1215 + $0x170] sm:$0x1]
  %v1422 = vsel %vm1224, %v1067, %v1421
  %1423 = vst [vmem:[%s1215 + $0x170] sm:$0x1] %v1422
  %v1424 = vld [vmem:[%s1215 + $0x174] sm:$0xf]
  %v1425 = vsel %vm1218, %v1074, %v1424
  %1426 = vst [vmem:[%s1215 + $0x174] sm:$0xf] %v1425
  %1427 = vst.msk [vmem:[%s1215 + $0x178] sm:$0xf] %vm78, %v1083
  %v1428 = vld [vmem:[%s1215 + $0x17c] sm:$0x1]
  %v1429 = vsel %vm1224, %v1084, %v1428
  %1430 = vst [vmem:[%s1215 + $0x17c] sm:$0x1] %v1429
  %v1431 = vld [vmem:[%s1215 + $0x180] sm:$0xf]
  %v1432 = vsel %vm1218, %v1091, %v1431
  %1433 = vst [vmem:[%s1215 + $0x180] sm:$0xf] %v1432
  %1434 = vst.msk [vmem:[%s1215 + $0x184] sm:$0xf] %vm78, %v1100
  %v1435 = vld [vmem:[%s1215 + $0x188] sm:$0x1]
  %v1436 = vsel %vm1224, %v1101, %v1435
  %1437 = vst [vmem:[%s1215 + $0x188] sm:$0x1] %v1436
  %v1438 = vld [vmem:[%s1215 + $0x18c] sm:$0xf]
  %v1439 = vsel %vm1218, %v1108, %v1438
  %1440 = vst [vmem:[%s1215 + $0x18c] sm:$0xf] %v1439
  %1441 = vst.msk [vmem:[%s1215 + $0x190] sm:$0xf] %vm78, %v1117
  %v1442 = vld [vmem:[%s1215 + $0x194] sm:$0x1]
  %v1443 = vsel %vm1224, %v1118, %v1442
  %1444 = vst [vmem:[%s1215 + $0x194] sm:$0x1] %v1443
  %v1445 = vld [vmem:[#allocation2] sm:$0xf]
  %v1446 = vld [vmem:[#allocation2 + $0x4] sm:$0xf]
  %v1447 = vld [vmem:[#allocation2 + $0x8] sm:$0x1]
  %v1448 = vld [vmem:[#allocation2 + $0xc] sm:$0xf]
  %v1449 = vld [vmem:[#allocation2 + $0x10] sm:$0xf]
  %v1450 = vld [vmem:[#allocation2 + $0x14] sm:$0x1]
  %v1451 = vld [vmem:[#allocation2 + $0x18] sm:$0xf]
  %v1452 = vld [vmem:[#allocation2 + $0x1c] sm:$0xf]
  %v1453 = vld [vmem:[#allocation2 + $0x20] sm:$0x1]
  %v1454 = vld [vmem:[#allocation2 + $0x24] sm:$0xf]
  %v1455 = vld [vmem:[#allocation2 + $0x28] sm:$0xf]
  %v1456 = vld [vmem:[#allocation2 + $0x2c] sm:$0x1]
  %v1457 = vld [vmem:[#allocation2 + $0x30] sm:$0xf]
  %v1458 = vld [vmem:[#allocation2 + $0x34] sm:$0xf]
  %v1459 = vld [vmem:[#allocation2 + $0x38] sm:$0x1]
  %v1460 = vld [vmem:[#allocation2 + $0x3c] sm:$0xf]
  %v1461 = vld [vmem:[#allocation2 + $0x40] sm:$0xf]
  %v1462 = vld [vmem:[#allocation2 + $0x44] sm:$0x1]
  %v1463 = vld [vmem:[#allocation2 + $0x48] sm:$0xf]
  %v1464 = vld [vmem:[#allocation2 + $0x4c] sm:$0xf]
  %v1465 = vld [vmem:[#allocation2 + $0x50] sm:$0x1]
  %v1466 = vld [vmem:[#allocation2 + $0x54] sm:$0xf]
  %v1467 = vld [vmem:[#allocation2 + $0x58] sm:$0xf]
  %v1468 = vld [vmem:[#allocation2 + $0x5c] sm:$0x1]
  %v1469 = vld [vmem:[#allocation2 + $0x60] sm:$0xf]
  %v1470 = vld [vmem:[#allocation2 + $0x64] sm:$0xf]
  %v1471 = vld [vmem:[#allocation2 + $0x68] sm:$0x1]
  %v1472 = vld [vmem:[#allocation2 + $0x6c] sm:$0xf]
  %v1473 = vld [vmem:[#allocation2 + $0x70] sm:$0xf]
  %v1474 = vld [vmem:[#allocation2 + $0x74] sm:$0x1]
  %v1475 = vld [vmem:[#allocation2 + $0x78] sm:$0xf]
  %v1476 = vld [vmem:[#allocation2 + $0x7c] sm:$0xf]
  %v1477 = vld [vmem:[#allocation2 + $0x80] sm:$0x1]
  %v1478 = vld [vmem:[#allocation2 + $0x84] sm:$0xf]
  %v1479 = vld [vmem:[#allocation2 + $0x88] sm:$0xf]
  %v1480 = vld [vmem:[#allocation2 + $0x8c] sm:$0x1]
  %v1481 = vld [vmem:[#allocation2 + $0x90] sm:$0xf]
  %v1482 = vld [vmem:[#allocation2 + $0x94] sm:$0xf]
  %v1483 = vld [vmem:[#allocation2 + $0x98] sm:$0x1]
  %v1484 = vld [vmem:[#allocation2 + $0x9c] sm:$0xf]
  %v1485 = vld [vmem:[#allocation2 + $0xa0] sm:$0xf]
  %v1486 = vld [vmem:[#allocation2 + $0xa4] sm:$0x1]
  %v1487 = vld [vmem:[#allocation2 + $0xa8] sm:$0xf]
  %v1488 = vld [vmem:[#allocation2 + $0xac] sm:$0xf]
  %v1489 = vld [vmem:[#allocation2 + $0xb0] sm:$0x1]
  %v1490 = vld [vmem:[#allocation2 + $0xb4] sm:$0xf]
  %v1491 = vld [vmem:[#allocation2 + $0xb8] sm:$0xf]
  %v1492 = vld [vmem:[#allocation2 + $0xbc] sm:$0x1]
  %v1493 = vld [vmem:[#allocation2 + $0xc0] sm:$0xf]
  %v1494 = vld [vmem:[#allocation2 + $0xc4] sm:$0xf]
  %v1495 = vld [vmem:[#allocation2 + $0xc8] sm:$0x1]
  %v1496 = vld [vmem:[#allocation2 + $0xcc] sm:$0xf]
  %v1497 = vld [vmem:[#allocation2 + $0xd0] sm:$0xf]
  %v1498 = vld [vmem:[#allocation2 + $0xd4] sm:$0x1]
  %v1499 = vld [vmem:[#allocation2 + $0xd8] sm:$0xf]
  %v1500 = vld [vmem:[#allocation2 + $0xdc] sm:$0xf]
  %v1501 = vld [vmem:[#allocation2 + $0xe0] sm:$0x1]
  %v1502 = vld [vmem:[#allocation2 + $0xe4] sm:$0xf]
  %v1503 = vld [vmem:[#allocation2 + $0xe8] sm:$0xf]
  %v1504 = vld [vmem:[#allocation2 + $0xec] sm:$0x1]
  %v1505 = vld [vmem:[#allocation2 + $0xf0] sm:$0xf]
  %v1506 = vld [vmem:[#allocation2 + $0xf4] sm:$0xf]
  %v1507 = vld [vmem:[#allocation2 + $0xf8] sm:$0x1]
  %v1508 = vld [vmem:[#allocation2 + $0xfc] sm:$0xf]
  %v1509 = vld [vmem:[#allocation2 + $0x100] sm:$0xf]
  %v1510 = vld [vmem:[#allocation2 + $0x104] sm:$0x1]
  %v1511 = vld [vmem:[#allocation2 + $0x108] sm:$0xf]
  %v1512 = vld [vmem:[#allocation2 + $0x10c] sm:$0xf]
  %v1513 = vld [vmem:[#allocation2 + $0x110] sm:$0x1]
  %v1514 = vld [vmem:[#allocation2 + $0x114] sm:$0xf]
  %v1515 = vld [vmem:[#allocation2 + $0x118] sm:$0xf]
  %v1516 = vld [vmem:[#allocation2 + $0x11c] sm:$0x1]
  %v1517 = vld [vmem:[#allocation2 + $0x120] sm:$0xf]
  %v1518 = vld [vmem:[#allocation2 + $0x124] sm:$0xf]
  %v1519 = vld [vmem:[#allocation2 + $0x128] sm:$0x1]
  %v1520 = vld [vmem:[#allocation2 + $0x12c] sm:$0xf]
  %v1521 = vld [vmem:[#allocation2 + $0x130] sm:$0xf]
  %v1522 = vld [vmem:[#allocation2 + $0x134] sm:$0x1]
  %v1523 = vld [vmem:[#allocation2 + $0x138] sm:$0xf]
  %v1524 = vld [vmem:[#allocation2 + $0x13c] sm:$0xf]
  %v1525 = vld [vmem:[#allocation2 + $0x140] sm:$0x1]
  %v1526 = vld [vmem:[#allocation2 + $0x144] sm:$0xf]
  %v1527 = vld [vmem:[#allocation2 + $0x148] sm:$0xf]
  %v1528 = vld [vmem:[#allocation2 + $0x14c] sm:$0x1]
  %v1529 = vld [vmem:[#allocation2 + $0x150] sm:$0xf]
  %v1530 = vld [vmem:[#allocation2 + $0x154] sm:$0xf]
  %v1531 = vld [vmem:[#allocation2 + $0x158] sm:$0x1]
  %v1532 = vld [vmem:[#allocation2 + $0x15c] sm:$0xf]
  %v1533 = vld [vmem:[#allocation2 + $0x160] sm:$0xf]
  %v1534 = vld [vmem:[#allocation2 + $0x164] sm:$0x1]
  %v1535 = vld [vmem:[#allocation2 + $0x168] sm:$0xf]
  %v1536 = vld [vmem:[#allocation2 + $0x16c] sm:$0xf]
  %v1537 = vld [vmem:[#allocation2 + $0x170] sm:$0x1]
  %v1538 = vld [vmem:[#allocation2 + $0x174] sm:$0xf]
  %v1539 = vld [vmem:[#allocation2 + $0x178] sm:$0xf]
  %v1540 = vld [vmem:[#allocation2 + $0x17c] sm:$0x1]
  %v1541 = vld [vmem:[#allocation2 + $0x180] sm:$0xf]
  %v1542 = vld [vmem:[#allocation2 + $0x184] sm:$0xf]
  %v1543 = vld [vmem:[#allocation2 + $0x188] sm:$0x1]
  %v1544 = vld [vmem:[#allocation2 + $0x18c] sm:$0xf]
  %v1545 = vld [vmem:[#allocation2 + $0x190] sm:$0xf]
  %v1546 = vld [vmem:[#allocation2 + $0x194] sm:$0x1]
  %v1547 = vld [vmem:[#allocation2 + $0x198] sm:$0xf]
  %v1548 = vld [vmem:[#allocation2 + $0x19c] sm:$0xf]
  %v1549 = vld [vmem:[#allocation2 + $0x1a0] sm:$0x1]
  %v1550 = vld [vmem:[#allocation2 + $0x1a4] sm:$0xf]
  %v1551 = vld [vmem:[#allocation2 + $0x1a8] sm:$0xf]
  %v1552 = vld [vmem:[#allocation2 + $0x1ac] sm:$0x1]
  %vm1553 = vsmask.f32 3328
  %vm1554 = vsmask.f32 7440
  %vm1555 = vmor %vm1553, %vm1554
  %v1557 = vshrl.u32 %v1445, 16
  %v1559 = vrot.slane %v1557, 4
  %v1560 = vshll.u32 %v1445, 16
  %v1562 = vrot.slane %v1560, 5
  %v1563 = vor.u32 %v1559, %v1562
  %v1564 = vrot.slane %v1563, 4
  %v1566 = vshll.u32 %v1446, 16
  %v1568 = vrot.slane %v1566, 5
  %v1569 = vsel %vm1555, %v1564, %v1568
  %v1570 = vshrl.u32 %v1446, 16
  %v1572 = vrot.slane %v1570, 4
  %v1573 = vor.u32 %v1572, %v1568
  %v1574 = vrot.slane %v1573, 4
  %v1576 = vshll.u32 %v1447, 16
  %v1578 = vrot.slane %v1576, 5
  %v1579 = vsel %vm1555, %v1574, %v1578
  %v1581 = vshrl.u32 %v1448, 16
  %v1583 = vrot.slane %v1581, 4
  %v1584 = vshll.u32 %v1448, 16
  %v1586 = vrot.slane %v1584, 5
  %v1587 = vor.u32 %v1583, %v1586
  %v1588 = vrot.slane %v1587, 4
  %v1590 = vshll.u32 %v1449, 16
  %v1592 = vrot.slane %v1590, 5
  %v1593 = vsel %vm1555, %v1588, %v1592
  %v1594 = vshrl.u32 %v1449, 16
  %v1596 = vrot.slane %v1594, 4
  %v1597 = vor.u32 %v1596, %v1592
  %v1598 = vrot.slane %v1597, 4
  %v1600 = vshll.u32 %v1450, 16
  %v1602 = vrot.slane %v1600, 5
  %v1603 = vsel %vm1555, %v1598, %v1602
  %v1605 = vshrl.u32 %v1451, 16
  %v1607 = vrot.slane %v1605, 4
  %v1608 = vshll.u32 %v1451, 16
  %v1610 = vrot.slane %v1608, 5
  %v1611 = vor.u32 %v1607, %v1610
  %v1612 = vrot.slane %v1611, 4
  %v1614 = vshll.u32 %v1452, 16
  %v1616 = vrot.slane %v1614, 5
  %v1617 = vsel %vm1555, %v1612, %v1616
  %v1618 = vshrl.u32 %v1452, 16
  %v1620 = vrot.slane %v1618, 4
  %v1621 = vor.u32 %v1620, %v1616
  %v1622 = vrot.slane %v1621, 4
  %v1624 = vshll.u32 %v1453, 16
  %v1626 = vrot.slane %v1624, 5
  %v1627 = vsel %vm1555, %v1622, %v1626
  %v1629 = vshrl.u32 %v1454, 16
  %v1631 = vrot.slane %v1629, 4
  %v1632 = vshll.u32 %v1454, 16
  %v1634 = vrot.slane %v1632, 5
  %v1635 = vor.u32 %v1631, %v1634
  %v1636 = vrot.slane %v1635, 4
  %v1638 = vshll.u32 %v1455, 16
  %v1640 = vrot.slane %v1638, 5
  %v1641 = vsel %vm1555, %v1636, %v1640
  %v1642 = vshrl.u32 %v1455, 16
  %v1644 = vrot.slane %v1642, 4
  %v1645 = vor.u32 %v1644, %v1640
  %v1646 = vrot.slane %v1645, 4
  %v1648 = vshll.u32 %v1456, 16
  %v1650 = vrot.slane %v1648, 5
  %v1651 = vsel %vm1555, %v1646, %v1650
  %v1653 = vshrl.u32 %v1457, 16
  %v1655 = vrot.slane %v1653, 4
  %v1656 = vshll.u32 %v1457, 16
  %v1658 = vrot.slane %v1656, 5
  %v1659 = vor.u32 %v1655, %v1658
  %v1660 = vrot.slane %v1659, 4
  %v1662 = vshll.u32 %v1458, 16
  %v1664 = vrot.slane %v1662, 5
  %v1665 = vsel %vm1555, %v1660, %v1664
  %v1666 = vshrl.u32 %v1458, 16
  %v1668 = vrot.slane %v1666, 4
  %v1669 = vor.u32 %v1668, %v1664
  %v1670 = vrot.slane %v1669, 4
  %v1672 = vshll.u32 %v1459, 16
  %v1674 = vrot.slane %v1672, 5
  %v1675 = vsel %vm1555, %v1670, %v1674
  %v1677 = vshrl.u32 %v1460, 16
  %v1679 = vrot.slane %v1677, 4
  %v1680 = vshll.u32 %v1460, 16
  %v1682 = vrot.slane %v1680, 5
  %v1683 = vor.u32 %v1679, %v1682
  %v1684 = vrot.slane %v1683, 4
  %v1686 = vshll.u32 %v1461, 16
  %v1688 = vrot.slane %v1686, 5
  %v1689 = vsel %vm1555, %v1684, %v1688
  %v1690 = vshrl.u32 %v1461, 16
  %v1692 = vrot.slane %v1690, 4
  %v1693 = vor.u32 %v1692, %v1688
  %v1694 = vrot.slane %v1693, 4
  %v1696 = vshll.u32 %v1462, 16
  %v1698 = vrot.slane %v1696, 5
  %v1699 = vsel %vm1555, %v1694, %v1698
  %v1701 = vshrl.u32 %v1463, 16
  %v1703 = vrot.slane %v1701, 4
  %v1704 = vshll.u32 %v1463, 16
  %v1706 = vrot.slane %v1704, 5
  %v1707 = vor.u32 %v1703, %v1706
  %v1708 = vrot.slane %v1707, 4
  %v1710 = vshll.u32 %v1464, 16
  %v1712 = vrot.slane %v1710, 5
  %v1713 = vsel %vm1555, %v1708, %v1712
  %v1714 = vshrl.u32 %v1464, 16
  %v1716 = vrot.slane %v1714, 4
  %v1717 = vor.u32 %v1716, %v1712
  %v1718 = vrot.slane %v1717, 4
  %v1720 = vshll.u32 %v1465, 16
  %v1722 = vrot.slane %v1720, 5
  %v1723 = vsel %vm1555, %v1718, %v1722
  %v1725 = vshrl.u32 %v1466, 16
  %v1727 = vrot.slane %v1725, 4
  %v1728 = vshll.u32 %v1466, 16
  %v1730 = vrot.slane %v1728, 5
  %v1731 = vor.u32 %v1727, %v1730
  %v1732 = vrot.slane %v1731, 4
  %v1734 = vshll.u32 %v1467, 16
  %v1736 = vrot.slane %v1734, 5
  %v1737 = vsel %vm1555, %v1732, %v1736
  %v1738 = vshrl.u32 %v1467, 16
  %v1740 = vrot.slane %v1738, 4
  %v1741 = vor.u32 %v1740, %v1736
  %v1742 = vrot.slane %v1741, 4
  %v1744 = vshll.u32 %v1468, 16
  %v1746 = vrot.slane %v1744, 5
  %v1747 = vsel %vm1555, %v1742, %v1746
  %v1749 = vshrl.u32 %v1469, 16
  %v1751 = vrot.slane %v1749, 4
  %v1752 = vshll.u32 %v1469, 16
  %v1754 = vrot.slane %v1752, 5
  %v1755 = vor.u32 %v1751, %v1754
  %v1756 = vrot.slane %v1755, 4
  %v1758 = vshll.u32 %v1470, 16
  %v1760 = vrot.slane %v1758, 5
  %v1761 = vsel %vm1555, %v1756, %v1760
  %v1762 = vshrl.u32 %v1470, 16
  %v1764 = vrot.slane %v1762, 4
  %v1765 = vor.u32 %v1764, %v1760
  %v1766 = vrot.slane %v1765, 4
  %v1768 = vshll.u32 %v1471, 16
  %v1770 = vrot.slane %v1768, 5
  %v1771 = vsel %vm1555, %v1766, %v1770
  %v1773 = vshrl.u32 %v1472, 16
  %v1775 = vrot.slane %v1773, 4
  %v1776 = vshll.u32 %v1472, 16
  %v1778 = vrot.slane %v1776, 5
  %v1779 = vor.u32 %v1775, %v1778
  %v1780 = vrot.slane %v1779, 4
  %v1782 = vshll.u32 %v1473, 16
  %v1784 = vrot.slane %v1782, 5
  %v1785 = vsel %vm1555, %v1780, %v1784
  %v1786 = vshrl.u32 %v1473, 16
  %v1788 = vrot.slane %v1786, 4
  %v1789 = vor.u32 %v1788, %v1784
  %v1790 = vrot.slane %v1789, 4
  %v1792 = vshll.u32 %v1474, 16
  %v1794 = vrot.slane %v1792, 5
  %v1795 = vsel %vm1555, %v1790, %v1794
  %v1797 = vshrl.u32 %v1475, 16
  %v1799 = vrot.slane %v1797, 4
  %v1800 = vshll.u32 %v1475, 16
  %v1802 = vrot.slane %v1800, 5
  %v1803 = vor.u32 %v1799, %v1802
  %v1804 = vrot.slane %v1803, 4
  %v1806 = vshll.u32 %v1476, 16
  %v1808 = vrot.slane %v1806, 5
  %v1809 = vsel %vm1555, %v1804, %v1808
  %v1810 = vshrl.u32 %v1476, 16
  %v1812 = vrot.slane %v1810, 4
  %v1813 = vor.u32 %v1812, %v1808
  %v1814 = vrot.slane %v1813, 4
  %v1816 = vshll.u32 %v1477, 16
  %v1818 = vrot.slane %v1816, 5
  %v1819 = vsel %vm1555, %v1814, %v1818
  %v1821 = vshrl.u32 %v1478, 16
  %v1823 = vrot.slane %v1821, 4
  %v1824 = vshll.u32 %v1478, 16
  %v1826 = vrot.slane %v1824, 5
  %v1827 = vor.u32 %v1823, %v1826
  %v1828 = vrot.slane %v1827, 4
  %v1830 = vshll.u32 %v1479, 16
  %v1832 = vrot.slane %v1830, 5
  %v1833 = vsel %vm1555, %v1828, %v1832
  %v1834 = vshrl.u32 %v1479, 16
  %v1836 = vrot.slane %v1834, 4
  %v1837 = vor.u32 %v1836, %v1832
  %v1838 = vrot.slane %v1837, 4
  %v1840 = vshll.u32 %v1480, 16
  %v1842 = vrot.slane %v1840, 5
  %v1843 = vsel %vm1555, %v1838, %v1842
  %v1845 = vshrl.u32 %v1481, 16
  %v1847 = vrot.slane %v1845, 4
  %v1848 = vshll.u32 %v1481, 16
  %v1850 = vrot.slane %v1848, 5
  %v1851 = vor.u32 %v1847, %v1850
  %v1852 = vrot.slane %v1851, 4
  %v1854 = vshll.u32 %v1482, 16
  %v1856 = vrot.slane %v1854, 5
  %v1857 = vsel %vm1555, %v1852, %v1856
  %v1858 = vshrl.u32 %v1482, 16
  %v1860 = vrot.slane %v1858, 4
  %v1861 = vor.u32 %v1860, %v1856
  %v1862 = vrot.slane %v1861, 4
  %v1864 = vshll.u32 %v1483, 16
  %v1866 = vrot.slane %v1864, 5
  %v1867 = vsel %vm1555, %v1862, %v1866
  %v1869 = vshrl.u32 %v1484, 16
  %v1871 = vrot.slane %v1869, 4
  %v1872 = vshll.u32 %v1484, 16
  %v1874 = vrot.slane %v1872, 5
  %v1875 = vor.u32 %v1871, %v1874
  %v1876 = vrot.slane %v1875, 4
  %v1878 = vshll.u32 %v1485, 16
  %v1880 = vrot.slane %v1878, 5
  %v1881 = vsel %vm1555, %v1876, %v1880
  %v1882 = vshrl.u32 %v1485, 16
  %v1884 = vrot.slane %v1882, 4
  %v1885 = vor.u32 %v1884, %v1880
  %v1886 = vrot.slane %v1885, 4
  %v1888 = vshll.u32 %v1486, 16
  %v1890 = vrot.slane %v1888, 5
  %v1891 = vsel %vm1555, %v1886, %v1890
  %v1893 = vshrl.u32 %v1487, 16
  %v1895 = vrot.slane %v1893, 4
  %v1896 = vshll.u32 %v1487, 16
  %v1898 = vrot.slane %v1896, 5
  %v1899 = vor.u32 %v1895, %v1898
  %v1900 = vrot.slane %v1899, 4
  %v1902 = vshll.u32 %v1488, 16
  %v1904 = vrot.slane %v1902, 5
  %v1905 = vsel %vm1555, %v1900, %v1904
  %v1906 = vshrl.u32 %v1488, 16
  %v1908 = vrot.slane %v1906, 4
  %v1909 = vor.u32 %v1908, %v1904
  %v1910 = vrot.slane %v1909, 4
  %v1912 = vshll.u32 %v1489, 16
  %v1914 = vrot.slane %v1912, 5
  %v1915 = vsel %vm1555, %v1910, %v1914
  %v1917 = vshrl.u32 %v1490, 16
  %v1919 = vrot.slane %v1917, 4
  %v1920 = vshll.u32 %v1490, 16
  %v1922 = vrot.slane %v1920, 5
  %v1923 = vor.u32 %v1919, %v1922
  %v1924 = vrot.slane %v1923, 4
  %v1926 = vshll.u32 %v1491, 16
  %v1928 = vrot.slane %v1926, 5
  %v1929 = vsel %vm1555, %v1924, %v1928
  %v1930 = vshrl.u32 %v1491, 16
  %v1932 = vrot.slane %v1930, 4
  %v1933 = vor.u32 %v1932, %v1928
  %v1934 = vrot.slane %v1933, 4
  %v1936 = vshll.u32 %v1492, 16
  %v1938 = vrot.slane %v1936, 5
  %v1939 = vsel %vm1555, %v1934, %v1938
  %v1941 = vshrl.u32 %v1499, 16
  %v1943 = vrot.slane %v1941, 4
  %v1944 = vshll.u32 %v1499, 16
  %v1946 = vrot.slane %v1944, 5
  %v1947 = vor.u32 %v1943, %v1946
  %v1948 = vrot.slane %v1947, 4
  %v1950 = vshll.u32 %v1500, 16
  %v1952 = vrot.slane %v1950, 5
  %v1953 = vsel %vm1555, %v1948, %v1952
  %v1954 = vshrl.u32 %v1500, 16
  %v1956 = vrot.slane %v1954, 4
  %v1957 = vor.u32 %v1956, %v1952
  %v1958 = vrot.slane %v1957, 4
  %v1960 = vshll.u32 %v1501, 16
  %v1962 = vrot.slane %v1960, 5
  %v1963 = vsel %vm1555, %v1958, %v1962
  %v1965 = vshrl.u32 %v1502, 16
  %v1967 = vrot.slane %v1965, 4
  %v1968 = vshll.u32 %v1502, 16
  %v1970 = vrot.slane %v1968, 5
  %v1971 = vor.u32 %v1967, %v1970
  %v1972 = vrot.slane %v1971, 4
  %v1974 = vshll.u32 %v1503, 16
  %v1976 = vrot.slane %v1974, 5
  %v1977 = vsel %vm1555, %v1972, %v1976
  %v1978 = vshrl.u32 %v1503, 16
  %v1980 = vrot.slane %v1978, 4
  %v1981 = vor.u32 %v1980, %v1976
  %v1982 = vrot.slane %v1981, 4
  %v1984 = vshll.u32 %v1504, 16
  %v1986 = vrot.slane %v1984, 5
  %v1987 = vsel %vm1555, %v1982, %v1986
  %v1989 = vshrl.u32 %v1505, 16
  %v1991 = vrot.slane %v1989, 4
  %v1992 = vshll.u32 %v1505, 16
  %v1994 = vrot.slane %v1992, 5
  %v1995 = vor.u32 %v1991, %v1994
  %v1996 = vrot.slane %v1995, 4
  %v1998 = vshll.u32 %v1506, 16
  %v2000 = vrot.slane %v1998, 5
  %v2001 = vsel %vm1555, %v1996, %v2000
  %v2002 = vshrl.u32 %v1506, 16
  %v2004 = vrot.slane %v2002, 4
  %v2005 = vor.u32 %v2004, %v2000
  %v2006 = vrot.slane %v2005, 4
  %v2008 = vshll.u32 %v1507, 16
  %v2010 = vrot.slane %v2008, 5
  %v2011 = vsel %vm1555, %v2006, %v2010
  %v2013 = vshrl.u32 %v1508, 16
  %v2015 = vrot.slane %v2013, 4
  %v2016 = vshll.u32 %v1508, 16
  %v2018 = vrot.slane %v2016, 5
  %v2019 = vor.u32 %v2015, %v2018
  %v2020 = vrot.slane %v2019, 4
  %v2022 = vshll.u32 %v1509, 16
  %v2024 = vrot.slane %v2022, 5
  %v2025 = vsel %vm1555, %v2020, %v2024
  %v2026 = vshrl.u32 %v1509, 16
  %v2028 = vrot.slane %v2026, 4
  %v2029 = vor.u32 %v2028, %v2024
  %v2030 = vrot.slane %v2029, 4
  %v2032 = vshll.u32 %v1510, 16
  %v2034 = vrot.slane %v2032, 5
  %v2035 = vsel %vm1555, %v2030, %v2034
  %v2037 = vshrl.u32 %v1511, 16
  %v2039 = vrot.slane %v2037, 4
  %v2040 = vshll.u32 %v1511, 16
  %v2042 = vrot.slane %v2040, 5
  %v2043 = vor.u32 %v2039, %v2042
  %v2044 = vrot.slane %v2043, 4
  %v2046 = vshll.u32 %v1512, 16
  %v2048 = vrot.slane %v2046, 5
  %v2049 = vsel %vm1555, %v2044, %v2048
  %v2050 = vshrl.u32 %v1512, 16
  %v2052 = vrot.slane %v2050, 4
  %v2053 = vor.u32 %v2052, %v2048
  %v2054 = vrot.slane %v2053, 4
  %v2056 = vshll.u32 %v1513, 16
  %v2058 = vrot.slane %v2056, 5
  %v2059 = vsel %vm1555, %v2054, %v2058
  %v2061 = vshrl.u32 %v1514, 16
  %v2063 = vrot.slane %v2061, 4
  %v2064 = vshll.u32 %v1514, 16
  %v2066 = vrot.slane %v2064, 5
  %v2067 = vor.u32 %v2063, %v2066
  %v2068 = vrot.slane %v2067, 4
  %v2070 = vshll.u32 %v1515, 16
  %v2072 = vrot.slane %v2070, 5
  %v2073 = vsel %vm1555, %v2068, %v2072
  %v2074 = vshrl.u32 %v1515, 16
  %v2076 = vrot.slane %v2074, 4
  %v2077 = vor.u32 %v2076, %v2072
  %v2078 = vrot.slane %v2077, 4
  %v2080 = vshll.u32 %v1516, 16
  %v2082 = vrot.slane %v2080, 5
  %v2083 = vsel %vm1555, %v2078, %v2082
  %v2085 = vshrl.u32 %v1517, 16
  %v2087 = vrot.slane %v2085, 4
  %v2088 = vshll.u32 %v1517, 16
  %v2090 = vrot.slane %v2088, 5
  %v2091 = vor.u32 %v2087, %v2090
  %v2092 = vrot.slane %v2091, 4
  %v2094 = vshll.u32 %v1518, 16
  %v2096 = vrot.slane %v2094, 5
  %v2097 = vsel %vm1555, %v2092, %v2096
  %v2098 = vshrl.u32 %v1518, 16
  %v2100 = vrot.slane %v2098, 4
  %v2101 = vor.u32 %v2100, %v2096
  %v2102 = vrot.slane %v2101, 4
  %v2104 = vshll.u32 %v1519, 16
  %v2106 = vrot.slane %v2104, 5
  %v2107 = vsel %vm1555, %v2102, %v2106
  %v2109 = vshrl.u32 %v1520, 16
  %v2111 = vrot.slane %v2109, 4
  %v2112 = vshll.u32 %v1520, 16
  %v2114 = vrot.slane %v2112, 5
  %v2115 = vor.u32 %v2111, %v2114
  %v2116 = vrot.slane %v2115, 4
  %v2118 = vshll.u32 %v1521, 16
  %v2120 = vrot.slane %v2118, 5
  %v2121 = vsel %vm1555, %v2116, %v2120
  %v2122 = vshrl.u32 %v1521, 16
  %v2124 = vrot.slane %v2122, 4
  %v2125 = vor.u32 %v2124, %v2120
  %v2126 = vrot.slane %v2125, 4
  %v2128 = vshll.u32 %v1522, 16
  %v2130 = vrot.slane %v2128, 5
  %v2131 = vsel %vm1555, %v2126, %v2130
  %v2133 = vshrl.u32 %v1523, 16
  %v2135 = vrot.slane %v2133, 4
  %v2136 = vshll.u32 %v1523, 16
  %v2138 = vrot.slane %v2136, 5
  %v2139 = vor.u32 %v2135, %v2138
  %v2140 = vrot.slane %v2139, 4
  %v2142 = vshll.u32 %v1524, 16
  %v2144 = vrot.slane %v2142, 5
  %v2145 = vsel %vm1555, %v2140, %v2144
  %v2146 = vshrl.u32 %v1524, 16
  %v2148 = vrot.slane %v2146, 4
  %v2149 = vor.u32 %v2148, %v2144
  %v2150 = vrot.slane %v2149, 4
  %v2152 = vshll.u32 %v1525, 16
  %v2154 = vrot.slane %v2152, 5
  %v2155 = vsel %vm1555, %v2150, %v2154
  %v2157 = vshrl.u32 %v1526, 16
  %v2159 = vrot.slane %v2157, 4
  %v2160 = vshll.u32 %v1526, 16
  %v2162 = vrot.slane %v2160, 5
  %v2163 = vor.u32 %v2159, %v2162
  %v2164 = vrot.slane %v2163, 4
  %v2166 = vshll.u32 %v1527, 16
  %v2168 = vrot.slane %v2166, 5
  %v2169 = vsel %vm1555, %v2164, %v2168
  %v2170 = vshrl.u32 %v1527, 16
  %v2172 = vrot.slane %v2170, 4
  %v2173 = vor.u32 %v2172, %v2168
  %v2174 = vrot.slane %v2173, 4
  %v2176 = vshll.u32 %v1528, 16
  %v2178 = vrot.slane %v2176, 5
  %v2179 = vsel %vm1555, %v2174, %v2178
  %v2181 = vshrl.u32 %v1529, 16
  %v2183 = vrot.slane %v2181, 4
  %v2184 = vshll.u32 %v1529, 16
  %v2186 = vrot.slane %v2184, 5
  %v2187 = vor.u32 %v2183, %v2186
  %v2188 = vrot.slane %v2187, 4
  %v2190 = vshll.u32 %v1530, 16
  %v2192 = vrot.slane %v2190, 5
  %v2193 = vsel %vm1555, %v2188, %v2192
  %v2194 = vshrl.u32 %v1530, 16
  %v2196 = vrot.slane %v2194, 4
  %v2197 = vor.u32 %v2196, %v2192
  %v2198 = vrot.slane %v2197, 4
  %v2200 = vshll.u32 %v1531, 16
  %v2202 = vrot.slane %v2200, 5
  %v2203 = vsel %vm1555, %v2198, %v2202
  %v2205 = vshrl.u32 %v1532, 16
  %v2207 = vrot.slane %v2205, 4
  %v2208 = vshll.u32 %v1532, 16
  %v2210 = vrot.slane %v2208, 5
  %v2211 = vor.u32 %v2207, %v2210
  %v2212 = vrot.slane %v2211, 4
  %v2214 = vshll.u32 %v1533, 16
  %v2216 = vrot.slane %v2214, 5
  %v2217 = vsel %vm1555, %v2212, %v2216
  %v2218 = vshrl.u32 %v1533, 16
  %v2220 = vrot.slane %v2218, 4
  %v2221 = vor.u32 %v2220, %v2216
  %v2222 = vrot.slane %v2221, 4
  %v2224 = vshll.u32 %v1534, 16
  %v2226 = vrot.slane %v2224, 5
  %v2227 = vsel %vm1555, %v2222, %v2226
  %v2229 = vshrl.u32 %v1535, 16
  %v2231 = vrot.slane %v2229, 4
  %v2232 = vshll.u32 %v1535, 16
  %v2234 = vrot.slane %v2232, 5
  %v2235 = vor.u32 %v2231, %v2234
  %v2236 = vrot.slane %v2235, 4
  %v2238 = vshll.u32 %v1536, 16
  %v2240 = vrot.slane %v2238, 5
  %v2241 = vsel %vm1555, %v2236, %v2240
  %v2242 = vshrl.u32 %v1536, 16
  %v2244 = vrot.slane %v2242, 4
  %v2245 = vor.u32 %v2244, %v2240
  %v2246 = vrot.slane %v2245, 4
  %v2248 = vshll.u32 %v1537, 16
  %v2250 = vrot.slane %v2248, 5
  %v2251 = vsel %vm1555, %v2246, %v2250
  %v2253 = vshrl.u32 %v1538, 16
  %v2255 = vrot.slane %v2253, 4
  %v2256 = vshll.u32 %v1538, 16
  %v2258 = vrot.slane %v2256, 5
  %v2259 = vor.u32 %v2255, %v2258
  %v2260 = vrot.slane %v2259, 4
  %v2262 = vshll.u32 %v1539, 16
  %v2264 = vrot.slane %v2262, 5
  %v2265 = vsel %vm1555, %v2260, %v2264
  %v2266 = vshrl.u32 %v1539, 16
  %v2268 = vrot.slane %v2266, 4
  %v2269 = vor.u32 %v2268, %v2264
  %v2270 = vrot.slane %v2269, 4
  %v2272 = vshll.u32 %v1540, 16
  %v2274 = vrot.slane %v2272, 5
  %v2275 = vsel %vm1555, %v2270, %v2274
  %v2277 = vshrl.u32 %v1541, 16
  %v2279 = vrot.slane %v2277, 4
  %v2280 = vshll.u32 %v1541, 16
  %v2282 = vrot.slane %v2280, 5
  %v2283 = vor.u32 %v2279, %v2282
  %v2284 = vrot.slane %v2283, 4
  %v2286 = vshll.u32 %v1542, 16
  %v2288 = vrot.slane %v2286, 5
  %v2289 = vsel %vm1555, %v2284, %v2288
  %v2290 = vshrl.u32 %v1542, 16
  %v2292 = vrot.slane %v2290, 4
  %v2293 = vor.u32 %v2292, %v2288
  %v2294 = vrot.slane %v2293, 4
  %v2296 = vshll.u32 %v1543, 16
  %v2298 = vrot.slane %v2296, 5
  %v2299 = vsel %vm1555, %v2294, %v2298
  %v2301 = vshrl.u32 %v1544, 16
  %v2303 = vrot.slane %v2301, 4
  %v2304 = vshll.u32 %v1544, 16
  %v2306 = vrot.slane %v2304, 5
  %v2307 = vor.u32 %v2303, %v2306
  %v2308 = vrot.slane %v2307, 4
  %v2310 = vshll.u32 %v1545, 16
  %v2312 = vrot.slane %v2310, 5
  %v2313 = vsel %vm1555, %v2308, %v2312
  %v2314 = vshrl.u32 %v1545, 16
  %v2316 = vrot.slane %v2314, 4
  %v2317 = vor.u32 %v2316, %v2312
  %v2318 = vrot.slane %v2317, 4
  %v2320 = vshll.u32 %v1546, 16
  %v2322 = vrot.slane %v2320, 5
  %v2323 = vsel %vm1555, %v2318, %v2322
  %vm2420 = vcmask 1042432
  %vm2421 = vcmask 1046532
  %vm2422 = vmor %vm2420, %vm2421
  %v2423 = vrot.slane %v1445, 5
  %v2424 = vrot.slane %v2423, 4
  %v2425 = vrot.slane %v1446, 5
  %v2426 = vsel %vm2422, %v2424, %v2425
  %v2427 = vrot.slane %v2425, 4
  %v2428 = vrot.slane %v1447, 5
  %v2429 = vsel %vm2422, %v2427, %v2428
  %v2430 = vrot.slane %v1448, 5
  %v2431 = vrot.slane %v2430, 4
  %v2432 = vrot.slane %v1449, 5
  %v2433 = vsel %vm2422, %v2431, %v2432
  %v2434 = vrot.slane %v2432, 4
  %v2435 = vrot.slane %v1450, 5
  %v2436 = vsel %vm2422, %v2434, %v2435
  %v2437 = vrot.slane %v1451, 5
  %v2438 = vrot.slane %v2437, 4
  %v2439 = vrot.slane %v1452, 5
  %v2440 = vsel %vm2422, %v2438, %v2439
  %v2441 = vrot.slane %v2439, 4
  %v2442 = vrot.slane %v1453, 5
  %v2443 = vsel %vm2422, %v2441, %v2442
  %v2444 = vrot.slane %v1454, 5
  %v2445 = vrot.slane %v2444, 4
  %v2446 = vrot.slane %v1455, 5
  %v2447 = vsel %vm2422, %v2445, %v2446
  %v2448 = vrot.slane %v2446, 4
  %v2449 = vrot.slane %v1456, 5
  %v2450 = vsel %vm2422, %v2448, %v2449
  %v2451 = vrot.slane %v1457, 5
  %v2452 = vrot.slane %v2451, 4
  %v2453 = vrot.slane %v1458, 5
  %v2454 = vsel %vm2422, %v2452, %v2453
  %v2455 = vrot.slane %v2453, 4
  %v2456 = vrot.slane %v1459, 5
  %v2457 = vsel %vm2422, %v2455, %v2456
  %v2458 = vrot.slane %v1460, 5
  %v2459 = vrot.slane %v2458, 4
  %v2460 = vrot.slane %v1461, 5
  %v2461 = vsel %vm2422, %v2459, %v2460
  %v2462 = vrot.slane %v2460, 4
  %v2463 = vrot.slane %v1462, 5
  %v2464 = vsel %vm2422, %v2462, %v2463
  %v2465 = vrot.slane %v1463, 5
  %v2466 = vrot.slane %v2465, 4
  %v2467 = vrot.slane %v1464, 5
  %v2468 = vsel %vm2422, %v2466, %v2467
  %v2469 = vrot.slane %v2467, 4
  %v2470 = vrot.slane %v1465, 5
  %v2471 = vsel %vm2422, %v2469, %v2470
  %v2472 = vrot.slane %v1466, 5
  %v2473 = vrot.slane %v2472, 4
  %v2474 = vrot.slane %v1467, 5
  %v2475 = vsel %vm2422, %v2473, %v2474
  %v2476 = vrot.slane %v2474, 4
  %v2477 = vrot.slane %v1468, 5
  %v2478 = vsel %vm2422, %v2476, %v2477
  %v2479 = vrot.slane %v1469, 5
  %v2480 = vrot.slane %v2479, 4
  %v2481 = vrot.slane %v1470, 5
  %v2482 = vsel %vm2422, %v2480, %v2481
  %v2483 = vrot.slane %v2481, 4
  %v2484 = vrot.slane %v1471, 5
  %v2485 = vsel %vm2422, %v2483, %v2484
  %v2486 = vrot.slane %v1472, 5
  %v2487 = vrot.slane %v2486, 4
  %v2488 = vrot.slane %v1473, 5
  %v2489 = vsel %vm2422, %v2487, %v2488
  %v2490 = vrot.slane %v2488, 4
  %v2491 = vrot.slane %v1474, 5
  %v2492 = vsel %vm2422, %v2490, %v2491
  %v2493 = vrot.slane %v1475, 5
  %v2494 = vrot.slane %v2493, 4
  %v2495 = vrot.slane %v1476, 5
  %v2496 = vsel %vm2422, %v2494, %v2495
  %v2497 = vrot.slane %v2495, 4
  %v2498 = vrot.slane %v1477, 5
  %v2499 = vsel %vm2422, %v2497, %v2498
  %v2500 = vrot.slane %v1478, 5
  %v2501 = vrot.slane %v2500, 4
  %v2502 = vrot.slane %v1479, 5
  %v2503 = vsel %vm2422, %v2501, %v2502
  %v2504 = vrot.slane %v2502, 4
  %v2505 = vrot.slane %v1480, 5
  %v2506 = vsel %vm2422, %v2504, %v2505
  %v2507 = vrot.slane %v1481, 5
  %v2508 = vrot.slane %v2507, 4
  %v2509 = vrot.slane %v1482, 5
  %v2510 = vsel %vm2422, %v2508, %v2509
  %v2511 = vrot.slane %v2509, 4
  %v2512 = vrot.slane %v1483, 5
  %v2513 = vsel %vm2422, %v2511, %v2512
  %v2514 = vrot.slane %v1484, 5
  %v2515 = vrot.slane %v2514, 4
  %v2516 = vrot.slane %v1485, 5
  %v2517 = vsel %vm2422, %v2515, %v2516
  %v2518 = vrot.slane %v2516, 4
  %v2519 = vrot.slane %v1486, 5
  %v2520 = vsel %vm2422, %v2518, %v2519
  %v2521 = vrot.slane %v1487, 5
  %v2522 = vrot.slane %v2521, 4
  %v2523 = vrot.slane %v1488, 5
  %v2524 = vsel %vm2422, %v2522, %v2523
  %v2525 = vrot.slane %v2523, 4
  %v2526 = vrot.slane %v1489, 5
  %v2527 = vsel %vm2422, %v2525, %v2526
  %v2528 = vrot.slane %v1490, 5
  %v2529 = vrot.slane %v2528, 4
  %v2530 = vrot.slane %v1491, 5
  %v2531 = vsel %vm2422, %v2529, %v2530
  %v2532 = vrot.slane %v2530, 4
  %v2533 = vrot.slane %v1492, 5
  %v2534 = vsel %vm2422, %v2532, %v2533
  %v2535 = vrot.slane %v1499, 5
  %v2536 = vrot.slane %v2535, 4
  %v2537 = vrot.slane %v1500, 5
  %v2538 = vsel %vm2422, %v2536, %v2537
  %v2539 = vrot.slane %v2537, 4
  %v2540 = vrot.slane %v1501, 5
  %v2541 = vsel %vm2422, %v2539, %v2540
  %v2542 = vrot.slane %v1502, 5
  %v2543 = vrot.slane %v2542, 4
  %v2544 = vrot.slane %v1503, 5
  %v2545 = vsel %vm2422, %v2543, %v2544
  %v2546 = vrot.slane %v2544, 4
  %v2547 = vrot.slane %v1504, 5
  %v2548 = vsel %vm2422, %v2546, %v2547
  %v2549 = vrot.slane %v1505, 5
  %v2550 = vrot.slane %v2549, 4
  %v2551 = vrot.slane %v1506, 5
  %v2552 = vsel %vm2422, %v2550, %v2551
  %v2553 = vrot.slane %v2551, 4
  %v2554 = vrot.slane %v1507, 5
  %v2555 = vsel %vm2422, %v2553, %v2554
  %v2556 = vrot.slane %v1508, 5
  %v2557 = vrot.slane %v2556, 4
  %v2558 = vrot.slane %v1509, 5
  %v2559 = vsel %vm2422, %v2557, %v2558
  %v2560 = vrot.slane %v2558, 4
  %v2561 = vrot.slane %v1510, 5
  %v2562 = vsel %vm2422, %v2560, %v2561
  %v2563 = vrot.slane %v1511, 5
  %v2564 = vrot.slane %v2563, 4
  %v2565 = vrot.slane %v1512, 5
  %v2566 = vsel %vm2422, %v2564, %v2565
  %v2567 = vrot.slane %v2565, 4
  %v2568 = vrot.slane %v1513, 5
  %v2569 = vsel %vm2422, %v2567, %v2568
  %v2570 = vrot.slane %v1514, 5
  %v2571 = vrot.slane %v2570, 4
  %v2572 = vrot.slane %v1515, 5
  %v2573 = vsel %vm2422, %v2571, %v2572
  %v2574 = vrot.slane %v2572, 4
  %v2575 = vrot.slane %v1516, 5
  %v2576 = vsel %vm2422, %v2574, %v2575
  %v2577 = vrot.slane %v1517, 5
  %v2578 = vrot.slane %v2577, 4
  %v2579 = vrot.slane %v1518, 5
  %v2580 = vsel %vm2422, %v2578, %v2579
  %v2581 = vrot.slane %v2579, 4
  %v2582 = vrot.slane %v1519, 5
  %v2583 = vsel %vm2422, %v2581, %v2582
  %v2584 = vrot.slane %v1520, 5
  %v2585 = vrot.slane %v2584, 4
  %v2586 = vrot.slane %v1521, 5
  %v2587 = vsel %vm2422, %v2585, %v2586
  %v2588 = vrot.slane %v2586, 4
  %v2589 = vrot.slane %v1522, 5
  %v2590 = vsel %vm2422, %v2588, %v2589
  %v2591 = vrot.slane %v1523, 5
  %v2592 = vrot.slane %v2591, 4
  %v2593 = vrot.slane %v1524, 5
  %v2594 = vsel %vm2422, %v2592, %v2593
  %v2595 = vrot.slane %v2593, 4
  %v2596 = vrot.slane %v1525, 5
  %v2597 = vsel %vm2422, %v2595, %v2596
  %v2598 = vrot.slane %v1526, 5
  %v2599 = vrot.slane %v2598, 4
  %v2600 = vrot.slane %v1527, 5
  %v2601 = vsel %vm2422, %v2599, %v2600
  %v2602 = vrot.slane %v2600, 4
  %v2603 = vrot.slane %v1528, 5
  %v2604 = vsel %vm2422, %v2602, %v2603
  %v2605 = vrot.slane %v1529, 5
  %v2606 = vrot.slane %v2605, 4
  %v2607 = vrot.slane %v1530, 5
  %v2608 = vsel %vm2422, %v2606, %v2607
  %v2609 = vrot.slane %v2607, 4
  %v2610 = vrot.slane %v1531, 5
  %v2611 = vsel %vm2422, %v2609, %v2610
  %v2612 = vrot.slane %v1532, 5
  %v2613 = vrot.slane %v2612, 4
  %v2614 = vrot.slane %v1533, 5
  %v2615 = vsel %vm2422, %v2613, %v2614
  %v2616 = vrot.slane %v2614, 4
  %v2617 = vrot.slane %v1534, 5
  %v2618 = vsel %vm2422, %v2616, %v2617
  %v2619 = vrot.slane %v1535, 5
  %v2620 = vrot.slane %v2619, 4
  %v2621 = vrot.slane %v1536, 5
  %v2622 = vsel %vm2422, %v2620, %v2621
  %v2623 = vrot.slane %v2621, 4
  %v2624 = vrot.slane %v1537, 5
  %v2625 = vsel %vm2422, %v2623, %v2624
  %v2626 = vrot.slane %v1538, 5
  %v2627 = vrot.slane %v2626, 4
  %v2628 = vrot.slane %v1539, 5
  %v2629 = vsel %vm2422, %v2627, %v2628
  %v2630 = vrot.slane %v2628, 4
  %v2631 = vrot.slane %v1540, 5
  %v2632 = vsel %vm2422, %v2630, %v2631
  %v2633 = vrot.slane %v1541, 5
  %v2634 = vrot.slane %v2633, 4
  %v2635 = vrot.slane %v1542, 5
  %v2636 = vsel %vm2422, %v2634, %v2635
  %v2637 = vrot.slane %v2635, 4
  %v2638 = vrot.slane %v1543, 5
  %v2639 = vsel %vm2422, %v2637, %v2638
  %v2640 = vrot.slane %v1544, 5
  %v2641 = vrot.slane %v2640, 4
  %v2642 = vrot.slane %v1545, 5
  %v2643 = vsel %vm2422, %v2641, %v2642
  %v2644 = vrot.slane %v2642, 4
  %v2645 = vrot.slane %v1546, 5
  %v2646 = vsel %vm2422, %v2644, %v2645
  %v2648 = vshrl.u32 %v1493, 16
  %v2650 = vrot.slane %v2648, 4
  %v2651 = vshll.u32 %v1493, 16
  %v2653 = vrot.slane %v2651, 5
  %v2654 = vor.u32 %v2650, %v2653
  %v2655 = vrot.slane %v2654, 4
  %v2657 = vshll.u32 %v1494, 16
  %v2659 = vrot.slane %v2657, 5
  %v2660 = vsel %vm1555, %v2655, %v2659
  %v2661 = vshrl.u32 %v1494, 16
  %v2663 = vrot.slane %v2661, 4
  %v2664 = vor.u32 %v2663, %v2659
  %v2665 = vrot.slane %v2664, 4
  %v2667 = vshll.u32 %v1495, 16
  %v2669 = vrot.slane %v2667, 5
  %v2670 = vsel %vm1555, %v2665, %v2669
  %v2672 = vshrl.u32 %v1547, 16
  %v2674 = vrot.slane %v2672, 4
  %v2675 = vshll.u32 %v1547, 16
  %v2677 = vrot.slane %v2675, 5
  %v2678 = vor.u32 %v2674, %v2677
  %v2679 = vrot.slane %v2678, 4
  %v2681 = vshll.u32 %v1548, 16
  %v2683 = vrot.slane %v2681, 5
  %v2684 = vsel %vm1555, %v2679, %v2683
  %v2685 = vshrl.u32 %v1548, 16
  %v2687 = vrot.slane %v2685, 4
  %v2688 = vor.u32 %v2687, %v2683
  %v2689 = vrot.slane %v2688, 4
  %v2691 = vshll.u32 %v1549, 16
  %v2693 = vrot.slane %v2691, 5
  %v2694 = vsel %vm1555, %v2689, %v2693
  %v2701 = vrot.slane %v1493, 5
  %v2702 = vrot.slane %v2701, 4
  %v2703 = vrot.slane %v1494, 5
  %v2704 = vsel %vm2422, %v2702, %v2703
  %v2705 = vrot.slane %v2703, 4
  %v2706 = vrot.slane %v1495, 5
  %v2707 = vsel %vm2422, %v2705, %v2706
  %v2708 = vrot.slane %v1547, 5
  %v2709 = vrot.slane %v2708, 4
  %v2710 = vrot.slane %v1548, 5
  %v2711 = vsel %vm2422, %v2709, %v2710
  %v2712 = vrot.slane %v2710, 4
  %v2713 = vrot.slane %v1549, 5
  %v2714 = vsel %vm2422, %v2712, %v2713
  %v2716 = vshrl.u32 %v1496, 16
  %v2718 = vrot.slane %v2716, 4
  %v2719 = vshll.u32 %v1496, 16
  %v2721 = vrot.slane %v2719, 5
  %v2722 = vor.u32 %v2718, %v2721
  %v2723 = vrot.slane %v2722, 4
  %v2725 = vshll.u32 %v1497, 16
  %v2727 = vrot.slane %v2725, 5
  %v2728 = vsel %vm1555, %v2723, %v2727
  %v2729 = vshrl.u32 %v1497, 16
  %v2731 = vrot.slane %v2729, 4
  %v2732 = vor.u32 %v2731, %v2727
  %v2733 = vrot.slane %v2732, 4
  %v2735 = vshll.u32 %v1498, 16
  %v2737 = vrot.slane %v2735, 5
  %v2738 = vsel %vm1555, %v2733, %v2737
  %v2740 = vshrl.u32 %v1550, 16
  %v2742 = vrot.slane %v2740, 4
  %v2743 = vshll.u32 %v1550, 16
  %v2745 = vrot.slane %v2743, 5
  %v2746 = vor.u32 %v2742, %v2745
  %v2747 = vrot.slane %v2746, 4
  %v2749 = vshll.u32 %v1551, 16
  %v2751 = vrot.slane %v2749, 5
  %v2752 = vsel %vm1555, %v2747, %v2751
  %v2753 = vshrl.u32 %v1551, 16
  %v2755 = vrot.slane %v2753, 4
  %v2756 = vor.u32 %v2755, %v2751
  %v2757 = vrot.slane %v2756, 4
  %v2759 = vshll.u32 %v1552, 16
  %v2761 = vrot.slane %v2759, 5
  %v2762 = vsel %vm1555, %v2757, %v2761
  %v2769 = vrot.slane %v1496, 5
  %v2770 = vrot.slane %v2769, 4
  %v2771 = vrot.slane %v1497, 5
  %v2772 = vsel %vm2422, %v2770, %v2771
  %v2773 = vrot.slane %v2771, 4
  %v2774 = vrot.slane %v1498, 5
  %v2775 = vsel %vm2422, %v2773, %v2774
  %v2776 = vrot.slane %v1550, 5
  %v2777 = vrot.slane %v2776, 4
  %v2778 = vrot.slane %v1551, 5
  %v2779 = vsel %vm2422, %v2777, %v2778
  %v2780 = vrot.slane %v2778, 4
  %v2781 = vrot.slane %v1552, 5
  %v2782 = vsel %vm2422, %v2780, %v2781
  %v2783 = vunpack.c.l.b16 %v1445
  %v2784 = vunpack.c.l.b16 %v1446
  %v2785 = vunpack.c.l.b16 %v1448
  %v2786 = vunpack.c.l.b16 %v1449
  %v2787 = vunpack.c.l.b16 %v1451
  %v2788 = vunpack.c.l.b16 %v1452
  %v2789 = vunpack.c.l.b16 %v1454
  %v2790 = vunpack.c.l.b16 %v1455
  %v2791 = vunpack.c.l.b16 %v1457
  %v2792 = vunpack.c.l.b16 %v1458
  %v2793 = vunpack.c.l.b16 %v1460
  %v2794 = vunpack.c.l.b16 %v1461
  %v2795 = vunpack.c.l.b16 %v1463
  %v2796 = vunpack.c.l.b16 %v1464
  %v2797 = vunpack.c.l.b16 %v1466
  %v2798 = vunpack.c.l.b16 %v1467
  %v2799 = vunpack.c.l.b16 %v1469
  %v2800 = vunpack.c.l.b16 %v1470
  %v2801 = vunpack.c.l.b16 %v1472
  %v2802 = vunpack.c.l.b16 %v1473
  %v2803 = vunpack.c.l.b16 %v1475
  %v2804 = vunpack.c.l.b16 %v1476
  %v2805 = vunpack.c.l.b16 %v1478
  %v2806 = vunpack.c.l.b16 %v1479
  %v2807 = vunpack.c.l.b16 %v1481
  %v2808 = vunpack.c.l.b16 %v1482
  %v2809 = vunpack.c.l.b16 %v1484
  %v2810 = vunpack.c.l.b16 %v1485
  %v2811 = vunpack.c.l.b16 %v1487
  %v2812 = vunpack.c.l.b16 %v1488
  %v2813 = vunpack.c.l.b16 %v1490
  %v2814 = vunpack.c.l.b16 %v1491
  %v2815 = vunpack.c.l.b16 %v1499
  %v2816 = vunpack.c.l.b16 %v1500
  %v2817 = vunpack.c.l.b16 %v1502
  %v2818 = vunpack.c.l.b16 %v1503
  %v2819 = vunpack.c.l.b16 %v1505
  %v2820 = vunpack.c.l.b16 %v1506
  %v2821 = vunpack.c.l.b16 %v1508
  %v2822 = vunpack.c.l.b16 %v1509
  %v2823 = vunpack.c.l.b16 %v1511
  %v2824 = vunpack.c.l.b16 %v1512
  %v2825 = vunpack.c.l.b16 %v1514
  %v2826 = vunpack.c.l.b16 %v1515
  %v2827 = vunpack.c.l.b16 %v1517
  %v2828 = vunpack.c.l.b16 %v1518
  %v2829 = vunpack.c.l.b16 %v1520
  %v2830 = vunpack.c.l.b16 %v1521
  %v2831 = vunpack.c.l.b16 %v1523
  %v2832 = vunpack.c.l.b16 %v1524
  %v2833 = vunpack.c.l.b16 %v1526
  %v2834 = vunpack.c.l.b16 %v1527
  %v2835 = vunpack.c.l.b16 %v1529
  %v2836 = vunpack.c.l.b16 %v1530
  %v2837 = vunpack.c.l.b16 %v1532
  %v2838 = vunpack.c.l.b16 %v1533
  %v2839 = vunpack.c.l.b16 %v1535
  %v2840 = vunpack.c.l.b16 %v1536
  %v2841 = vunpack.c.l.b16 %v1538
  %v2842 = vunpack.c.l.b16 %v1539
  %v2843 = vunpack.c.l.b16 %v1541
  %v2844 = vunpack.c.l.b16 %v1542
  %v2845 = vunpack.c.l.b16 %v1544
  %v2846 = vunpack.c.l.b16 %v1545
  %v2847 = vpack.c.b16 %v2784, %v2783
  %v2848 = vpack.c.b16 %v2786, %v2785
  %v2849 = vpack.c.b16 %v2788, %v2787
  %v2850 = vpack.c.b16 %v2790, %v2789
  %v2851 = vpack.c.b16 %v2792, %v2791
  %v2852 = vpack.c.b16 %v2794, %v2793
  %v2853 = vpack.c.b16 %v2796, %v2795
  %v2854 = vpack.c.b16 %v2798, %v2797
  %v2855 = vpack.c.b16 %v2800, %v2799
  %v2856 = vpack.c.b16 %v2802, %v2801
  %v2857 = vpack.c.b16 %v2804, %v2803
  %v2858 = vpack.c.b16 %v2806, %v2805
  %v2859 = vpack.c.b16 %v2808, %v2807
  %v2860 = vpack.c.b16 %v2810, %v2809
  %v2861 = vpack.c.b16 %v2812, %v2811
  %v2862 = vpack.c.b16 %v2814, %v2813
  %v2863 = vpack.c.b16 %v2816, %v2815
  %v2864 = vpack.c.b16 %v2818, %v2817
  %v2865 = vpack.c.b16 %v2820, %v2819
  %v2866 = vpack.c.b16 %v2822, %v2821
  %v2867 = vpack.c.b16 %v2824, %v2823
  %v2868 = vpack.c.b16 %v2826, %v2825
  %v2869 = vpack.c.b16 %v2828, %v2827
  %v2870 = vpack.c.b16 %v2830, %v2829
  %v2871 = vpack.c.b16 %v2832, %v2831
  %v2872 = vpack.c.b16 %v2834, %v2833
  %v2873 = vpack.c.b16 %v2836, %v2835
  %v2874 = vpack.c.b16 %v2838, %v2837
  %v2875 = vpack.c.b16 %v2840, %v2839
  %v2876 = vpack.c.b16 %v2842, %v2841
  %v2877 = vpack.c.b16 %v2844, %v2843
  %v2878 = vpack.c.b16 %v2846, %v2845
  %v2879 = vunpack.c.l.b16 %v1569
  %v2880 = vunpack.c.l.b16 %v1579
  %v2881 = vunpack.c.l.b16 %v1593
  %v2882 = vunpack.c.l.b16 %v1603
  %v2883 = vunpack.c.l.b16 %v1617
  %v2884 = vunpack.c.l.b16 %v1627
  %v2885 = vunpack.c.l.b16 %v1641
  %v2886 = vunpack.c.l.b16 %v1651
  %v2887 = vunpack.c.l.b16 %v1665
  %v2888 = vunpack.c.l.b16 %v1675
  %v2889 = vunpack.c.l.b16 %v1689
  %v2890 = vunpack.c.l.b16 %v1699
  %v2891 = vunpack.c.l.b16 %v1713
  %v2892 = vunpack.c.l.b16 %v1723
  %v2893 = vunpack.c.l.b16 %v1737
  %v2894 = vunpack.c.l.b16 %v1747
  %v2895 = vunpack.c.l.b16 %v1761
  %v2896 = vunpack.c.l.b16 %v1771
  %v2897 = vunpack.c.l.b16 %v1785
  %v2898 = vunpack.c.l.b16 %v1795
  %v2899 = vunpack.c.l.b16 %v1809
  %v2900 = vunpack.c.l.b16 %v1819
  %v2901 = vunpack.c.l.b16 %v1833
  %v2902 = vunpack.c.l.b16 %v1843
  %v2903 = vunpack.c.l.b16 %v1857
  %v2904 = vunpack.c.l.b16 %v1867
  %v2905 = vunpack.c.l.b16 %v1881
  %v2906 = vunpack.c.l.b16 %v1891
  %v2907 = vunpack.c.l.b16 %v1905
  %v2908 = vunpack.c.l.b16 %v1915
  %v2909 = vunpack.c.l.b16 %v1929
  %v2910 = vunpack.c.l.b16 %v1939
  %v2911 = vunpack.c.l.b16 %v1953
  %v2912 = vunpack.c.l.b16 %v1963
  %v2913 = vunpack.c.l.b16 %v1977
  %v2914 = vunpack.c.l.b16 %v1987
  %v2915 = vunpack.c.l.b16 %v2001
  %v2916 = vunpack.c.l.b16 %v2011
  %v2917 = vunpack.c.l.b16 %v2025
  %v2918 = vunpack.c.l.b16 %v2035
  %v2919 = vunpack.c.l.b16 %v2049
  %v2920 = vunpack.c.l.b16 %v2059
  %v2921 = vunpack.c.l.b16 %v2073
  %v2922 = vunpack.c.l.b16 %v2083
  %v2923 = vunpack.c.l.b16 %v2097
  %v2924 = vunpack.c.l.b16 %v2107
  %v2925 = vunpack.c.l.b16 %v2121
  %v2926 = vunpack.c.l.b16 %v2131
  %v2927 = vunpack.c.l.b16 %v2145
  %v2928 = vunpack.c.l.b16 %v2155
  %v2929 = vunpack.c.l.b16 %v2169
  %v2930 = vunpack.c.l.b16 %v2179
  %v2931 = vunpack.c.l.b16 %v2193
  %v2932 = vunpack.c.l.b16 %v2203
  %v2933 = vunpack.c.l.b16 %v2217
  %v2934 = vunpack.c.l.b16 %v2227
  %v2935 = vunpack.c.l.b16 %v2241
  %v2936 = vunpack.c.l.b16 %v2251
  %v2937 = vunpack.c.l.b16 %v2265
  %v2938 = vunpack.c.l.b16 %v2275
  %v2939 = vunpack.c.l.b16 %v2289
  %v2940 = vunpack.c.l.b16 %v2299
  %v2941 = vunpack.c.l.b16 %v2313
  %v2942 = vunpack.c.l.b16 %v2323
  %v2943 = vpack.c.b16 %v2880, %v2879
  %v2944 = vpack.c.b16 %v2882, %v2881
  %v2945 = vpack.c.b16 %v2884, %v2883
  %v2946 = vpack.c.b16 %v2886, %v2885
  %v2947 = vpack.c.b16 %v2888, %v2887
  %v2948 = vpack.c.b16 %v2890, %v2889
  %v2949 = vpack.c.b16 %v2892, %v2891
  %v2950 = vpack.c.b16 %v2894, %v2893
  %v2951 = vpack.c.b16 %v2896, %v2895
  %v2952 = vpack.c.b16 %v2898, %v2897
  %v2953 = vpack.c.b16 %v2900, %v2899
  %v2954 = vpack.c.b16 %v2902, %v2901
  %v2955 = vpack.c.b16 %v2904, %v2903
  %v2956 = vpack.c.b16 %v2906, %v2905
  %v2957 = vpack.c.b16 %v2908, %v2907
  %v2958 = vpack.c.b16 %v2910, %v2909
  %v2959 = vpack.c.b16 %v2912, %v2911
  %v2960 = vpack.c.b16 %v2914, %v2913
  %v2961 = vpack.c.b16 %v2916, %v2915
  %v2962 = vpack.c.b16 %v2918, %v2917
  %v2963 = vpack.c.b16 %v2920, %v2919
  %v2964 = vpack.c.b16 %v2922, %v2921
  %v2965 = vpack.c.b16 %v2924, %v2923
  %v2966 = vpack.c.b16 %v2926, %v2925
  %v2967 = vpack.c.b16 %v2928, %v2927
  %v2968 = vpack.c.b16 %v2930, %v2929
  %v2969 = vpack.c.b16 %v2932, %v2931
  %v2970 = vpack.c.b16 %v2934, %v2933
  %v2971 = vpack.c.b16 %v2936, %v2935
  %v2972 = vpack.c.b16 %v2938, %v2937
  %v2973 = vpack.c.b16 %v2940, %v2939
  %v2974 = vpack.c.b16 %v2942, %v2941
  %2975 = vrot.lane.b32.xlu0 %v2943, 32
  %v2976 = vpop.permute.xlu0 %2975
  %2977 = vrot.lane.b32.xlu0 %v2944, 32
  %v2978 = vpop.permute.xlu0 %2977
  %2979 = vrot.lane.b32.xlu0 %v2945, 32
  %v2980 = vpop.permute.xlu0 %2979
  %2981 = vrot.lane.b32.xlu0 %v2946, 32
  %v2982 = vpop.permute.xlu0 %2981
  %2983 = vrot.lane.b32.xlu0 %v2947, 32
  %v2984 = vpop.permute.xlu0 %2983
  %2985 = vrot.lane.b32.xlu0 %v2948, 32
  %v2986 = vpop.permute.xlu0 %2985
  %2987 = vrot.lane.b32.xlu0 %v2949, 32
  %v2988 = vpop.permute.xlu0 %2987
  %2989 = vrot.lane.b32.xlu0 %v2950, 32
  %v2990 = vpop.permute.xlu0 %2989
  %2991 = vrot.lane.b32.xlu0 %v2951, 32
  %v2992 = vpop.permute.xlu0 %2991
  %2993 = vrot.lane.b32.xlu0 %v2952, 32
  %v2994 = vpop.permute.xlu0 %2993
  %2995 = vrot.lane.b32.xlu0 %v2953, 32
  %v2996 = vpop.permute.xlu0 %2995
  %2997 = vrot.lane.b32.xlu0 %v2954, 32
  %v2998 = vpop.permute.xlu0 %2997
  %2999 = vrot.lane.b32.xlu0 %v2955, 32
  %v3000 = vpop.permute.xlu0 %2999
  %3001 = vrot.lane.b32.xlu0 %v2956, 32
  %v3002 = vpop.permute.xlu0 %3001
  %3003 = vrot.lane.b32.xlu0 %v2957, 32
  %v3004 = vpop.permute.xlu0 %3003
  %3005 = vrot.lane.b32.xlu0 %v2958, 32
  %v3006 = vpop.permute.xlu0 %3005
  %3007 = vrot.lane.b32.xlu0 %v2959, 32
  %v3008 = vpop.permute.xlu0 %3007
  %3009 = vrot.lane.b32.xlu0 %v2960, 32
  %v3010 = vpop.permute.xlu0 %3009
  %3011 = vrot.lane.b32.xlu0 %v2961, 32
  %v3012 = vpop.permute.xlu0 %3011
  %3013 = vrot.lane.b32.xlu0 %v2962, 32
  %v3014 = vpop.permute.xlu0 %3013
  %3015 = vrot.lane.b32.xlu0 %v2963, 32
  %v3016 = vpop.permute.xlu0 %3015
  %3017 = vrot.lane.b32.xlu0 %v2964, 32
  %v3018 = vpop.permute.xlu0 %3017
  %3019 = vrot.lane.b32.xlu0 %v2965, 32
  %v3020 = vpop.permute.xlu0 %3019
  %3021 = vrot.lane.b32.xlu0 %v2966, 32
  %v3022 = vpop.permute.xlu0 %3021
  %3023 = vrot.lane.b32.xlu0 %v2967, 32
  %v3024 = vpop.permute.xlu0 %3023
  %3025 = vrot.lane.b32.xlu0 %v2968, 32
  %v3026 = vpop.permute.xlu0 %3025
  %3027 = vrot.lane.b32.xlu0 %v2969, 32
  %v3028 = vpop.permute.xlu0 %3027
  %3029 = vrot.lane.b32.xlu0 %v2970, 32
  %v3030 = vpop.permute.xlu0 %3029
  %3031 = vrot.lane.b32.xlu0 %v2971, 32
  %v3032 = vpop.permute.xlu0 %3031
  %3033 = vrot.lane.b32.xlu0 %v2972, 32
  %v3034 = vpop.permute.xlu0 %3033
  %3035 = vrot.lane.b32.xlu0 %v2973, 32
  %v3036 = vpop.permute.xlu0 %3035
  %3037 = vrot.lane.b32.xlu0 %v2974, 32
  %v3038 = vpop.permute.xlu0 %3037
  %v3039 = vunpack.c.l.b16 %v2426
  %v3040 = vunpack.c.l.b16 %v2429
  %v3041 = vunpack.c.l.b16 %v2433
  %v3042 = vunpack.c.l.b16 %v2436
  %v3043 = vunpack.c.l.b16 %v2440
  %v3044 = vunpack.c.l.b16 %v2443
  %v3045 = vunpack.c.l.b16 %v2447
  %v3046 = vunpack.c.l.b16 %v2450
  %v3047 = vunpack.c.l.b16 %v2454
  %v3048 = vunpack.c.l.b16 %v2457
  %v3049 = vunpack.c.l.b16 %v2461
  %v3050 = vunpack.c.l.b16 %v2464
  %v3051 = vunpack.c.l.b16 %v2468
  %v3052 = vunpack.c.l.b16 %v2471
  %v3053 = vunpack.c.l.b16 %v2475
  %v3054 = vunpack.c.l.b16 %v2478
  %v3055 = vunpack.c.l.b16 %v2482
  %v3056 = vunpack.c.l.b16 %v2485
  %v3057 = vunpack.c.l.b16 %v2489
  %v3058 = vunpack.c.l.b16 %v2492
  %v3059 = vunpack.c.l.b16 %v2496
  %v3060 = vunpack.c.l.b16 %v2499
  %v3061 = vunpack.c.l.b16 %v2503
  %v3062 = vunpack.c.l.b16 %v2506
  %v3063 = vunpack.c.l.b16 %v2510
  %v3064 = vunpack.c.l.b16 %v2513
  %v3065 = vunpack.c.l.b16 %v2517
  %v3066 = vunpack.c.l.b16 %v2520
  %v3067 = vunpack.c.l.b16 %v2524
  %v3068 = vunpack.c.l.b16 %v2527
  %v3069 = vunpack.c.l.b16 %v2531
  %v3070 = vunpack.c.l.b16 %v2534
  %v3071 = vunpack.c.l.b16 %v2538
  %v3072 = vunpack.c.l.b16 %v2541
  %v3073 = vunpack.c.l.b16 %v2545
  %v3074 = vunpack.c.l.b16 %v2548
  %v3075 = vunpack.c.l.b16 %v2552
  %v3076 = vunpack.c.l.b16 %v2555
  %v3077 = vunpack.c.l.b16 %v2559
  %v3078 = vunpack.c.l.b16 %v2562
  %v3079 = vunpack.c.l.b16 %v2566
  %v3080 = vunpack.c.l.b16 %v2569
  %v3081 = vunpack.c.l.b16 %v2573
  %v3082 = vunpack.c.l.b16 %v2576
  %v3083 = vunpack.c.l.b16 %v2580
  %v3084 = vunpack.c.l.b16 %v2583
  %v3085 = vunpack.c.l.b16 %v2587
  %v3086 = vunpack.c.l.b16 %v2590
  %v3087 = vunpack.c.l.b16 %v2594
  %v3088 = vunpack.c.l.b16 %v2597
  %v3089 = vunpack.c.l.b16 %v2601
  %v3090 = vunpack.c.l.b16 %v2604
  %v3091 = vunpack.c.l.b16 %v2608
  %v3092 = vunpack.c.l.b16 %v2611
  %v3093 = vunpack.c.l.b16 %v2615
  %v3094 = vunpack.c.l.b16 %v2618
  %v3095 = vunpack.c.l.b16 %v2622
  %v3096 = vunpack.c.l.b16 %v2625
  %v3097 = vunpack.c.l.b16 %v2629
  %v3098 = vunpack.c.l.b16 %v2632
  %v3099 = vunpack.c.l.b16 %v2636
  %v3100 = vunpack.c.l.b16 %v2639
  %v3101 = vunpack.c.l.b16 %v2643
  %v3102 = vunpack.c.l.b16 %v2646
  %v3103 = vpack.c.b16 %v3040, %v3039
  %v3104 = vpack.c.b16 %v3042, %v3041
  %v3105 = vpack.c.b16 %v3044, %v3043
  %v3106 = vpack.c.b16 %v3046, %v3045
  %v3107 = vpack.c.b16 %v3048, %v3047
  %v3108 = vpack.c.b16 %v3050, %v3049
  %v3109 = vpack.c.b16 %v3052, %v3051
  %v3110 = vpack.c.b16 %v3054, %v3053
  %v3111 = vpack.c.b16 %v3056, %v3055
  %v3112 = vpack.c.b16 %v3058, %v3057
  %v3113 = vpack.c.b16 %v3060, %v3059
  %v3114 = vpack.c.b16 %v3062, %v3061
  %v3115 = vpack.c.b16 %v3064, %v3063
  %v3116 = vpack.c.b16 %v3066, %v3065
  %v3117 = vpack.c.b16 %v3068, %v3067
  %v3118 = vpack.c.b16 %v3070, %v3069
  %v3119 = vpack.c.b16 %v3072, %v3071
  %v3120 = vpack.c.b16 %v3074, %v3073
  %v3121 = vpack.c.b16 %v3076, %v3075
  %v3122 = vpack.c.b16 %v3078, %v3077
  %v3123 = vpack.c.b16 %v3080, %v3079
  %v3124 = vpack.c.b16 %v3082, %v3081
  %v3125 = vpack.c.b16 %v3084, %v3083
  %v3126 = vpack.c.b16 %v3086, %v3085
  %v3127 = vpack.c.b16 %v3088, %v3087
  %v3128 = vpack.c.b16 %v3090, %v3089
  %v3129 = vpack.c.b16 %v3092, %v3091
  %v3130 = vpack.c.b16 %v3094, %v3093
  %v3131 = vpack.c.b16 %v3096, %v3095
  %v3132 = vpack.c.b16 %v3098, %v3097
  %v3133 = vpack.c.b16 %v3100, %v3099
  %v3134 = vpack.c.b16 %v3102, %v3101
  %3135 = vrot.lane.b32.xlu0 %v3103, 64
  %v3136 = vpop.permute.xlu0 %3135
  %3137 = vrot.lane.b32.xlu0 %v3104, 64
  %v3138 = vpop.permute.xlu0 %3137
  %3139 = vrot.lane.b32.xlu0 %v3105, 64
  %v3140 = vpop.permute.xlu0 %3139
  %3141 = vrot.lane.b32.xlu0 %v3106, 64
  %v3142 = vpop.permute.xlu0 %3141
  %3143 = vrot.lane.b32.xlu0 %v3107, 64
  %v3144 = vpop.permute.xlu0 %3143
  %3145 = vrot.lane.b32.xlu0 %v3108, 64
  %v3146 = vpop.permute.xlu0 %3145
  %3147 = vrot.lane.b32.xlu0 %v3109, 64
  %v3148 = vpop.permute.xlu0 %3147
  %3149 = vrot.lane.b32.xlu0 %v3110, 64
  %v3150 = vpop.permute.xlu0 %3149
  %3151 = vrot.lane.b32.xlu0 %v3111, 64
  %v3152 = vpop.permute.xlu0 %3151
  %3153 = vrot.lane.b32.xlu0 %v3112, 64
  %v3154 = vpop.permute.xlu0 %3153
  %3155 = vrot.lane.b32.xlu0 %v3113, 64
  %v3156 = vpop.permute.xlu0 %3155
  %3157 = vrot.lane.b32.xlu0 %v3114, 64
  %v3158 = vpop.permute.xlu0 %3157
  %3159 = vrot.lane.b32.xlu0 %v3115, 64
  %v3160 = vpop.permute.xlu0 %3159
  %3161 = vrot.lane.b32.xlu0 %v3116, 64
  %v3162 = vpop.permute.xlu0 %3161
  %3163 = vrot.lane.b32.xlu0 %v3117, 64
  %v3164 = vpop.permute.xlu0 %3163
  %3165 = vrot.lane.b32.xlu0 %v3118, 64
  %v3166 = vpop.permute.xlu0 %3165
  %3167 = vrot.lane.b32.xlu0 %v3119, 64
  %v3168 = vpop.permute.xlu0 %3167
  %3169 = vrot.lane.b32.xlu0 %v3120, 64
  %v3170 = vpop.permute.xlu0 %3169
  %3171 = vrot.lane.b32.xlu0 %v3121, 64
  %v3172 = vpop.permute.xlu0 %3171
  %3173 = vrot.lane.b32.xlu0 %v3122, 64
  %v3174 = vpop.permute.xlu0 %3173
  %3175 = vrot.lane.b32.xlu0 %v3123, 64
  %v3176 = vpop.permute.xlu0 %3175
  %3177 = vrot.lane.b32.xlu0 %v3124, 64
  %v3178 = vpop.permute.xlu0 %3177
  %3179 = vrot.lane.b32.xlu0 %v3125, 64
  %v3180 = vpop.permute.xlu0 %3179
  %3181 = vrot.lane.b32.xlu0 %v3126, 64
  %v3182 = vpop.permute.xlu0 %3181
  %3183 = vrot.lane.b32.xlu0 %v3127, 64
  %v3184 = vpop.permute.xlu0 %3183
  %3185 = vrot.lane.b32.xlu0 %v3128, 64
  %v3186 = vpop.permute.xlu0 %3185
  %3187 = vrot.lane.b32.xlu0 %v3129, 64
  %v3188 = vpop.permute.xlu0 %3187
  %3189 = vrot.lane.b32.xlu0 %v3130, 64
  %v3190 = vpop.permute.xlu0 %3189
  %3191 = vrot.lane.b32.xlu0 %v3131, 64
  %v3192 = vpop.permute.xlu0 %3191
  %3193 = vrot.lane.b32.xlu0 %v3132, 64
  %v3194 = vpop.permute.xlu0 %3193
  %3195 = vrot.lane.b32.xlu0 %v3133, 64
  %v3196 = vpop.permute.xlu0 %3195
  %3197 = vrot.lane.b32.xlu0 %v3134, 64
  %v3198 = vpop.permute.xlu0 %3197
  %v3199 = vunpack.c.l.b16 %v1493
  %v3200 = vunpack.c.l.b16 %v1494
  %v3201 = vunpack.c.l.b16 %v1547
  %v3202 = vunpack.c.l.b16 %v1548
  %v3203 = vpack.c.b16 %v3200, %v3199
  %v3204 = vpack.c.b16 %v3202, %v3201
  %3205 = vrot.lane.b32.xlu0 %v2848, 96
  %v3206 = vpop.permute.xlu0 %3205
  %3207 = vrot.lane.b32.xlu0 %v2849, 96
  %v3208 = vpop.permute.xlu0 %3207
  %3209 = vrot.lane.b32.xlu0 %v2850, 96
  %v3210 = vpop.permute.xlu0 %3209
  %3211 = vrot.lane.b32.xlu0 %v2851, 96
  %v3212 = vpop.permute.xlu0 %3211
  %3213 = vrot.lane.b32.xlu0 %v2852, 96
  %v3214 = vpop.permute.xlu0 %3213
  %3215 = vrot.lane.b32.xlu0 %v2853, 96
  %v3216 = vpop.permute.xlu0 %3215
  %3217 = vrot.lane.b32.xlu0 %v2854, 96
  %v3218 = vpop.permute.xlu0 %3217
  %3219 = vrot.lane.b32.xlu0 %v2855, 96
  %v3220 = vpop.permute.xlu0 %3219
  %3221 = vrot.lane.b32.xlu0 %v2856, 96
  %v3222 = vpop.permute.xlu0 %3221
  %3223 = vrot.lane.b32.xlu0 %v2857, 96
  %v3224 = vpop.permute.xlu0 %3223
  %3225 = vrot.lane.b32.xlu0 %v2858, 96
  %v3226 = vpop.permute.xlu0 %3225
  %3227 = vrot.lane.b32.xlu0 %v2859, 96
  %v3228 = vpop.permute.xlu0 %3227
  %3229 = vrot.lane.b32.xlu0 %v2860, 96
  %v3230 = vpop.permute.xlu0 %3229
  %3231 = vrot.lane.b32.xlu0 %v2861, 96
  %v3232 = vpop.permute.xlu0 %3231
  %3233 = vrot.lane.b32.xlu0 %v2862, 96
  %v3234 = vpop.permute.xlu0 %3233
  %3235 = vrot.lane.b32.xlu0 %v3203, 96
  %v3236 = vpop.permute.xlu0 %3235
  %3237 = vrot.lane.b32.xlu0 %v2864, 96
  %v3238 = vpop.permute.xlu0 %3237
  %3239 = vrot.lane.b32.xlu0 %v2865, 96
  %v3240 = vpop.permute.xlu0 %3239
  %3241 = vrot.lane.b32.xlu0 %v2866, 96
  %v3242 = vpop.permute.xlu0 %3241
  %3243 = vrot.lane.b32.xlu0 %v2867, 96
  %v3244 = vpop.permute.xlu0 %3243
  %3245 = vrot.lane.b32.xlu0 %v2868, 96
  %v3246 = vpop.permute.xlu0 %3245
  %3247 = vrot.lane.b32.xlu0 %v2869, 96
  %v3248 = vpop.permute.xlu0 %3247
  %3249 = vrot.lane.b32.xlu0 %v2870, 96
  %v3250 = vpop.permute.xlu0 %3249
  %3251 = vrot.lane.b32.xlu0 %v2871, 96
  %v3252 = vpop.permute.xlu0 %3251
  %3253 = vrot.lane.b32.xlu0 %v2872, 96
  %v3254 = vpop.permute.xlu0 %3253
  %3255 = vrot.lane.b32.xlu0 %v2873, 96
  %v3256 = vpop.permute.xlu0 %3255
  %3257 = vrot.lane.b32.xlu0 %v2874, 96
  %v3258 = vpop.permute.xlu0 %3257
  %3259 = vrot.lane.b32.xlu0 %v2875, 96
  %v3260 = vpop.permute.xlu0 %3259
  %3261 = vrot.lane.b32.xlu0 %v2876, 96
  %v3262 = vpop.permute.xlu0 %3261
  %3263 = vrot.lane.b32.xlu0 %v2877, 96
  %v3264 = vpop.permute.xlu0 %3263
  %3265 = vrot.lane.b32.xlu0 %v2878, 96
  %v3266 = vpop.permute.xlu0 %3265
  %3267 = vrot.lane.b32.xlu0 %v3204, 96
  %v3268 = vpop.permute.xlu0 %3267
  %v3269 = vunpack.c.l.b16 %v2660
  %v3270 = vunpack.c.l.b16 %v2670
  %v3271 = vunpack.c.l.b16 %v2684
  %v3272 = vunpack.c.l.b16 %v2694
  %v3273 = vpack.c.b16 %v3270, %v3269
  %v3274 = vpack.c.b16 %v3272, %v3271
  %v3275 = vunpack.c.l.b16 %v2704
  %v3276 = vunpack.c.l.b16 %v2707
  %v3277 = vunpack.c.l.b16 %v2711
  %v3278 = vunpack.c.l.b16 %v2714
  %v3279 = vpack.c.b16 %v3276, %v3275
  %v3280 = vpack.c.b16 %v3278, %v3277
  %3281 = vrot.lane.b32.xlu0 %v3104, 32
  %v3282 = vpop.permute.xlu0 %3281
  %3283 = vrot.lane.b32.xlu0 %v3105, 32
  %v3284 = vpop.permute.xlu0 %3283
  %3285 = vrot.lane.b32.xlu0 %v3106, 32
  %v3286 = vpop.permute.xlu0 %3285
  %3287 = vrot.lane.b32.xlu0 %v3107, 32
  %v3288 = vpop.permute.xlu0 %3287
  %3289 = vrot.lane.b32.xlu0 %v3108, 32
  %v3290 = vpop.permute.xlu0 %3289
  %3291 = vrot.lane.b32.xlu0 %v3109, 32
  %v3292 = vpop.permute.xlu0 %3291
  %3293 = vrot.lane.b32.xlu0 %v3110, 32
  %v3294 = vpop.permute.xlu0 %3293
  %3295 = vrot.lane.b32.xlu0 %v3111, 32
  %v3296 = vpop.permute.xlu0 %3295
  %3297 = vrot.lane.b32.xlu0 %v3112, 32
  %v3298 = vpop.permute.xlu0 %3297
  %3299 = vrot.lane.b32.xlu0 %v3113, 32
  %v3300 = vpop.permute.xlu0 %3299
  %3301 = vrot.lane.b32.xlu0 %v3114, 32
  %v3302 = vpop.permute.xlu0 %3301
  %3303 = vrot.lane.b32.xlu0 %v3115, 32
  %v3304 = vpop.permute.xlu0 %3303
  %3305 = vrot.lane.b32.xlu0 %v3116, 32
  %v3306 = vpop.permute.xlu0 %3305
  %3307 = vrot.lane.b32.xlu0 %v3117, 32
  %v3308 = vpop.permute.xlu0 %3307
  %3309 = vrot.lane.b32.xlu0 %v3118, 32
  %v3310 = vpop.permute.xlu0 %3309
  %3311 = vrot.lane.b32.xlu0 %v3279, 32
  %v3312 = vpop.permute.xlu0 %3311
  %3313 = vrot.lane.b32.xlu0 %v3120, 32
  %v3314 = vpop.permute.xlu0 %3313
  %3315 = vrot.lane.b32.xlu0 %v3121, 32
  %v3316 = vpop.permute.xlu0 %3315
  %3317 = vrot.lane.b32.xlu0 %v3122, 32
  %v3318 = vpop.permute.xlu0 %3317
  %3319 = vrot.lane.b32.xlu0 %v3123, 32
  %v3320 = vpop.permute.xlu0 %3319
  %3321 = vrot.lane.b32.xlu0 %v3124, 32
  %v3322 = vpop.permute.xlu0 %3321
  %3323 = vrot.lane.b32.xlu0 %v3125, 32
  %v3324 = vpop.permute.xlu0 %3323
  %3325 = vrot.lane.b32.xlu0 %v3126, 32
  %v3326 = vpop.permute.xlu0 %3325
  %3327 = vrot.lane.b32.xlu0 %v3127, 32
  %v3328 = vpop.permute.xlu0 %3327
  %3329 = vrot.lane.b32.xlu0 %v3128, 32
  %v3330 = vpop.permute.xlu0 %3329
  %3331 = vrot.lane.b32.xlu0 %v3129, 32
  %v3332 = vpop.permute.xlu0 %3331
  %3333 = vrot.lane.b32.xlu0 %v3130, 32
  %v3334 = vpop.permute.xlu0 %3333
  %3335 = vrot.lane.b32.xlu0 %v3131, 32
  %v3336 = vpop.permute.xlu0 %3335
  %3337 = vrot.lane.b32.xlu0 %v3132, 32
  %v3338 = vpop.permute.xlu0 %3337
  %3339 = vrot.lane.b32.xlu0 %v3133, 32
  %v3340 = vpop.permute.xlu0 %3339
  %3341 = vrot.lane.b32.xlu0 %v3134, 32
  %v3342 = vpop.permute.xlu0 %3341
  %3343 = vrot.lane.b32.xlu0 %v3280, 32
  %v3344 = vpop.permute.xlu0 %3343
  %v3345 = vunpack.c.l.b16 %v1496
  %v3346 = vunpack.c.l.b16 %v1497
  %v3347 = vunpack.c.l.b16 %v1550
  %v3348 = vunpack.c.l.b16 %v1551
  %v3349 = vpack.c.b16 %v3346, %v3345
  %v3350 = vpack.c.b16 %v3348, %v3347
  %3351 = vrot.lane.b32.xlu0 %v2849, 64
  %v3352 = vpop.permute.xlu0 %3351
  %3353 = vrot.lane.b32.xlu0 %v2850, 64
  %v3354 = vpop.permute.xlu0 %3353
  %3355 = vrot.lane.b32.xlu0 %v2851, 64
  %v3356 = vpop.permute.xlu0 %3355
  %3357 = vrot.lane.b32.xlu0 %v2852, 64
  %v3358 = vpop.permute.xlu0 %3357
  %3359 = vrot.lane.b32.xlu0 %v2853, 64
  %v3360 = vpop.permute.xlu0 %3359
  %3361 = vrot.lane.b32.xlu0 %v2854, 64
  %v3362 = vpop.permute.xlu0 %3361
  %3363 = vrot.lane.b32.xlu0 %v2855, 64
  %v3364 = vpop.permute.xlu0 %3363
  %3365 = vrot.lane.b32.xlu0 %v2856, 64
  %v3366 = vpop.permute.xlu0 %3365
  %3367 = vrot.lane.b32.xlu0 %v2857, 64
  %v3368 = vpop.permute.xlu0 %3367
  %3369 = vrot.lane.b32.xlu0 %v2858, 64
  %v3370 = vpop.permute.xlu0 %3369
  %3371 = vrot.lane.b32.xlu0 %v2859, 64
  %v3372 = vpop.permute.xlu0 %3371
  %3373 = vrot.lane.b32.xlu0 %v2860, 64
  %v3374 = vpop.permute.xlu0 %3373
  %3375 = vrot.lane.b32.xlu0 %v2861, 64
  %v3376 = vpop.permute.xlu0 %3375
  %3377 = vrot.lane.b32.xlu0 %v2862, 64
  %v3378 = vpop.permute.xlu0 %3377
  %3379 = vrot.lane.b32.xlu0 %v3203, 64
  %v3380 = vpop.permute.xlu0 %3379
  %3381 = vrot.lane.b32.xlu0 %v3349, 64
  %v3382 = vpop.permute.xlu0 %3381
  %3383 = vrot.lane.b32.xlu0 %v2865, 64
  %v3384 = vpop.permute.xlu0 %3383
  %3385 = vrot.lane.b32.xlu0 %v2866, 64
  %v3386 = vpop.permute.xlu0 %3385
  %3387 = vrot.lane.b32.xlu0 %v2867, 64
  %v3388 = vpop.permute.xlu0 %3387
  %3389 = vrot.lane.b32.xlu0 %v2868, 64
  %v3390 = vpop.permute.xlu0 %3389
  %3391 = vrot.lane.b32.xlu0 %v2869, 64
  %v3392 = vpop.permute.xlu0 %3391
  %3393 = vrot.lane.b32.xlu0 %v2870, 64
  %v3394 = vpop.permute.xlu0 %3393
  %3395 = vrot.lane.b32.xlu0 %v2871, 64
  %v3396 = vpop.permute.xlu0 %3395
  %3397 = vrot.lane.b32.xlu0 %v2872, 64
  %v3398 = vpop.permute.xlu0 %3397
  %3399 = vrot.lane.b32.xlu0 %v2873, 64
  %v3400 = vpop.permute.xlu0 %3399
  %3401 = vrot.lane.b32.xlu0 %v2874, 64
  %v3402 = vpop.permute.xlu0 %3401
  %3403 = vrot.lane.b32.xlu0 %v2875, 64
  %v3404 = vpop.permute.xlu0 %3403
  %3405 = vrot.lane.b32.xlu0 %v2876, 64
  %v3406 = vpop.permute.xlu0 %3405
  %3407 = vrot.lane.b32.xlu0 %v2877, 64
  %v3408 = vpop.permute.xlu0 %3407
  %3409 = vrot.lane.b32.xlu0 %v2878, 64
  %v3410 = vpop.permute.xlu0 %3409
  %3411 = vrot.lane.b32.xlu0 %v3204, 64
  %v3412 = vpop.permute.xlu0 %3411
  %3413 = vrot.lane.b32.xlu0 %v3350, 64
  %v3414 = vpop.permute.xlu0 %3413
  %v3415 = vunpack.c.l.b16 %v2728
  %v3416 = vunpack.c.l.b16 %v2738
  %v3417 = vunpack.c.l.b16 %v2752
  %v3418 = vunpack.c.l.b16 %v2762
  %v3419 = vpack.c.b16 %v3416, %v3415
  %v3420 = vpack.c.b16 %v3418, %v3417
  %3421 = vrot.lane.b32.xlu0 %v2945, 96
  %v3422 = vpop.permute.xlu0 %3421
  %3423 = vrot.lane.b32.xlu0 %v2946, 96
  %v3424 = vpop.permute.xlu0 %3423
  %3425 = vrot.lane.b32.xlu0 %v2947, 96
  %v3426 = vpop.permute.xlu0 %3425
  %3427 = vrot.lane.b32.xlu0 %v2948, 96
  %v3428 = vpop.permute.xlu0 %3427
  %3429 = vrot.lane.b32.xlu0 %v2949, 96
  %v3430 = vpop.permute.xlu0 %3429
  %3431 = vrot.lane.b32.xlu0 %v2950, 96
  %v3432 = vpop.permute.xlu0 %3431
  %3433 = vrot.lane.b32.xlu0 %v2951, 96
  %v3434 = vpop.permute.xlu0 %3433
  %3435 = vrot.lane.b32.xlu0 %v2952, 96
  %v3436 = vpop.permute.xlu0 %3435
  %3437 = vrot.lane.b32.xlu0 %v2953, 96
  %v3438 = vpop.permute.xlu0 %3437
  %3439 = vrot.lane.b32.xlu0 %v2954, 96
  %v3440 = vpop.permute.xlu0 %3439
  %3441 = vrot.lane.b32.xlu0 %v2955, 96
  %v3442 = vpop.permute.xlu0 %3441
  %3443 = vrot.lane.b32.xlu0 %v2956, 96
  %v3444 = vpop.permute.xlu0 %3443
  %3445 = vrot.lane.b32.xlu0 %v2957, 96
  %v3446 = vpop.permute.xlu0 %3445
  %3447 = vrot.lane.b32.xlu0 %v2958, 96
  %v3448 = vpop.permute.xlu0 %3447
  %3449 = vrot.lane.b32.xlu0 %v3273, 96
  %v3450 = vpop.permute.xlu0 %3449
  %3451 = vrot.lane.b32.xlu0 %v3419, 96
  %v3452 = vpop.permute.xlu0 %3451
  %3453 = vrot.lane.b32.xlu0 %v2961, 96
  %v3454 = vpop.permute.xlu0 %3453
  %3455 = vrot.lane.b32.xlu0 %v2962, 96
  %v3456 = vpop.permute.xlu0 %3455
  %3457 = vrot.lane.b32.xlu0 %v2963, 96
  %v3458 = vpop.permute.xlu0 %3457
  %3459 = vrot.lane.b32.xlu0 %v2964, 96
  %v3460 = vpop.permute.xlu0 %3459
  %3461 = vrot.lane.b32.xlu0 %v2965, 96
  %v3462 = vpop.permute.xlu0 %3461
  %3463 = vrot.lane.b32.xlu0 %v2966, 96
  %v3464 = vpop.permute.xlu0 %3463
  %3465 = vrot.lane.b32.xlu0 %v2967, 96
  %v3466 = vpop.permute.xlu0 %3465
  %3467 = vrot.lane.b32.xlu0 %v2968, 96
  %v3468 = vpop.permute.xlu0 %3467
  %3469 = vrot.lane.b32.xlu0 %v2969, 96
  %v3470 = vpop.permute.xlu0 %3469
  %3471 = vrot.lane.b32.xlu0 %v2970, 96
  %v3472 = vpop.permute.xlu0 %3471
  %3473 = vrot.lane.b32.xlu0 %v2971, 96
  %v3474 = vpop.permute.xlu0 %3473
  %3475 = vrot.lane.b32.xlu0 %v2972, 96
  %v3476 = vpop.permute.xlu0 %3475
  %3477 = vrot.lane.b32.xlu0 %v2973, 96
  %v3478 = vpop.permute.xlu0 %3477
  %3479 = vrot.lane.b32.xlu0 %v2974, 96
  %v3480 = vpop.permute.xlu0 %3479
  %3481 = vrot.lane.b32.xlu0 %v3274, 96
  %v3482 = vpop.permute.xlu0 %3481
  %3483 = vrot.lane.b32.xlu0 %v3420, 96
  %v3484 = vpop.permute.xlu0 %3483
  %v3485 = vunpack.c.l.b16 %v2772
  %v3486 = vunpack.c.l.b16 %v2775
  %v3487 = vunpack.c.l.b16 %v2779
  %v3488 = vunpack.c.l.b16 %v2782
  %v3489 = vpack.c.b16 %v3486, %v3485
  %v3490 = vpack.c.b16 %v3488, %v3487
  %vm3491 = vcmask 261120
  %v3494 = vsel %vm3491, %v2847, %v2976
  %v3497 = vsel %vm3491, %v2848, %v2978
  %v3500 = vsel %vm3491, %v2849, %v2980
  %v3503 = vsel %vm3491, %v2850, %v2982
  %v3506 = vsel %vm3491, %v2851, %v2984
  %v3509 = vsel %vm3491, %v2852, %v2986
  %v3512 = vsel %vm3491, %v2853, %v2988
  %v3515 = vsel %vm3491, %v2854, %v2990
  %v3518 = vsel %vm3491, %v2855, %v2992
  %v3521 = vsel %vm3491, %v2856, %v2994
  %v3524 = vsel %vm3491, %v2857, %v2996
  %v3527 = vsel %vm3491, %v2858, %v2998
  %v3530 = vsel %vm3491, %v2859, %v3000
  %v3533 = vsel %vm3491, %v2860, %v3002
  %v3536 = vsel %vm3491, %v2861, %v3004
  %v3539 = vsel %vm3491, %v2862, %v3006
  %v3542 = vsel %vm3491, %v2863, %v3008
  %v3545 = vsel %vm3491, %v2864, %v3010
  %v3548 = vsel %vm3491, %v2865, %v3012
  %v3551 = vsel %vm3491, %v2866, %v3014
  %v3554 = vsel %vm3491, %v2867, %v3016
  %v3557 = vsel %vm3491, %v2868, %v3018
  %v3560 = vsel %vm3491, %v2869, %v3020
  %v3563 = vsel %vm3491, %v2870, %v3022
  %v3566 = vsel %vm3491, %v2871, %v3024
  %v3569 = vsel %vm3491, %v2872, %v3026
  %v3572 = vsel %vm3491, %v2873, %v3028
  %v3575 = vsel %vm3491, %v2874, %v3030
  %v3578 = vsel %vm3491, %v2875, %v3032
  %v3581 = vsel %vm3491, %v2876, %v3034
  %v3584 = vsel %vm3491, %v2877, %v3036
  %v3587 = vsel %vm3491, %v2878, %v3038
  %vm3588 = vcmask 523264
  %v3590 = vsel %vm3588, %v3494, %v3136
  %v3592 = vsel %vm3588, %v3497, %v3138
  %v3594 = vsel %vm3588, %v3500, %v3140
  %v3596 = vsel %vm3588, %v3503, %v3142
  %v3598 = vsel %vm3588, %v3506, %v3144
  %v3600 = vsel %vm3588, %v3509, %v3146
  %v3602 = vsel %vm3588, %v3512, %v3148
  %v3604 = vsel %vm3588, %v3515, %v3150
  %v3606 = vsel %vm3588, %v3518, %v3152
  %v3608 = vsel %vm3588, %v3521, %v3154
  %v3610 = vsel %vm3588, %v3524, %v3156
  %v3612 = vsel %vm3588, %v3527, %v3158
  %v3614 = vsel %vm3588, %v3530, %v3160
  %v3616 = vsel %vm3588, %v3533, %v3162
  %v3618 = vsel %vm3588, %v3536, %v3164
  %v3620 = vsel %vm3588, %v3539, %v3166
  %v3622 = vsel %vm3588, %v3542, %v3168
  %v3624 = vsel %vm3588, %v3545, %v3170
  %v3626 = vsel %vm3588, %v3548, %v3172
  %v3628 = vsel %vm3588, %v3551, %v3174
  %v3630 = vsel %vm3588, %v3554, %v3176
  %v3632 = vsel %vm3588, %v3557, %v3178
  %v3634 = vsel %vm3588, %v3560, %v3180
  %v3636 = vsel %vm3588, %v3563, %v3182
  %v3638 = vsel %vm3588, %v3566, %v3184
  %v3640 = vsel %vm3588, %v3569, %v3186
  %v3642 = vsel %vm3588, %v3572, %v3188
  %v3644 = vsel %vm3588, %v3575, %v3190
  %v3646 = vsel %vm3588, %v3578, %v3192
  %v3648 = vsel %vm3588, %v3581, %v3194
  %v3650 = vsel %vm3588, %v3584, %v3196
  %v3652 = vsel %vm3588, %v3587, %v3198
  %vm3653 = vcmask 785408
  %v3655 = vsel %vm3653, %v3590, %v3206
  %v3658 = vsel %vm3653, %v3592, %v3208
  %v3661 = vsel %vm3653, %v3594, %v3210
  %v3664 = vsel %vm3653, %v3596, %v3212
  %v3667 = vsel %vm3653, %v3598, %v3214
  %v3670 = vsel %vm3653, %v3600, %v3216
  %v3673 = vsel %vm3653, %v3602, %v3218
  %v3676 = vsel %vm3653, %v3604, %v3220
  %v3679 = vsel %vm3653, %v3606, %v3222
  %v3682 = vsel %vm3653, %v3608, %v3224
  %v3685 = vsel %vm3653, %v3610, %v3226
  %v3688 = vsel %vm3653, %v3612, %v3228
  %v3691 = vsel %vm3653, %v3614, %v3230
  %v3694 = vsel %vm3653, %v3616, %v3232
  %v3697 = vsel %vm3653, %v3618, %v3234
  %v3700 = vsel %vm3653, %v3620, %v3236
  %v3703 = vsel %vm3653, %v3622, %v3238
  %v3706 = vsel %vm3653, %v3624, %v3240
  %v3709 = vsel %vm3653, %v3626, %v3242
  %v3712 = vsel %vm3653, %v3628, %v3244
  %v3715 = vsel %vm3653, %v3630, %v3246
  %v3718 = vsel %vm3653, %v3632, %v3248
  %v3721 = vsel %vm3653, %v3634, %v3250
  %v3724 = vsel %vm3653, %v3636, %v3252
  %v3727 = vsel %vm3653, %v3638, %v3254
  %v3730 = vsel %vm3653, %v3640, %v3256
  %v3733 = vsel %vm3653, %v3642, %v3258
  %v3736 = vsel %vm3653, %v3644, %v3260
  %v3739 = vsel %vm3653, %v3646, %v3262
  %v3742 = vsel %vm3653, %v3648, %v3264
  %v3745 = vsel %vm3653, %v3650, %v3266
  %v3748 = vsel %vm3653, %v3652, %v3268
  %v3752 = vsel %vm3491, %v2944, %v3282
  %v3755 = vsel %vm3491, %v2945, %v3284
  %v3758 = vsel %vm3491, %v2946, %v3286
  %v3761 = vsel %vm3491, %v2947, %v3288
  %v3764 = vsel %vm3491, %v2948, %v3290
  %v3767 = vsel %vm3491, %v2949, %v3292
  %v3770 = vsel %vm3491, %v2950, %v3294
  %v3773 = vsel %vm3491, %v2951, %v3296
  %v3776 = vsel %vm3491, %v2952, %v3298
  %v3779 = vsel %vm3491, %v2953, %v3300
  %v3782 = vsel %vm3491, %v2954, %v3302
  %v3785 = vsel %vm3491, %v2955, %v3304
  %v3788 = vsel %vm3491, %v2956, %v3306
  %v3791 = vsel %vm3491, %v2957, %v3308
  %v3794 = vsel %vm3491, %v2958, %v3310
  %v3797 = vsel %vm3491, %v3273, %v3312
  %v3800 = vsel %vm3491, %v2960, %v3314
  %v3803 = vsel %vm3491, %v2961, %v3316
  %v3806 = vsel %vm3491, %v2962, %v3318
  %v3809 = vsel %vm3491, %v2963, %v3320
  %v3812 = vsel %vm3491, %v2964, %v3322
  %v3815 = vsel %vm3491, %v2965, %v3324
  %v3818 = vsel %vm3491, %v2966, %v3326
  %v3821 = vsel %vm3491, %v2967, %v3328
  %v3824 = vsel %vm3491, %v2968, %v3330
  %v3827 = vsel %vm3491, %v2969, %v3332
  %v3830 = vsel %vm3491, %v2970, %v3334
  %v3833 = vsel %vm3491, %v2971, %v3336
  %v3836 = vsel %vm3491, %v2972, %v3338
  %v3839 = vsel %vm3491, %v2973, %v3340
  %v3842 = vsel %vm3491, %v2974, %v3342
  %v3845 = vsel %vm3491, %v3274, %v3344
  %v3847 = vsel %vm3588, %v3752, %v3352
  %v3849 = vsel %vm3588, %v3755, %v3354
  %v3851 = vsel %vm3588, %v3758, %v3356
  %v3853 = vsel %vm3588, %v3761, %v3358
  %v3855 = vsel %vm3588, %v3764, %v3360
  %v3857 = vsel %vm3588, %v3767, %v3362
  %v3859 = vsel %vm3588, %v3770, %v3364
  %v3861 = vsel %vm3588, %v3773, %v3366
  %v3863 = vsel %vm3588, %v3776, %v3368
  %v3865 = vsel %vm3588, %v3779, %v3370
  %v3867 = vsel %vm3588, %v3782, %v3372
  %v3869 = vsel %vm3588, %v3785, %v3374
  %v3871 = vsel %vm3588, %v3788, %v3376
  %v3873 = vsel %vm3588, %v3791, %v3378
  %v3875 = vsel %vm3588, %v3794, %v3380
  %v3877 = vsel %vm3588, %v3797, %v3382
  %v3879 = vsel %vm3588, %v3800, %v3384
  %v3881 = vsel %vm3588, %v3803, %v3386
  %v3883 = vsel %vm3588, %v3806, %v3388
  %v3885 = vsel %vm3588, %v3809, %v3390
  %v3887 = vsel %vm3588, %v3812, %v3392
  %v3889 = vsel %vm3588, %v3815, %v3394
  %v3891 = vsel %vm3588, %v3818, %v3396
  %v3893 = vsel %vm3588, %v3821, %v3398
  %v3895 = vsel %vm3588, %v3824, %v3400
  %v3897 = vsel %vm3588, %v3827, %v3402
  %v3899 = vsel %vm3588, %v3830, %v3404
  %v3901 = vsel %vm3588, %v3833, %v3406
  %v3903 = vsel %vm3588, %v3836, %v3408
  %v3905 = vsel %vm3588, %v3839, %v3410
  %v3907 = vsel %vm3588, %v3842, %v3412
  %v3909 = vsel %vm3588, %v3845, %v3414
  %v3911 = vsel %vm3653, %v3847, %v3422
  %v3914 = vsel %vm3653, %v3849, %v3424
  %v3917 = vsel %vm3653, %v3851, %v3426
  %v3920 = vsel %vm3653, %v3853, %v3428
  %v3923 = vsel %vm3653, %v3855, %v3430
  %v3926 = vsel %vm3653, %v3857, %v3432
  %v3929 = vsel %vm3653, %v3859, %v3434
  %v3932 = vsel %vm3653, %v3861, %v3436
  %v3935 = vsel %vm3653, %v3863, %v3438
  %v3938 = vsel %vm3653, %v3865, %v3440
  %v3941 = vsel %vm3653, %v3867, %v3442
  %v3944 = vsel %vm3653, %v3869, %v3444
  %v3947 = vsel %vm3653, %v3871, %v3446
  %v3950 = vsel %vm3653, %v3873, %v3448
  %v3953 = vsel %vm3653, %v3875, %v3450
  %v3956 = vsel %vm3653, %v3877, %v3452
  %v3959 = vsel %vm3653, %v3879, %v3454
  %v3962 = vsel %vm3653, %v3881, %v3456
  %v3965 = vsel %vm3653, %v3883, %v3458
  %v3968 = vsel %vm3653, %v3885, %v3460
  %v3971 = vsel %vm3653, %v3887, %v3462
  %v3974 = vsel %vm3653, %v3889, %v3464
  %v3977 = vsel %vm3653, %v3891, %v3466
  %v3980 = vsel %vm3653, %v3893, %v3468
  %v3983 = vsel %vm3653, %v3895, %v3470
  %v3986 = vsel %vm3653, %v3897, %v3472
  %v3989 = vsel %vm3653, %v3899, %v3474
  %v3992 = vsel %vm3653, %v3901, %v3476
  %v3995 = vsel %vm3653, %v3903, %v3478
  %v3998 = vsel %vm3653, %v3905, %v3480
  %v4001 = vsel %vm3653, %v3907, %v3482
  %v4004 = vsel %vm3653, %v3909, %v3484
  %v4006 = vld [vmem:[%s1] sm:$0xf]
  %v4007 = vld [vmem:[%s1 + $0x4] sm:$0xf]
  %v4008 = vld [vmem:[%s1 + $0x8] sm:$0xf]
  %v4009 = vld [vmem:[%s1 + $0xc] sm:$0xf]
  %v4010 = vld [vmem:[%s1 + $0x10] sm:$0xf]
  %v4011 = vld [vmem:[%s1 + $0x14] sm:$0xf]
  %v4012 = vld [vmem:[%s1 + $0x18] sm:$0xf]
  %v4013 = vld [vmem:[%s1 + $0x1c] sm:$0xf]
  %v4014 = vld [vmem:[%s1 + $0x20] sm:$0xf]
  %v4015 = vld [vmem:[%s1 + $0x24] sm:$0xf]
  %v4016 = vld [vmem:[%s1 + $0x28] sm:$0xf]
  %v4017 = vld [vmem:[%s1 + $0x2c] sm:$0xf]
  %v4018 = vld [vmem:[%s1 + $0x30] sm:$0xf]
  %v4019 = vld [vmem:[%s1 + $0x34] sm:$0xf]
  %v4020 = vld [vmem:[%s1 + $0x38] sm:$0xf]
  %v4021 = vld [vmem:[%s1 + $0x3c] sm:$0xf]
  %v4022 = vld [vmem:[%s1 + $0x40] sm:$0xf]
  %v4023 = vld [vmem:[%s1 + $0x44] sm:$0xf]
  %v4024 = vld [vmem:[%s1 + $0x48] sm:$0xf]
  %v4025 = vld [vmem:[%s1 + $0x4c] sm:$0xf]
  %v4026 = vld [vmem:[%s1 + $0x50] sm:$0xf]
  %v4027 = vld [vmem:[%s1 + $0x54] sm:$0xf]
  %v4028 = vld [vmem:[%s1 + $0x58] sm:$0xf]
  %v4029 = vld [vmem:[%s1 + $0x5c] sm:$0xf]
  %v4030 = vld [vmem:[%s1 + $0x60] sm:$0xf]
  %v4031 = vld [vmem:[%s1 + $0x64] sm:$0xf]
  %v4032 = vld [vmem:[%s1 + $0x68] sm:$0xf]
  %v4033 = vld [vmem:[%s1 + $0x6c] sm:$0xf]
  %v4034 = vld [vmem:[%s1 + $0x70] sm:$0xf]
  %v4035 = vld [vmem:[%s1 + $0x74] sm:$0xf]
  %v4036 = vld [vmem:[%s1 + $0x78] sm:$0xf]
  %v4037 = vld [vmem:[%s1 + $0x7c] sm:$0xf]
  %v4038 = vld [vmem:[%s1 + $0x80] sm:$0xf]
  %v4039 = vld [vmem:[%s1 + $0x84] sm:$0xf]
  %v4040 = vld [vmem:[%s1 + $0x88] sm:$0xf]
  %v4041 = vld [vmem:[%s1 + $0x8c] sm:$0xf]
  %v4078 = vunpack.c.l.b16 %v4006
  %v4079 = vunpack.c.l.b16 %v4007
  %v4080 = vunpack.c.l.b16 %v4008
  %v4081 = vunpack.c.l.b16 %v4009
  %v4082 = vunpack.c.l.b16 %v4010
  %v4083 = vunpack.c.l.b16 %v4011
  %v4084 = vunpack.c.l.b16 %v4012
  %v4085 = vunpack.c.l.b16 %v4013
  %v4086 = vunpack.c.l.b16 %v4014
  %v4087 = vunpack.c.l.b16 %v4015
  %v4088 = vunpack.c.l.b16 %v4016
  %v4089 = vunpack.c.l.b16 %v4017
  %v4090 = vunpack.c.l.b16 %v4018
  %v4091 = vunpack.c.l.b16 %v4019
  %v4092 = vunpack.c.l.b16 %v4020
  %v4093 = vunpack.c.l.b16 %v4021
  %v4094 = vunpack.c.l.b16 %v4022
  %v4095 = vunpack.c.l.b16 %v4023
  %v4096 = vunpack.c.l.b16 %v4024
  %v4097 = vunpack.c.l.b16 %v4025
  %v4098 = vunpack.c.l.b16 %v4026
  %v4099 = vunpack.c.l.b16 %v4027
  %v4100 = vunpack.c.l.b16 %v4028
  %v4101 = vunpack.c.l.b16 %v4029
  %v4102 = vunpack.c.l.b16 %v4030
  %v4103 = vunpack.c.l.b16 %v4031
  %v4104 = vunpack.c.l.b16 %v4032
  %v4105 = vunpack.c.l.b16 %v4033
  %v4106 = vunpack.c.l.b16 %v4034
  %v4107 = vunpack.c.l.b16 %v4035
  %v4108 = vunpack.c.l.b16 %v4036
  %v4109 = vunpack.c.l.b16 %v4037
  %v4110 = vunpack.c.l.b16 %v4038
  %v4111 = vunpack.c.l.b16 %v4039
  %v4112 = vunpack.c.l.b16 %v4040
  %v4113 = vunpack.c.l.b16 %v4041
  %v4114 = vpack.c.b16 %v4079, %v4078
  %v4115 = vpack.c.b16 %v4081, %v4080
  %v4116 = vpack.c.b16 %v4083, %v4082
  %v4117 = vpack.c.b16 %v4085, %v4084
  %v4118 = vpack.c.b16 %v4087, %v4086
  %v4119 = vpack.c.b16 %v4089, %v4088
  %v4120 = vpack.c.b16 %v4091, %v4090
  %v4121 = vpack.c.b16 %v4093, %v4092
  %v4122 = vpack.c.b16 %v4095, %v4094
  %v4123 = vpack.c.b16 %v4097, %v4096
  %v4124 = vpack.c.b16 %v4099, %v4098
  %v4125 = vpack.c.b16 %v4101, %v4100
  %v4126 = vpack.c.b16 %v4103, %v4102
  %v4127 = vpack.c.b16 %v4105, %v4104
  %v4128 = vpack.c.b16 %v4107, %v4106
  %v4129 = vpack.c.b16 %v4109, %v4108
  %v4130 = vpack.c.b16 %v4111, %v4110
  %v4131 = vpack.c.b16 %v4113, %v4112
  %v4151 = vsel %vm3491, %v3105, 0
  %v4154 = vsel %vm3491, %v3106, 0
  %v4157 = vsel %vm3491, %v3107, 0
  %v4160 = vsel %vm3491, %v3108, 0
  %v4163 = vsel %vm3491, %v3109, 0
  %v4166 = vsel %vm3491, %v3110, 0
  %v4169 = vsel %vm3491, %v3111, 0
  %v4172 = vsel %vm3491, %v3112, 0
  %v4175 = vsel %vm3491, %v3113, 0
  %v4178 = vsel %vm3491, %v3114, 0
  %v4181 = vsel %vm3491, %v3115, 0
  %v4184 = vsel %vm3491, %v3116, 0
  %v4187 = vsel %vm3491, %v3117, 0
  %v4190 = vsel %vm3491, %v3118, 0
  %v4193 = vsel %vm3491, %v3279, 0
  %v4196 = vsel %vm3491, %v3489, 0
  %v4199 = vsel %vm3491, %v3121, 0
  %v4202 = vsel %vm3491, %v3122, 0
  %v4205 = vsel %vm3491, %v3123, 0
  %v4208 = vsel %vm3491, %v3124, 0
  %v4211 = vsel %vm3491, %v3125, 0
  %v4214 = vsel %vm3491, %v3126, 0
  %v4217 = vsel %vm3491, %v3127, 0
  %v4220 = vsel %vm3491, %v3128, 0
  %v4223 = vsel %vm3491, %v3129, 0
  %v4226 = vsel %vm3491, %v3130, 0
  %v4229 = vsel %vm3491, %v3131, 0
  %v4232 = vsel %vm3491, %v3132, 0
  %v4235 = vsel %vm3491, %v3133, 0
  %v4238 = vsel %vm3491, %v3134, 0
  %v4241 = vsel %vm3491, %v3280, 0
  %v4244 = vsel %vm3491, %v3490, 0
  %4246 = vmatprep.subr.bf16.mxu0 0
  %4247 = vmatpush1.bf16.msra.mxu0 %v4114
  %4248 = vmatprep.subr.bf16.mxu0 0
  %4249 = vmatpush1.bf16.msra.mxu0 %v4115
  %4250 = vmatprep.subr.bf16.mxu0 0
  %4251 = vmatpush1.bf16.msra.mxu0 %v4116
  %4252 = vmatprep.subr.bf16.mxu0 0
  %4253 = vmatpush1.bf16.msra.mxu0 %v4117
  %4254 = vmatprep.subr.bf16.mxu0 0
  %4255 = vmatpush1.bf16.msra.mxu0 %v4118
  %4256 = vmatprep.subr.bf16.mxu0 0
  %4257 = vmatpush1.bf16.msra.mxu0 %v4119
  %4258 = vmatprep.subr.bf16.mxu0 0
  %4259 = vmatpush1.bf16.msra.mxu0 %v4120
  %4260 = vmatprep.subr.bf16.mxu0 0
  %4261 = vmatpush1.bf16.msra.mxu0 %v4121
  %4262 = vmatprep.subr.bf16.mxu0 0
  %4263 = vmatpush1.bf16.msra.mxu0 %v4122
  %4264 = vmatprep.subr.bf16.mxu0 0
  %4265 = vmatpush1.bf16.msra.mxu0 %v4123
  %4266 = vmatprep.subr.bf16.mxu0 0
  %4267 = vmatpush1.bf16.msra.mxu0 %v4124
  %4268 = vmatprep.subr.bf16.mxu0 0
  %4269 = vmatpush1.bf16.msra.mxu0 %v4125
  %4270 = vmatprep.subr.bf16.mxu0 0
  %4271 = vmatpush1.bf16.msra.mxu0 %v4126
  %4272 = vmatprep.subr.bf16.mxu0 0
  %4273 = vmatpush1.bf16.msra.mxu0 %v4127
  %4274 = vmatprep.subr.bf16.mxu0 0
  %4275 = vmatpush1.bf16.msra.mxu0 %v4128
  %4276 = vmatprep.subr.bf16.mxu0 0
  %4277 = vmatpush1.bf16.msra.mxu0 %v4129
  %4278 = vmatprep.mubr.bf16.mxu0 %v3911
  %4279 = vmatmul.mubr.bf16.gmra.mrb[0].mxu0 %v3655
  %v4280 = vpop.f32.mrb[0].mxu0
  %v4281 = vadd.f32 0.0, %v4280
  %v4282 = vpop.f32.mrb[0].mxu0
  %v4283 = vpop.f32.mrb[0].mxu0
  %v4284 = vadd.f32 0.0, %v4283
  %v4285 = vpop.f32.mrb[0].mxu0
  %4286 = vmatprep.mubr.bf16.mxu0 %v3914
  %4287 = vmatmul.mubr.bf16.gmra.mrb[0].mxu0 %v3658
  %v4288 = vpop.f32.mrb[0].mxu0
  %v4289 = vadd.f32 0.0, %v4288
  %v4290 = vpop.f32.mrb[0].mxu0
  %v4291 = vpop.f32.mrb[0].mxu0
  %v4292 = vadd.f32 0.0, %v4291
  %v4293 = vpop.f32.mrb[0].mxu0
  %4294 = vmatprep.mubr.bf16.mxu0 %v3917
  %4295 = vmatmul.mubr.bf16.gmra.mrb[0].mxu0 %v3661
  %v4296 = vpop.f32.mrb[0].mxu0
  %v4297 = vadd.f32 0.0, %v4296
  %v4298 = vpop.f32.mrb[0].mxu0
  %v4299 = vpop.f32.mrb[0].mxu0
  %v4300 = vadd.f32 0.0, %v4299
  %v4301 = vpop.f32.mrb[0].mxu0
  %4302 = vmatprep.mubr.bf16.mxu0 %v3920
  %4303 = vmatmul.mubr.bf16.gmra.mrb[0].mxu0 %v3664
  %v4304 = vpop.f32.mrb[0].mxu0
  %v4305 = vadd.f32 0.0, %v4304
  %v4306 = vpop.f32.mrb[0].mxu0
  %v4307 = vpop.f32.mrb[0].mxu0
  %v4308 = vadd.f32 0.0, %v4307
  %v4309 = vpop.f32.mrb[0].mxu0
  %4310 = vmatprep.mubr.bf16.mxu0 %v3923
  %4311 = vmatmul.mubr.bf16.gmra.mrb[0].mxu0 %v3667
  %v4312 = vpop.f32.mrb[0].mxu0
  %v4313 = vadd.f32 0.0, %v4312
  %v4314 = vpop.f32.mrb[0].mxu0
  %v4315 = vpop.f32.mrb[0].mxu0
  %v4316 = vadd.f32 0.0, %v4315
  %v4317 = vpop.f32.mrb[0].mxu0
  %4318 = vmatprep.mubr.bf16.mxu0 %v3926
  %4319 = vmatmul.mubr.bf16.gmra.mrb[0].mxu0 %v3670
  %v4320 = vpop.f32.mrb[0].mxu0
  %v4321 = vadd.f32 0.0, %v4320
  %v4322 = vpop.f32.mrb[0].mxu0
  %v4323 = vpop.f32.mrb[0].mxu0
  %v4324 = vadd.f32 0.0, %v4323
  %v4325 = vpop.f32.mrb[0].mxu0
  %4326 = vmatprep.mubr.bf16.mxu0 %v3929
  %4327 = vmatmul.mubr.bf16.gmra.mrb[0].mxu0 %v3673
  %v4328 = vpop.f32.mrb[0].mxu0
  %v4329 = vadd.f32 0.0, %v4328
  %v4330 = vpop.f32.mrb[0].mxu0
  %v4331 = vpop.f32.mrb[0].mxu0
  %v4332 = vadd.f32 0.0, %v4331
  %v4333 = vpop.f32.mrb[0].mxu0
  %4334 = vmatprep.mubr.bf16.mxu0 %v3932
  %4335 = vmatmul.mubr.bf16.gmra.mrb[0].mxu0 %v3676
  %v4336 = vpop.f32.mrb[0].mxu0
  %v4337 = vadd.f32 0.0, %v4336
  %v4338 = vpop.f32.mrb[0].mxu0
  %v4339 = vpop.f32.mrb[0].mxu0
  %v4340 = vadd.f32 0.0, %v4339
  %v4341 = vpop.f32.mrb[0].mxu0
  %4342 = vmatprep.mubr.bf16.mxu0 %v3935
  %4343 = vmatmul.mubr.bf16.gmra.mrb[0].mxu0 %v3679
  %v4344 = vpop.f32.mrb[0].mxu0
  %v4345 = vadd.f32 0.0, %v4344
  %v4346 = vpop.f32.mrb[0].mxu0
  %v4347 = vpop.f32.mrb[0].mxu0
  %v4348 = vadd.f32 0.0, %v4347
  %v4349 = vpop.f32.mrb[0].mxu0
  %4350 = vmatprep.mubr.bf16.mxu0 %v3938
  %4351 = vmatmul.mubr.bf16.gmra.mrb[0].mxu0 %v3682
  %v4352 = vpop.f32.mrb[0].mxu0
  %v4353 = vadd.f32 0.0, %v4352
  %v4354 = vpop.f32.mrb[0].mxu0
  %v4355 = vpop.f32.mrb[0].mxu0
  %v4356 = vadd.f32 0.0, %v4355
  %v4357 = vpop.f32.mrb[0].mxu0
  %4358 = vmatprep.mubr.bf16.mxu0 %v3941
  %4359 = vmatmul.mubr.bf16.gmra.mrb[0].mxu0 %v3685
  %v4360 = vpop.f32.mrb[0].mxu0
  %v4361 = vadd.f32 0.0, %v4360
  %v4362 = vpop.f32.mrb[0].mxu0
  %v4363 = vpop.f32.mrb[0].mxu0
  %v4364 = vadd.f32 0.0, %v4363
  %v4365 = vpop.f32.mrb[0].mxu0
  %4366 = vmatprep.mubr.bf16.mxu0 %v3944
  %4367 = vmatmul.mubr.bf16.gmra.mrb[0].mxu0 %v3688
  %v4368 = vpop.f32.mrb[0].mxu0
  %v4369 = vadd.f32 0.0, %v4368
  %v4370 = vpop.f32.mrb[0].mxu0
  %v4371 = vpop.f32.mrb[0].mxu0
  %v4372 = vadd.f32 0.0, %v4371
  %v4373 = vpop.f32.mrb[0].mxu0
  %4374 = vmatprep.mubr.bf16.mxu0 %v3947
  %4375 = vmatmul.mubr.bf16.gmra.mrb[0].mxu0 %v3691
  %v4376 = vpop.f32.mrb[0].mxu0
  %v4377 = vadd.f32 0.0, %v4376
  %v4378 = vpop.f32.mrb[0].mxu0
  %v4379 = vpop.f32.mrb[0].mxu0
  %v4380 = vadd.f32 0.0, %v4379
  %v4381 = vpop.f32.mrb[0].mxu0
  %4382 = vmatprep.mubr.bf16.mxu0 %v3950
  %4383 = vmatmul.mubr.bf16.gmra.mrb[0].mxu0 %v3694
  %v4384 = vpop.f32.mrb[0].mxu0
  %v4385 = vadd.f32 0.0, %v4384
  %v4386 = vpop.f32.mrb[0].mxu0
  %v4387 = vpop.f32.mrb[0].mxu0
  %v4388 = vadd.f32 0.0, %v4387
  %v4389 = vpop.f32.mrb[0].mxu0
  %4390 = vmatprep.mubr.bf16.mxu0 %v3953
  %4391 = vmatmul.mubr.bf16.gmra.mrb[0].mxu0 %v3697
  %v4392 = vpop.f32.mrb[0].mxu0
  %v4393 = vadd.f32 0.0, %v4392
  %v4394 = vpop.f32.mrb[0].mxu0
  %v4395 = vpop.f32.mrb[0].mxu0
  %v4396 = vadd.f32 0.0, %v4395
  %v4397 = vpop.f32.mrb[0].mxu0
  %4398 = vmatprep.mubr.bf16.mxu0 %v3956
  %4399 = vmatmul.mubr.bf16.gmra.mrb[0].mxu0 %v3700
  %v4400 = vpop.f32.mrb[0].mxu0
  %v4401 = vadd.f32 0.0, %v4400
  %v4402 = vpop.f32.mrb[0].mxu0
  %v4403 = vpop.f32.mrb[0].mxu0
  %v4404 = vadd.f32 0.0, %v4403
  %v4405 = vpop.f32.mrb[0].mxu0
  %4406 = vmatprep.mubr.bf16.mxu0 %v3959
  %4407 = vmatmul.mubr.bf16.gmra.mrb[0].mxu0 %v3703
  %v4408 = vpop.f32.mrb[0].mxu0
  %v4409 = vadd.f32 0.0, %v4408
  %v4410 = vpop.f32.mrb[0].mxu0
  %v4411 = vpop.f32.mrb[0].mxu0
  %v4412 = vadd.f32 0.0, %v4411
  %v4413 = vpop.f32.mrb[0].mxu0
  %4414 = vmatprep.mubr.bf16.mxu0 %v3962
  %4415 = vmatmul.mubr.bf16.gmra.mrb[0].mxu0 %v3706
  %v4416 = vpop.f32.mrb[0].mxu0
  %v4417 = vadd.f32 0.0, %v4416
  %v4418 = vpop.f32.mrb[0].mxu0
  %v4419 = vpop.f32.mrb[0].mxu0
  %v4420 = vadd.f32 0.0, %v4419
  %v4421 = vpop.f32.mrb[0].mxu0
  %4422 = vmatprep.mubr.bf16.mxu0 %v3965
  %4423 = vmatmul.mubr.bf16.gmra.mrb[0].mxu0 %v3709
  %v4424 = vpop.f32.mrb[0].mxu0
  %v4425 = vadd.f32 0.0, %v4424
  %v4426 = vpop.f32.mrb[0].mxu0
  %v4427 = vpop.f32.mrb[0].mxu0
  %v4428 = vadd.f32 0.0, %v4427
  %v4429 = vpop.f32.mrb[0].mxu0
  %4430 = vmatprep.mubr.bf16.mxu0 %v3968
  %4431 = vmatmul.mubr.bf16.gmra.mrb[0].mxu0 %v3712
  %v4432 = vpop.f32.mrb[0].mxu0
  %v4433 = vadd.f32 0.0, %v4432
  %v4434 = vpop.f32.mrb[0].mxu0
  %v4435 = vpop.f32.mrb[0].mxu0
  %v4436 = vadd.f32 0.0, %v4435
  %v4437 = vpop.f32.mrb[0].mxu0
  %4438 = vmatprep.mubr.bf16.mxu0 %v3971
  %4439 = vmatmul.mubr.bf16.gmra.mrb[0].mxu0 %v3715
  %v4440 = vpop.f32.mrb[0].mxu0
  %v4441 = vadd.f32 0.0, %v4440
  %v4442 = vpop.f32.mrb[0].mxu0
  %v4443 = vpop.f32.mrb[0].mxu0
  %v4444 = vadd.f32 0.0, %v4443
  %v4445 = vpop.f32.mrb[0].mxu0
  %4446 = vmatprep.mubr.bf16.mxu0 %v3974
  %4447 = vmatmul.mubr.bf16.gmra.mrb[0].mxu0 %v3718
  %v4448 = vpop.f32.mrb[0].mxu0
  %v4449 = vadd.f32 0.0, %v4448
  %v4450 = vpop.f32.mrb[0].mxu0
  %v4451 = vpop.f32.mrb[0].mxu0
  %v4452 = vadd.f32 0.0, %v4451
  %v4453 = vpop.f32.mrb[0].mxu0
  %4454 = vmatprep.mubr.bf16.mxu0 %v3977
  %4455 = vmatmul.mubr.bf16.gmra.mrb[0].mxu0 %v3721
  %v4456 = vpop.f32.mrb[0].mxu0
  %v4457 = vadd.f32 0.0, %v4456
  %v4458 = vpop.f32.mrb[0].mxu0
  %v4459 = vpop.f32.mrb[0].mxu0
  %v4460 = vadd.f32 0.0, %v4459
  %v4461 = vpop.f32.mrb[0].mxu0
  %4462 = vmatprep.mubr.bf16.mxu0 %v3980
  %4463 = vmatmul.mubr.bf16.gmra.mrb[0].mxu0 %v3724
  %v4464 = vpop.f32.mrb[0].mxu0
  %v4465 = vadd.f32 0.0, %v4464
  %v4466 = vpop.f32.mrb[0].mxu0
  %v4467 = vpop.f32.mrb[0].mxu0
  %v4468 = vadd.f32 0.0, %v4467
  %v4469 = vpop.f32.mrb[0].mxu0
  %4470 = vmatprep.mubr.bf16.mxu0 %v3983
  %4471 = vmatmul.mubr.bf16.gmra.mrb[0].mxu0 %v3727
  %v4472 = vpop.f32.mrb[0].mxu0
  %v4473 = vadd.f32 0.0, %v4472
  %v4474 = vpop.f32.mrb[0].mxu0
  %v4475 = vpop.f32.mrb[0].mxu0
  %v4476 = vadd.f32 0.0, %v4475
  %v4477 = vpop.f32.mrb[0].mxu0
  %4478 = vmatprep.mubr.bf16.mxu0 %v3986
  %4479 = vmatmul.mubr.bf16.gmra.mrb[0].mxu0 %v3730
  %v4480 = vpop.f32.mrb[0].mxu0
  %v4481 = vadd.f32 0.0, %v4480
  %v4482 = vpop.f32.mrb[0].mxu0
  %v4483 = vpop.f32.mrb[0].mxu0
  %v4484 = vadd.f32 0.0, %v4483
  %v4485 = vpop.f32.mrb[0].mxu0
  %4486 = vmatprep.mubr.bf16.mxu0 %v3989
  %4487 = vmatmul.mubr.bf16.gmra.mrb[0].mxu0 %v3733
  %v4488 = vpop.f32.mrb[0].mxu0
  %v4489 = vadd.f32 0.0, %v4488
  %v4490 = vpop.f32.mrb[0].mxu0
  %v4491 = vpop.f32.mrb[0].mxu0
  %v4492 = vadd.f32 0.0, %v4491
  %v4493 = vpop.f32.mrb[0].mxu0
  %4494 = vmatprep.mubr.bf16.mxu0 %v3992
  %4495 = vmatmul.mubr.bf16.gmra.mrb[0].mxu0 %v3736
  %v4496 = vpop.f32.mrb[0].mxu0
  %v4497 = vadd.f32 0.0, %v4496
  %v4498 = vpop.f32.mrb[0].mxu0
  %v4499 = vpop.f32.mrb[0].mxu0
  %v4500 = vadd.f32 0.0, %v4499
  %v4501 = vpop.f32.mrb[0].mxu0
  %4502 = vmatprep.mubr.bf16.mxu0 %v3995
  %4503 = vmatmul.mubr.bf16.gmra.mrb[0].mxu0 %v3739
  %v4504 = vpop.f32.mrb[0].mxu0
  %v4505 = vadd.f32 0.0, %v4504
  %v4506 = vpop.f32.mrb[0].mxu0
  %v4507 = vpop.f32.mrb[0].mxu0
  %v4508 = vadd.f32 0.0, %v4507
  %v4509 = vpop.f32.mrb[0].mxu0
  %4510 = vmatprep.mubr.bf16.mxu0 %v3998
  %4511 = vmatmul.mubr.bf16.gmra.mrb[0].mxu0 %v3742
  %v4512 = vpop.f32.mrb[0].mxu0
  %v4513 = vadd.f32 0.0, %v4512
  %v4514 = vpop.f32.mrb[0].mxu0
  %v4515 = vpop.f32.mrb[0].mxu0
  %v4516 = vadd.f32 0.0, %v4515
  %v4517 = vpop.f32.mrb[0].mxu0
  %4518 = vmatprep.mubr.bf16.mxu0 %v4001
  %4519 = vmatmul.mubr.bf16.gmra.mrb[0].mxu0 %v3745
  %v4520 = vpop.f32.mrb[0].mxu0
  %v4521 = vadd.f32 0.0, %v4520
  %v4522 = vpop.f32.mrb[0].mxu0
  %v4523 = vpop.f32.mrb[0].mxu0
  %v4524 = vadd.f32 0.0, %v4523
  %v4525 = vpop.f32.mrb[0].mxu0
  %4526 = vmatprep.mubr.bf16.mxu0 %v4004
  %4527 = vmatmul.mubr.bf16.gmra.mrb[0].mxu0 %v3748
  %v4528 = vpop.f32.mrb[0].mxu0
  %v4529 = vadd.f32 0.0, %v4528
  %v4530 = vpop.f32.mrb[0].mxu0
  %v4531 = vpop.f32.mrb[0].mxu0
  %v4532 = vadd.f32 0.0, %v4531
  %v4533 = vpop.f32.mrb[0].mxu0
  %4534 = vdwg.mxu0
  %4535 = vmatprep.subr.bf16.mxu0 0
  %4536 = vmatpush1.bf16.msra.mxu0 %v4130
  %4537 = vmatprep.subr.bf16.mxu0 0
  %4538 = vmatpush1.bf16.msra.mxu0 %v4131
  %4539 = vmatprep.subr.bf16.mxu0 0
  %4540 = vmatpush1.bf16.msra.mxu0 0
  %4541 = vmatprep.subr.bf16.mxu0 0
  %4542 = vmatpush1.bf16.msra.mxu0 0
  %4543 = vmatprep.subr.bf16.mxu0 0
  %4544 = vmatpush1.bf16.msra.mxu0 0
  %4545 = vmatprep.subr.bf16.mxu0 0
  %4546 = vmatpush1.bf16.msra.mxu0 0
  %4547 = vmatprep.subr.bf16.mxu0 0
  %4548 = vmatpush1.bf16.msra.mxu0 0
  %4549 = vmatprep.subr.bf16.mxu0 0
  %4550 = vmatpush1.bf16.msra.mxu0 0
  %4551 = vmatprep.subr.bf16.mxu0 0
  %4552 = vmatpush1.bf16.msra.mxu0 0
  %4553 = vmatprep.subr.bf16.mxu0 0
  %4554 = vmatpush1.bf16.msra.mxu0 0
  %4555 = vmatprep.subr.bf16.mxu0 0
  %4556 = vmatpush1.bf16.msra.mxu0 0
  %4557 = vmatprep.subr.bf16.mxu0 0
  %4558 = vmatpush1.bf16.msra.mxu0 0
  %4559 = vmatprep.subr.bf16.mxu0 0
  %4560 = vmatpush1.bf16.msra.mxu0 0
  %4561 = vmatprep.subr.bf16.mxu0 0
  %4562 = vmatpush1.bf16.msra.mxu0 0
  %4563 = vmatprep.subr.bf16.mxu0 0
  %4564 = vmatpush1.bf16.msra.mxu0 0
  %4565 = vmatprep.subr.bf16.mxu0 0
  %4566 = vmatpush1.bf16.msra.mxu0 0
  %4567 = vmatprep.mubr.bf16.mxu0 0
  %4568 = vmatmul.mubr.bf16.gmra.mrb[0].mxu0 %v4151
  %v4569 = vpop.f32.mrb[0].mxu0
  %v4570 = vadd.f32 %v4281, %v4569
  %v4571 = vpop.f32.mrb[0].mxu0
  %v4572 = vpop.f32.mrb[0].mxu0
  %v4573 = vadd.f32 %v4284, %v4572
  %v4574 = vpop.f32.mrb[0].mxu0
  %4575 = vmatprep.mubr.bf16.mxu0 0
  %4576 = vmatmul.mubr.bf16.gmra.mrb[0].mxu0 %v4154
  %v4577 = vpop.f32.mrb[0].mxu0
  %v4578 = vadd.f32 %v4289, %v4577
  %v4579 = vpop.f32.mrb[0].mxu0
  %v4580 = vpop.f32.mrb[0].mxu0
  %v4581 = vadd.f32 %v4292, %v4580
  %v4582 = vpop.f32.mrb[0].mxu0
  %4583 = vmatprep.mubr.bf16.mxu0 0
  %4584 = vmatmul.mubr.bf16.gmra.mrb[0].mxu0 %v4157
  %v4585 = vpop.f32.mrb[0].mxu0
  %v4586 = vadd.f32 %v4297, %v4585
  %v4587 = vpop.f32.mrb[0].mxu0
  %v4588 = vpop.f32.mrb[0].mxu0
  %v4589 = vadd.f32 %v4300, %v4588
  %v4590 = vpop.f32.mrb[0].mxu0
  %4591 = vmatprep.mubr.bf16.mxu0 0
  %4592 = vmatmul.mubr.bf16.gmra.mrb[0].mxu0 %v4160
  %v4593 = vpop.f32.mrb[0].mxu0
  %v4594 = vadd.f32 %v4305, %v4593
  %v4595 = vpop.f32.mrb[0].mxu0
  %v4596 = vpop.f32.mrb[0].mxu0
  %v4597 = vadd.f32 %v4308, %v4596
  %v4598 = vpop.f32.mrb[0].mxu0
  %4599 = vmatprep.mubr.bf16.mxu0 0
  %4600 = vmatmul.mubr.bf16.gmra.mrb[0].mxu0 %v4163
  %v4601 = vpop.f32.mrb[0].mxu0
  %v4602 = vadd.f32 %v4313, %v4601
  %v4603 = vpop.f32.mrb[0].mxu0
  %v4604 = vpop.f32.mrb[0].mxu0
  %v4605 = vadd.f32 %v4316, %v4604
  %v4606 = vpop.f32.mrb[0].mxu0
  %4607 = vmatprep.mubr.bf16.mxu0 0
  %4608 = vmatmul.mubr.bf16.gmra.mrb[0].mxu0 %v4166
  %v4609 = vpop.f32.mrb[0].mxu0
  %v4610 = vadd.f32 %v4321, %v4609
  %v4611 = vpop.f32.mrb[0].mxu0
  %v4612 = vpop.f32.mrb[0].mxu0
  %v4613 = vadd.f32 %v4324, %v4612
  %v4614 = vpop.f32.mrb[0].mxu0
  %4615 = vmatprep.mubr.bf16.mxu0 0
  %4616 = vmatmul.mubr.bf16.gmra.mrb[0].mxu0 %v4169
  %v4617 = vpop.f32.mrb[0].mxu0
  %v4618 = vadd.f32 %v4329, %v4617
  %v4619 = vpop.f32.mrb[0].mxu0
  %v4620 = vpop.f32.mrb[0].mxu0
  %v4621 = vadd.f32 %v4332, %v4620
  %v4622 = vpop.f32.mrb[0].mxu0
  %4623 = vmatprep.mubr.bf16.mxu0 0
  %4624 = vmatmul.mubr.bf16.gmra.mrb[0].mxu0 %v4172
  %v4625 = vpop.f32.mrb[0].mxu0
  %v4626 = vadd.f32 %v4337, %v4625
  %v4627 = vpop.f32.mrb[0].mxu0
  %v4628 = vpop.f32.mrb[0].mxu0
  %v4629 = vadd.f32 %v4340, %v4628
  %v4630 = vpop.f32.mrb[0].mxu0
  %4631 = vmatprep.mubr.bf16.mxu0 0
  %4632 = vmatmul.mubr.bf16.gmra.mrb[0].mxu0 %v4175
  %v4633 = vpop.f32.mrb[0].mxu0
  %v4634 = vadd.f32 %v4345, %v4633
  %v4635 = vpop.f32.mrb[0].mxu0
  %v4636 = vpop.f32.mrb[0].mxu0
  %v4637 = vadd.f32 %v4348, %v4636
  %v4638 = vpop.f32.mrb[0].mxu0
  %4639 = vmatprep.mubr.bf16.mxu0 0
  %4640 = vmatmul.mubr.bf16.gmra.mrb[0].mxu0 %v4178
  %v4641 = vpop.f32.mrb[0].mxu0
  %v4642 = vadd.f32 %v4353, %v4641
  %v4643 = vpop.f32.mrb[0].mxu0
  %v4644 = vpop.f32.mrb[0].mxu0
  %v4645 = vadd.f32 %v4356, %v4644
  %v4646 = vpop.f32.mrb[0].mxu0
  %4647 = vmatprep.mubr.bf16.mxu0 0
  %4648 = vmatmul.mubr.bf16.gmra.mrb[0].mxu0 %v4181
  %v4649 = vpop.f32.mrb[0].mxu0
  %v4650 = vadd.f32 %v4361, %v4649
  %v4651 = vpop.f32.mrb[0].mxu0
  %v4652 = vpop.f32.mrb[0].mxu0
  %v4653 = vadd.f32 %v4364, %v4652
  %v4654 = vpop.f32.mrb[0].mxu0
  %4655 = vmatprep.mubr.bf16.mxu0 0
  %4656 = vmatmul.mubr.bf16.gmra.mrb[0].mxu0 %v4184
  %v4657 = vpop.f32.mrb[0].mxu0
  %v4658 = vadd.f32 %v4369, %v4657
  %v4659 = vpop.f32.mrb[0].mxu0
  %v4660 = vpop.f32.mrb[0].mxu0
  %v4661 = vadd.f32 %v4372, %v4660
  %v4662 = vpop.f32.mrb[0].mxu0
  %4663 = vmatprep.mubr.bf16.mxu0 0
  %4664 = vmatmul.mubr.bf16.gmra.mrb[0].mxu0 %v4187
  %v4665 = vpop.f32.mrb[0].mxu0
  %v4666 = vadd.f32 %v4377, %v4665
  %v4667 = vpop.f32.mrb[0].mxu0
  %v4668 = vpop.f32.mrb[0].mxu0
  %v4669 = vadd.f32 %v4380, %v4668
  %v4670 = vpop.f32.mrb[0].mxu0
  %4671 = vmatprep.mubr.bf16.mxu0 0
  %4672 = vmatmul.mubr.bf16.gmra.mrb[0].mxu0 %v4190
  %v4673 = vpop.f32.mrb[0].mxu0
  %v4674 = vadd.f32 %v4385, %v4673
  %v4675 = vpop.f32.mrb[0].mxu0
  %v4676 = vpop.f32.mrb[0].mxu0
  %v4677 = vadd.f32 %v4388, %v4676
  %v4678 = vpop.f32.mrb[0].mxu0
  %4679 = vmatprep.mubr.bf16.mxu0 0
  %4680 = vmatmul.mubr.bf16.gmra.mrb[0].mxu0 %v4193
  %v4681 = vpop.f32.mrb[0].mxu0
  %v4682 = vadd.f32 %v4393, %v4681
  %v4683 = vpop.f32.mrb[0].mxu0
  %v4684 = vpop.f32.mrb[0].mxu0
  %v4685 = vadd.f32 %v4396, %v4684
  %v4686 = vpop.f32.mrb[0].mxu0
  %4687 = vmatprep.mubr.bf16.mxu0 0
  %4688 = vmatmul.mubr.bf16.gmra.mrb[0].mxu0 %v4196
  %v4689 = vpop.f32.mrb[0].mxu0
  %v4690 = vadd.f32 %v4401, %v4689
  %v4691 = vpop.f32.mrb[0].mxu0
  %v4692 = vpop.f32.mrb[0].mxu0
  %v4693 = vadd.f32 %v4404, %v4692
  %v4694 = vpop.f32.mrb[0].mxu0
  %4695 = vmatprep.mubr.bf16.mxu0 0
  %4696 = vmatmul.mubr.bf16.gmra.mrb[0].mxu0 %v4199
  %v4697 = vpop.f32.mrb[0].mxu0
  %v4698 = vadd.f32 %v4409, %v4697
  %v4699 = vpop.f32.mrb[0].mxu0
  %v4700 = vpop.f32.mrb[0].mxu0
  %v4701 = vadd.f32 %v4412, %v4700
  %v4702 = vpop.f32.mrb[0].mxu0
  %4703 = vmatprep.mubr.bf16.mxu0 0
  %4704 = vmatmul.mubr.bf16.gmra.mrb[0].mxu0 %v4202
  %v4705 = vpop.f32.mrb[0].mxu0
  %v4706 = vadd.f32 %v4417, %v4705
  %v4707 = vpop.f32.mrb[0].mxu0
  %v4708 = vpop.f32.mrb[0].mxu0
  %v4709 = vadd.f32 %v4420, %v4708
  %v4710 = vpop.f32.mrb[0].mxu0
  %4711 = vmatprep.mubr.bf16.mxu0 0
  %4712 = vmatmul.mubr.bf16.gmra.mrb[0].mxu0 %v4205
  %v4713 = vpop.f32.mrb[0].mxu0
  %v4714 = vadd.f32 %v4425, %v4713
  %v4715 = vpop.f32.mrb[0].mxu0
  %v4716 = vpop.f32.mrb[0].mxu0
  %v4717 = vadd.f32 %v4428, %v4716
  %v4718 = vpop.f32.mrb[0].mxu0
  %4719 = vmatprep.mubr.bf16.mxu0 0
  %4720 = vmatmul.mubr.bf16.gmra.mrb[0].mxu0 %v4208
  %v4721 = vpop.f32.mrb[0].mxu0
  %v4722 = vadd.f32 %v4433, %v4721
  %v4723 = vpop.f32.mrb[0].mxu0
  %v4724 = vpop.f32.mrb[0].mxu0
  %v4725 = vadd.f32 %v4436, %v4724
  %v4726 = vpop.f32.mrb[0].mxu0
  %4727 = vmatprep.mubr.bf16.mxu0 0
  %4728 = vmatmul.mubr.bf16.gmra.mrb[0].mxu0 %v4211
  %v4729 = vpop.f32.mrb[0].mxu0
  %v4730 = vadd.f32 %v4441, %v4729
  %v4731 = vpop.f32.mrb[0].mxu0
  %v4732 = vpop.f32.mrb[0].mxu0
  %v4733 = vadd.f32 %v4444, %v4732
  %v4734 = vpop.f32.mrb[0].mxu0
  %4735 = vmatprep.mubr.bf16.mxu0 0
  %4736 = vmatmul.mubr.bf16.gmra.mrb[0].mxu0 %v4214
  %v4737 = vpop.f32.mrb[0].mxu0
  %v4738 = vadd.f32 %v4449, %v4737
  %v4739 = vpop.f32.mrb[0].mxu0
  %v4740 = vpop.f32.mrb[0].mxu0
  %v4741 = vadd.f32 %v4452, %v4740
  %v4742 = vpop.f32.mrb[0].mxu0
  %4743 = vmatprep.mubr.bf16.mxu0 0
  %4744 = vmatmul.mubr.bf16.gmra.mrb[0].mxu0 %v4217
  %v4745 = vpop.f32.mrb[0].mxu0
  %v4746 = vadd.f32 %v4457, %v4745
  %v4747 = vpop.f32.mrb[0].mxu0
  %v4748 = vpop.f32.mrb[0].mxu0
  %v4749 = vadd.f32 %v4460, %v4748
  %v4750 = vpop.f32.mrb[0].mxu0
  %4751 = vmatprep.mubr.bf16.mxu0 0
  %4752 = vmatmul.mubr.bf16.gmra.mrb[0].mxu0 %v4220
  %v4753 = vpop.f32.mrb[0].mxu0
  %v4754 = vadd.f32 %v4465, %v4753
  %v4755 = vpop.f32.mrb[0].mxu0
  %v4756 = vpop.f32.mrb[0].mxu0
  %v4757 = vadd.f32 %v4468, %v4756
  %v4758 = vpop.f32.mrb[0].mxu0
  %4759 = vmatprep.mubr.bf16.mxu0 0
  %4760 = vmatmul.mubr.bf16.gmra.mrb[0].mxu0 %v4223
  %v4761 = vpop.f32.mrb[0].mxu0
  %v4762 = vadd.f32 %v4473, %v4761
  %v4763 = vpop.f32.mrb[0].mxu0
  %v4764 = vpop.f32.mrb[0].mxu0
  %v4765 = vadd.f32 %v4476, %v4764
  %v4766 = vpop.f32.mrb[0].mxu0
  %4767 = vmatprep.mubr.bf16.mxu0 0
  %4768 = vmatmul.mubr.bf16.gmra.mrb[0].mxu0 %v4226
  %v4769 = vpop.f32.mrb[0].mxu0
  %v4770 = vadd.f32 %v4481, %v4769
  %v4771 = vpop.f32.mrb[0].mxu0
  %v4772 = vpop.f32.mrb[0].mxu0
  %v4773 = vadd.f32 %v4484, %v4772
  %v4774 = vpop.f32.mrb[0].mxu0
  %4775 = vmatprep.mubr.bf16.mxu0 0
  %4776 = vmatmul.mubr.bf16.gmra.mrb[0].mxu0 %v4229
  %v4777 = vpop.f32.mrb[0].mxu0
  %v4778 = vadd.f32 %v4489, %v4777
  %v4779 = vpop.f32.mrb[0].mxu0
  %v4780 = vpop.f32.mrb[0].mxu0
  %v4781 = vadd.f32 %v4492, %v4780
  %v4782 = vpop.f32.mrb[0].mxu0
  %4783 = vmatprep.mubr.bf16.mxu0 0
  %4784 = vmatmul.mubr.bf16.gmra.mrb[0].mxu0 %v4232
  %v4785 = vpop.f32.mrb[0].mxu0
  %v4786 = vadd.f32 %v4497, %v4785
  %v4787 = vpop.f32.mrb[0].mxu0
  %v4788 = vpop.f32.mrb[0].mxu0
  %v4789 = vadd.f32 %v4500, %v4788
  %v4790 = vpop.f32.mrb[0].mxu0
  %4791 = vmatprep.mubr.bf16.mxu0 0
  %4792 = vmatmul.mubr.bf16.gmra.mrb[0].mxu0 %v4235
  %v4793 = vpop.f32.mrb[0].mxu0
  %v4794 = vadd.f32 %v4505, %v4793
  %v4795 = vpop.f32.mrb[0].mxu0
  %v4796 = vpop.f32.mrb[0].mxu0
  %v4797 = vadd.f32 %v4508, %v4796
  %v4798 = vpop.f32.mrb[0].mxu0
  %4799 = vmatprep.mubr.bf16.mxu0 0
  %4800 = vmatmul.mubr.bf16.gmra.mrb[0].mxu0 %v4238
  %v4801 = vpop.f32.mrb[0].mxu0
  %v4802 = vadd.f32 %v4513, %v4801
  %v4803 = vpop.f32.mrb[0].mxu0
  %v4804 = vpop.f32.mrb[0].mxu0
  %v4805 = vadd.f32 %v4516, %v4804
  %v4806 = vpop.f32.mrb[0].mxu0
  %4807 = vmatprep.mubr.bf16.mxu0 0
  %4808 = vmatmul.mubr.bf16.gmra.mrb[0].mxu0 %v4241
  %v4809 = vpop.f32.mrb[0].mxu0
  %v4810 = vadd.f32 %v4521, %v4809
  %v4811 = vpop.f32.mrb[0].mxu0
  %v4812 = vpop.f32.mrb[0].mxu0
  %v4813 = vadd.f32 %v4524, %v4812
  %v4814 = vpop.f32.mrb[0].mxu0
  %4815 = vmatprep.mubr.bf16.mxu0 0
  %4816 = vmatmul.mubr.bf16.gmra.mrb[0].mxu0 %v4244
  %v4817 = vpop.f32.mrb[0].mxu0
  %v4818 = vadd.f32 %v4529, %v4817
  %v4819 = vpop.f32.mrb[0].mxu0
  %v4820 = vpop.f32.mrb[0].mxu0
  %v4821 = vadd.f32 %v4532, %v4820
  %v4822 = vpop.f32.mrb[0].mxu0
  %4823 = vdwg.mxu0
  %4824 = vst.msk [vmem:[%s2] sm:$0xff] %vm3491, %v4570
  %4825 = vst.msk [vmem:[%s2 + $0x8] sm:$0xff] %vm3491, %v4573
  %4826 = vst.msk [vmem:[%s2 + $0x10] sm:$0xff] %vm3491, %v4578
  %4827 = vst.msk [vmem:[%s2 + $0x18] sm:$0xff] %vm3491, %v4581
  %4828 = vst.msk [vmem:[%s2 + $0x20] sm:$0xff] %vm3491, %v4586
  %4829 = vst.msk [vmem:[%s2 + $0x28] sm:$0xff] %vm3491, %v4589
  %4830 = vst.msk [vmem:[%s2 + $0x30] sm:$0xff] %vm3491, %v4594
  %4831 = vst.msk [vmem:[%s2 + $0x38] sm:$0xff] %vm3491, %v4597
  %4832 = vst.msk [vmem:[%s2 + $0x40] sm:$0xff] %vm3491, %v4602
  %4833 = vst.msk [vmem:[%s2 + $0x48] sm:$0xff] %vm3491, %v4605
  %4834 = vst.msk [vmem:[%s2 + $0x50] sm:$0xff] %vm3491, %v4610
  %4835 = vst.msk [vmem:[%s2 + $0x58] sm:$0xff] %vm3491, %v4613
  %4836 = vst.msk [vmem:[%s2 + $0x60] sm:$0xff] %vm3491, %v4618
  %4837 = vst.msk [vmem:[%s2 + $0x68] sm:$0xff] %vm3491, %v4621
  %4838 = vst.msk [vmem:[%s2 + $0x70] sm:$0xff] %vm3491, %v4626
  %4839 = vst.msk [vmem:[%s2 + $0x78] sm:$0xff] %vm3491, %v4629
  %4840 = vst.msk [vmem:[%s2 + $0x80] sm:$0xff] %vm3491, %v4634
  %4841 = vst.msk [vmem:[%s2 + $0x88] sm:$0xff] %vm3491, %v4637
  %4842 = vst.msk [vmem:[%s2 + $0x90] sm:$0xff] %vm3491, %v4642
  %4843 = vst.msk [vmem:[%s2 + $0x98] sm:$0xff] %vm3491, %v4645
  %4844 = vst.msk [vmem:[%s2 + $0xa0] sm:$0xff] %vm3491, %v4650
  %4845 = vst.msk [vmem:[%s2 + $0xa8] sm:$0xff] %vm3491, %v4653
  %4846 = vst.msk [vmem:[%s2 + $0xb0] sm:$0xff] %vm3491, %v4658
  %4847 = vst.msk [vmem:[%s2 + $0xb8] sm:$0xff] %vm3491, %v4661
  %4848 = vst.msk [vmem:[%s2 + $0xc0] sm:$0xff] %vm3491, %v4666
  %4849 = vst.msk [vmem:[%s2 + $0xc8] sm:$0xff] %vm3491, %v4669
  %4850 = vst.msk [vmem:[%s2 + $0xd0] sm:$0xff] %vm3491, %v4674
  %4851 = vst.msk [vmem:[%s2 + $0xd8] sm:$0xff] %vm3491, %v4677
  %4852 = vst.msk [vmem:[%s2 + $0xe0] sm:$0xff] %vm3491, %v4682
  %4853 = vst.msk [vmem:[%s2 + $0xe8] sm:$0xff] %vm3491, %v4685
  %4854 = vst.msk [vmem:[%s2 + $0xf0] sm:$0xff] %vm3491, %v4690
  %4855 = vst.msk [vmem:[%s2 + $0xf8] sm:$0xff] %vm3491, %v4693
  %4856 = vst.msk [vmem:[%s2 + $0x100] sm:$0xff] %vm3491, %v4698
  %4857 = vst.msk [vmem:[%s2 + $0x108] sm:$0xff] %vm3491, %v4701
  %4858 = vst.msk [vmem:[%s2 + $0x110] sm:$0xff] %vm3491, %v4706
  %4859 = vst.msk [vmem:[%s2 + $0x118] sm:$0xff] %vm3491, %v4709
  %4860 = vst.msk [vmem:[%s2 + $0x120] sm:$0xff] %vm3491, %v4714
  %4861 = vst.msk [vmem:[%s2 + $0x128] sm:$0xff] %vm3491, %v4717
  %4862 = vst.msk [vmem:[%s2 + $0x130] sm:$0xff] %vm3491, %v4722
  %4863 = vst.msk [vmem:[%s2 + $0x138] sm:$0xff] %vm3491, %v4725
  %4864 = vst.msk [vmem:[%s2 + $0x140] sm:$0xff] %vm3491, %v4730
  %4865 = vst.msk [vmem:[%s2 + $0x148] sm:$0xff] %vm3491, %v4733
  %4866 = vst.msk [vmem:[%s2 + $0x150] sm:$0xff] %vm3491, %v4738
  %4867 = vst.msk [vmem:[%s2 + $0x158] sm:$0xff] %vm3491, %v4741
  %4868 = vst.msk [vmem:[%s2 + $0x160] sm:$0xff] %vm3491, %v4746
  %4869 = vst.msk [vmem:[%s2 + $0x168] sm:$0xff] %vm3491, %v4749
  %4870 = vst.msk [vmem:[%s2 + $0x170] sm:$0xff] %vm3491, %v4754
  %4871 = vst.msk [vmem:[%s2 + $0x178] sm:$0xff] %vm3491, %v4757
  %4872 = vst.msk [vmem:[%s2 + $0x180] sm:$0xff] %vm3491, %v4762
  %4873 = vst.msk [vmem:[%s2 + $0x188] sm:$0xff] %vm3491, %v4765
  %4874 = vst.msk [vmem:[%s2 + $0x190] sm:$0xff] %vm3491, %v4770
  %4875 = vst.msk [vmem:[%s2 + $0x198] sm:$0xff] %vm3491, %v4773
  %4876 = vst.msk [vmem:[%s2 + $0x1a0] sm:$0xff] %vm3491, %v4778
  %4877 = vst.msk [vmem:[%s2 + $0x1a8] sm:$0xff] %vm3491, %v4781
  %4878 = vst.msk [vmem:[%s2 + $0x1b0] sm:$0xff] %vm3491, %v4786
  %4879 = vst.msk [vmem:[%s2 + $0x1b8] sm:$0xff] %vm3491, %v4789
  %4880 = vst.msk [vmem:[%s2 + $0x1c0] sm:$0xff] %vm3491, %v4794
  %4881 = vst.msk [vmem:[%s2 + $0x1c8] sm:$0xff] %vm3491, %v4797
  %4882 = vst.msk [vmem:[%s2 + $0x1d0] sm:$0xff] %vm3491, %v4802
  %4883 = vst.msk [vmem:[%s2 + $0x1d8] sm:$0xff] %vm3491, %v4805
  %4884 = vst.msk [vmem:[%s2 + $0x1e0] sm:$0xff] %vm3491, %v4810
  %4885 = vst.msk [vmem:[%s2 + $0x1e8] sm:$0xff] %vm3491, %v4813
  %4886 = vst.msk [vmem:[%s2 + $0x1f0] sm:$0xff] %vm3491, %v4818
  %4887 = vst.msk [vmem:[%s2 + $0x1f8] sm:$0xff] %vm3491, %v4821
  %v4888 = vsel %vm3491, %v4570, 0.0
  %v4889 = vsel %vm3491, %v4573, 0.0
  %v4890 = vadd.f32 %v4888, %v4889
  %v4891 = vsel %vm3491, %v4578, 0.0
  %v4892 = vadd.f32 %v4890, %v4891
  %v4893 = vsel %vm3491, %v4581, 0.0
  %v4894 = vadd.f32 %v4892, %v4893
  %v4895 = vsel %vm3491, %v4586, 0.0
  %v4896 = vadd.f32 %v4894, %v4895
  %v4897 = vsel %vm3491, %v4589, 0.0
  %v4898 = vadd.f32 %v4896, %v4897
  %v4899 = vsel %vm3491, %v4594, 0.0
  %v4900 = vadd.f32 %v4898, %v4899
  %v4901 = vsel %vm3491, %v4597, 0.0
  %v4902 = vadd.f32 %v4900, %v4901
  %v4903 = vsel %vm3491, %v4602, 0.0
  %v4904 = vadd.f32 %v4902, %v4903
  %v4905 = vsel %vm3491, %v4605, 0.0
  %v4906 = vadd.f32 %v4904, %v4905
  %v4907 = vsel %vm3491, %v4610, 0.0
  %v4908 = vadd.f32 %v4906, %v4907
  %v4909 = vsel %vm3491, %v4613, 0.0
  %v4910 = vadd.f32 %v4908, %v4909
  %v4911 = vsel %vm3491, %v4618, 0.0
  %v4912 = vadd.f32 %v4910, %v4911
  %v4913 = vsel %vm3491, %v4621, 0.0
  %v4914 = vadd.f32 %v4912, %v4913
  %v4915 = vsel %vm3491, %v4626, 0.0
  %v4916 = vadd.f32 %v4914, %v4915
  %v4917 = vsel %vm3491, %v4629, 0.0
  %v4918 = vadd.f32 %v4916, %v4917
  %v4919 = vsel %vm3491, %v4634, 0.0
  %v4920 = vadd.f32 %v4918, %v4919
  %v4921 = vsel %vm3491, %v4637, 0.0
  %v4922 = vadd.f32 %v4920, %v4921
  %v4923 = vsel %vm3491, %v4642, 0.0
  %v4924 = vadd.f32 %v4922, %v4923
  %v4925 = vsel %vm3491, %v4645, 0.0
  %v4926 = vadd.f32 %v4924, %v4925
  %v4927 = vsel %vm3491, %v4650, 0.0
  %v4928 = vadd.f32 %v4926, %v4927
  %v4929 = vsel %vm3491, %v4653, 0.0
  %v4930 = vadd.f32 %v4928, %v4929
  %v4931 = vsel %vm3491, %v4658, 0.0
  %v4932 = vadd.f32 %v4930, %v4931
  %v4933 = vsel %vm3491, %v4661, 0.0
  %v4934 = vadd.f32 %v4932, %v4933
  %v4935 = vsel %vm3491, %v4666, 0.0
  %v4936 = vadd.f32 %v4934, %v4935
  %v4937 = vsel %vm3491, %v4669, 0.0
  %v4938 = vadd.f32 %v4936, %v4937
  %v4939 = vsel %vm3491, %v4674, 0.0
  %v4940 = vadd.f32 %v4938, %v4939
  %v4941 = vsel %vm3491, %v4677, 0.0
  %v4942 = vadd.f32 %v4940, %v4941
  %v4943 = vsel %vm3491, %v4682, 0.0
  %v4944 = vadd.f32 %v4942, %v4943
  %v4945 = vsel %vm3491, %v4685, 0.0
  %v4946 = vadd.f32 %v4944, %v4945
  %v4947 = vsel %vm3491, %v4690, 0.0
  %v4948 = vadd.f32 %v4946, %v4947
  %v4949 = vsel %vm3491, %v4693, 0.0
  %v4950 = vadd.f32 %v4948, %v4949
  %v4951 = vsel %vm3491, %v4698, 0.0
  %v4952 = vadd.f32 %v4950, %v4951
  %v4953 = vsel %vm3491, %v4701, 0.0
  %v4954 = vadd.f32 %v4952, %v4953
  %v4955 = vsel %vm3491, %v4706, 0.0
  %v4956 = vadd.f32 %v4954, %v4955
  %v4957 = vsel %vm3491, %v4709, 0.0
  %v4958 = vadd.f32 %v4956, %v4957
  %v4959 = vsel %vm3491, %v4714, 0.0
  %v4960 = vadd.f32 %v4958, %v4959
  %v4961 = vsel %vm3491, %v4717, 0.0
  %v4962 = vadd.f32 %v4960, %v4961
  %v4963 = vsel %vm3491, %v4722, 0.0
  %v4964 = vadd.f32 %v4962, %v4963
  %v4965 = vsel %vm3491, %v4725, 0.0
  %v4966 = vadd.f32 %v4964, %v4965
  %v4967 = vsel %vm3491, %v4730, 0.0
  %v4968 = vadd.f32 %v4966, %v4967
  %v4969 = vsel %vm3491, %v4733, 0.0
  %v4970 = vadd.f32 %v4968, %v4969
  %v4971 = vsel %vm3491, %v4738, 0.0
  %v4972 = vadd.f32 %v4970, %v4971
  %v4973 = vsel %vm3491, %v4741, 0.0
  %v4974 = vadd.f32 %v4972, %v4973
  %v4975 = vsel %vm3491, %v4746, 0.0
  %v4976 = vadd.f32 %v4974, %v4975
  %v4977 = vsel %vm3491, %v4749, 0.0
  %v4978 = vadd.f32 %v4976, %v4977
  %v4979 = vsel %vm3491, %v4754, 0.0
  %v4980 = vadd.f32 %v4978, %v4979
  %v4981 = vsel %vm3491, %v4757, 0.0
  %v4982 = vadd.f32 %v4980, %v4981
  %v4983 = vsel %vm3491, %v4762, 0.0
  %v4984 = vadd.f32 %v4982, %v4983
  %v4985 = vsel %vm3491, %v4765, 0.0
  %v4986 = vadd.f32 %v4984, %v4985
  %v4987 = vsel %vm3491, %v4770, 0.0
  %v4988 = vadd.f32 %v4986, %v4987
  %v4989 = vsel %vm3491, %v4773, 0.0
  %v4990 = vadd.f32 %v4988, %v4989
  %v4991 = vsel %vm3491, %v4778, 0.0
  %v4992 = vadd.f32 %v4990, %v4991
  %v4993 = vsel %vm3491, %v4781, 0.0
  %v4994 = vadd.f32 %v4992, %v4993
  %v4995 = vsel %vm3491, %v4786, 0.0
  %v4996 = vadd.f32 %v4994, %v4995
  %v4997 = vsel %vm3491, %v4789, 0.0
  %v4998 = vadd.f32 %v4996, %v4997
  %v4999 = vsel %vm3491, %v4794, 0.0
  %v5000 = vadd.f32 %v4998, %v4999
  %v5001 = vsel %vm3491, %v4797, 0.0
  %v5002 = vadd.f32 %v5000, %v5001
  %v5003 = vsel %vm3491, %v4802, 0.0
  %v5004 = vadd.f32 %v5002, %v5003
  %v5005 = vsel %vm3491, %v4805, 0.0
  %v5006 = vadd.f32 %v5004, %v5005
  %v5007 = vsel %vm3491, %v4810, 0.0
  %v5008 = vadd.f32 %v5006, %v5007
  %v5009 = vsel %vm3491, %v4813, 0.0
  %v5010 = vadd.f32 %v5008, %v5009
  %v5011 = vsel %vm3491, %v4818, 0.0
  %v5012 = vadd.f32 %v5010, %v5011
  %v5013 = vsel %vm3491, %v4821, 0.0
  %v5014 = vadd.f32 %v5012, %v5013
  %v5015 = vrot.slane %v5014, 4
  %v5016 = vadd.f32 %v5014, %v5015
  %v5017 = vrot.slane %v5016, 2
  %v5018 = vadd.f32 %v5016, %v5017
  %v5019 = vrot.slane %v5018, 1
  %v5020 = vadd.f32 %v5018, %v5019
  %v5021 = vmul.f32 %v5020, 0.001953125
  %v5022 = vsub.f32 %v4570, %v5021
  %v5023 = vsub.f32 %v4573, %v5021
  %v5024 = vsub.f32 %v4578, %v5021
  %v5025 = vsub.f32 %v4581, %v5021
  %v5026 = vsub.f32 %v4586, %v5021
  %v5027 = vsub.f32 %v4589, %v5021
  %v5028 = vsub.f32 %v4594, %v5021
  %v5029 = vsub.f32 %v4597, %v5021
  %v5030 = vsub.f32 %v4602, %v5021
  %v5031 = vsub.f32 %v4605, %v5021
  %v5032 = vsub.f32 %v4610, %v5021
  %v5033 = vsub.f32 %v4613, %v5021
  %v5034 = vsub.f32 %v4618, %v5021
  %v5035 = vsub.f32 %v4621, %v5021
  %v5036 = vsub.f32 %v4626, %v5021
  %v5037 = vsub.f32 %v4629, %v5021
  %v5038 = vsub.f32 %v4634, %v5021
  %v5039 = vsub.f32 %v4637, %v5021
  %v5040 = vsub.f32 %v4642, %v5021
  %v5041 = vsub.f32 %v4645, %v5021
  %v5042 = vsub.f32 %v4650, %v5021
  %v5043 = vsub.f32 %v4653, %v5021
  %v5044 = vsub.f32 %v4658, %v5021
  %v5045 = vsub.f32 %v4661, %v5021
  %v5046 = vsub.f32 %v4666, %v5021
  %v5047 = vsub.f32 %v4669, %v5021
  %v5048 = vsub.f32 %v4674, %v5021
  %v5049 = vsub.f32 %v4677, %v5021
  %v5050 = vsub.f32 %v4682, %v5021
  %v5051 = vsub.f32 %v4685, %v5021
  %v5052 = vsub.f32 %v4690, %v5021
  %v5053 = vsub.f32 %v4693, %v5021
  %v5054 = vsub.f32 %v4698, %v5021
  %v5055 = vsub.f32 %v4701, %v5021
  %v5056 = vsub.f32 %v4706, %v5021
  %v5057 = vsub.f32 %v4709, %v5021
  %v5058 = vsub.f32 %v4714, %v5021
  %v5059 = vsub.f32 %v4717, %v5021
  %v5060 = vsub.f32 %v4722, %v5021
  %v5061 = vsub.f32 %v4725, %v5021
  %v5062 = vsub.f32 %v4730, %v5021
  %v5063 = vsub.f32 %v4733, %v5021
  %v5064 = vsub.f32 %v4738, %v5021
  %v5065 = vsub.f32 %v4741, %v5021
  %v5066 = vsub.f32 %v4746, %v5021
  %v5067 = vsub.f32 %v4749, %v5021
  %v5068 = vsub.f32 %v4754, %v5021
  %v5069 = vsub.f32 %v4757, %v5021
  %v5070 = vsub.f32 %v4762, %v5021
  %v5071 = vsub.f32 %v4765, %v5021
  %v5072 = vsub.f32 %v4770, %v5021
  %v5073 = vsub.f32 %v4773, %v5021
  %v5074 = vsub.f32 %v4778, %v5021
  %v5075 = vsub.f32 %v4781, %v5021
  %v5076 = vsub.f32 %v4786, %v5021
  %v5077 = vsub.f32 %v4789, %v5021
  %v5078 = vsub.f32 %v4794, %v5021
  %v5079 = vsub.f32 %v4797, %v5021
  %v5080 = vsub.f32 %v4802, %v5021
  %v5081 = vsub.f32 %v4805, %v5021
  %v5082 = vsub.f32 %v4810, %v5021
  %v5083 = vsub.f32 %v4813, %v5021
  %v5084 = vsub.f32 %v4818, %v5021
  %v5085 = vsub.f32 %v4821, %v5021
  %v5086 = vmul.f32 %v5022, %v5022
  %v5087 = vmul.f32 %v5023, %v5023
  %v5088 = vmul.f32 %v5024, %v5024
  %v5089 = vmul.f32 %v5025, %v5025
  %v5090 = vmul.f32 %v5026, %v5026
  %v5091 = vmul.f32 %v5027, %v5027
  %v5092 = vmul.f32 %v5028, %v5028
  %v5093 = vmul.f32 %v5029, %v5029
  %v5094 = vmul.f32 %v5030, %v5030
  %v5095 = vmul.f32 %v5031, %v5031
  %v5096 = vmul.f32 %v5032, %v5032
  %v5097 = vmul.f32 %v5033, %v5033
  %v5098 = vmul.f32 %v5034, %v5034
  %v5099 = vmul.f32 %v5035, %v5035
  %v5100 = vmul.f32 %v5036, %v5036
  %v5101 = vmul.f32 %v5037, %v5037
  %v5102 = vmul.f32 %v5038, %v5038
  %v5103 = vmul.f32 %v5039, %v5039
  %v5104 = vmul.f32 %v5040, %v5040
  %v5105 = vmul.f32 %v5041, %v5041
  %v5106 = vmul.f32 %v5042, %v5042
  %v5107 = vmul.f32 %v5043, %v5043
  %v5108 = vmul.f32 %v5044, %v5044
  %v5109 = vmul.f32 %v5045, %v5045
  %v5110 = vmul.f32 %v5046, %v5046
  %v5111 = vmul.f32 %v5047, %v5047
  %v5112 = vmul.f32 %v5048, %v5048
  %v5113 = vmul.f32 %v5049, %v5049
  %v5114 = vmul.f32 %v5050, %v5050
  %v5115 = vmul.f32 %v5051, %v5051
  %v5116 = vmul.f32 %v5052, %v5052
  %v5117 = vmul.f32 %v5053, %v5053
  %v5118 = vmul.f32 %v5054, %v5054
  %v5119 = vmul.f32 %v5055, %v5055
  %v5120 = vmul.f32 %v5056, %v5056
  %v5121 = vmul.f32 %v5057, %v5057
  %v5122 = vmul.f32 %v5058, %v5058
  %v5123 = vmul.f32 %v5059, %v5059
  %v5124 = vmul.f32 %v5060, %v5060
  %v5125 = vmul.f32 %v5061, %v5061
  %v5126 = vmul.f32 %v5062, %v5062
  %v5127 = vmul.f32 %v5063, %v5063
  %v5128 = vmul.f32 %v5064, %v5064
  %v5129 = vmul.f32 %v5065, %v5065
  %v5130 = vmul.f32 %v5066, %v5066
  %v5131 = vmul.f32 %v5067, %v5067
  %v5132 = vmul.f32 %v5068, %v5068
  %v5133 = vmul.f32 %v5069, %v5069
  %v5134 = vmul.f32 %v5070, %v5070
  %v5135 = vmul.f32 %v5071, %v5071
  %v5136 = vmul.f32 %v5072, %v5072
  %v5137 = vmul.f32 %v5073, %v5073
  %v5138 = vmul.f32 %v5074, %v5074
  %v5139 = vmul.f32 %v5075, %v5075
  %v5140 = vmul.f32 %v5076, %v5076
  %v5141 = vmul.f32 %v5077, %v5077
  %v5142 = vmul.f32 %v5078, %v5078
  %v5143 = vmul.f32 %v5079, %v5079
  %v5144 = vmul.f32 %v5080, %v5080
  %v5145 = vmul.f32 %v5081, %v5081
  %v5146 = vmul.f32 %v5082, %v5082
  %v5147 = vmul.f32 %v5083, %v5083
  %v5148 = vmul.f32 %v5084, %v5084
  %v5149 = vmul.f32 %v5085, %v5085
  %v5150 = vsel %vm3491, %v5086, 0.0
  %v5151 = vsel %vm3491, %v5087, 0.0
  %v5152 = vadd.f32 %v5150, %v5151
  %v5153 = vsel %vm3491, %v5088, 0.0
  %v5154 = vadd.f32 %v5152, %v5153
  %v5155 = vsel %vm3491, %v5089, 0.0
  %v5156 = vadd.f32 %v5154, %v5155
  %v5157 = vsel %vm3491, %v5090, 0.0
  %v5158 = vadd.f32 %v5156, %v5157
  %v5159 = vsel %vm3491, %v5091, 0.0
  %v5160 = vadd.f32 %v5158, %v5159
  %v5161 = vsel %vm3491, %v5092, 0.0
  %v5162 = vadd.f32 %v5160, %v5161
  %v5163 = vsel %vm3491, %v5093, 0.0
  %v5164 = vadd.f32 %v5162, %v5163
  %v5165 = vsel %vm3491, %v5094, 0.0
  %v5166 = vadd.f32 %v5164, %v5165
  %v5167 = vsel %vm3491, %v5095, 0.0
  %v5168 = vadd.f32 %v5166, %v5167
  %v5169 = vsel %vm3491, %v5096, 0.0
  %v5170 = vadd.f32 %v5168, %v5169
  %v5171 = vsel %vm3491, %v5097, 0.0
  %v5172 = vadd.f32 %v5170, %v5171
  %v5173 = vsel %vm3491, %v5098, 0.0
  %v5174 = vadd.f32 %v5172, %v5173
  %v5175 = vsel %vm3491, %v5099, 0.0
  %v5176 = vadd.f32 %v5174, %v5175
  %v5177 = vsel %vm3491, %v5100, 0.0
  %v5178 = vadd.f32 %v5176, %v5177
  %v5179 = vsel %vm3491, %v5101, 0.0
  %v5180 = vadd.f32 %v5178, %v5179
  %v5181 = vsel %vm3491, %v5102, 0.0
  %v5182 = vadd.f32 %v5180, %v5181
  %v5183 = vsel %vm3491, %v5103, 0.0
  %v5184 = vadd.f32 %v5182, %v5183
  %v5185 = vsel %vm3491, %v5104, 0.0
  %v5186 = vadd.f32 %v5184, %v5185
  %v5187 = vsel %vm3491, %v5105, 0.0
  %v5188 = vadd.f32 %v5186, %v5187
  %v5189 = vsel %vm3491, %v5106, 0.0
  %v5190 = vadd.f32 %v5188, %v5189
  %v5191 = vsel %vm3491, %v5107, 0.0
  %v5192 = vadd.f32 %v5190, %v5191
  %v5193 = vsel %vm3491, %v5108, 0.0
  %v5194 = vadd.f32 %v5192, %v5193
  %v5195 = vsel %vm3491, %v5109, 0.0
  %v5196 = vadd.f32 %v5194, %v5195
  %v5197 = vsel %vm3491, %v5110, 0.0
  %v5198 = vadd.f32 %v5196, %v5197
  %v5199 = vsel %vm3491, %v5111, 0.0
  %v5200 = vadd.f32 %v5198, %v5199
  %v5201 = vsel %vm3491, %v5112, 0.0
  %v5202 = vadd.f32 %v5200, %v5201
  %v5203 = vsel %vm3491, %v5113, 0.0
  %v5204 = vadd.f32 %v5202, %v5203
  %v5205 = vsel %vm3491, %v5114, 0.0
  %v5206 = vadd.f32 %v5204, %v5205
  %v5207 = vsel %vm3491, %v5115, 0.0
  %v5208 = vadd.f32 %v5206, %v5207
  %v5209 = vsel %vm3491, %v5116, 0.0
  %v5210 = vadd.f32 %v5208, %v5209
  %v5211 = vsel %vm3491, %v5117, 0.0
  %v5212 = vadd.f32 %v5210, %v5211
  %v5213 = vsel %vm3491, %v5118, 0.0
  %v5214 = vadd.f32 %v5212, %v5213
  %v5215 = vsel %vm3491, %v5119, 0.0
  %v5216 = vadd.f32 %v5214, %v5215
  %v5217 = vsel %vm3491, %v5120, 0.0
  %v5218 = vadd.f32 %v5216, %v5217
  %v5219 = vsel %vm3491, %v5121, 0.0
  %v5220 = vadd.f32 %v5218, %v5219
  %v5221 = vsel %vm3491, %v5122, 0.0
  %v5222 = vadd.f32 %v5220, %v5221
  %v5223 = vsel %vm3491, %v5123, 0.0
  %v5224 = vadd.f32 %v5222, %v5223
  %v5225 = vsel %vm3491, %v5124, 0.0
  %v5226 = vadd.f32 %v5224, %v5225
  %v5227 = vsel %vm3491, %v5125, 0.0
  %v5228 = vadd.f32 %v5226, %v5227
  %v5229 = vsel %vm3491, %v5126, 0.0
  %v5230 = vadd.f32 %v5228, %v5229
  %v5231 = vsel %vm3491, %v5127, 0.0
  %v5232 = vadd.f32 %v5230, %v5231
  %v5233 = vsel %vm3491, %v5128, 0.0
  %v5234 = vadd.f32 %v5232, %v5233
  %v5235 = vsel %vm3491, %v5129, 0.0
  %v5236 = vadd.f32 %v5234, %v5235
  %v5237 = vsel %vm3491, %v5130, 0.0
  %v5238 = vadd.f32 %v5236, %v5237
  %v5239 = vsel %vm3491, %v5131, 0.0
  %v5240 = vadd.f32 %v5238, %v5239
  %v5241 = vsel %vm3491, %v5132, 0.0
  %v5242 = vadd.f32 %v5240, %v5241
  %v5243 = vsel %vm3491, %v5133, 0.0
  %v5244 = vadd.f32 %v5242, %v5243
  %v5245 = vsel %vm3491, %v5134, 0.0
  %v5246 = vadd.f32 %v5244, %v5245
  %v5247 = vsel %vm3491, %v5135, 0.0
  %v5248 = vadd.f32 %v5246, %v5247
  %v5249 = vsel %vm3491, %v5136, 0.0
  %v5250 = vadd.f32 %v5248, %v5249
  %v5251 = vsel %vm3491, %v5137, 0.0
  %v5252 = vadd.f32 %v5250, %v5251
  %v5253 = vsel %vm3491, %v5138, 0.0
  %v5254 = vadd.f32 %v5252, %v5253
  %v5255 = vsel %vm3491, %v5139, 0.0
  %v5256 = vadd.f32 %v5254, %v5255
  %v5257 = vsel %vm3491, %v5140, 0.0
  %v5258 = vadd.f32 %v5256, %v5257
  %v5259 = vsel %vm3491, %v5141, 0.0
  %v5260 = vadd.f32 %v5258, %v5259
  %v5261 = vsel %vm3491, %v5142, 0.0
  %v5262 = vadd.f32 %v5260, %v5261
  %v5263 = vsel %vm3491, %v5143, 0.0
  %v5264 = vadd.f32 %v5262, %v5263
  %v5265 = vsel %vm3491, %v5144, 0.0
  %v5266 = vadd.f32 %v5264, %v5265
  %v5267 = vsel %vm3491, %v5145, 0.0
  %v5268 = vadd.f32 %v5266, %v5267
  %v5269 = vsel %vm3491, %v5146, 0.0
  %v5270 = vadd.f32 %v5268, %v5269
  %v5271 = vsel %vm3491, %v5147, 0.0
  %v5272 = vadd.f32 %v5270, %v5271
  %v5273 = vsel %vm3491, %v5148, 0.0
  %v5274 = vadd.f32 %v5272, %v5273
  %v5275 = vsel %vm3491, %v5149, 0.0
  %v5276 = vadd.f32 %v5274, %v5275
  %v5277 = vrot.slane %v5276, 4
  %v5278 = vadd.f32 %v5276, %v5277
  %v5279 = vrot.slane %v5278, 2
  %v5280 = vadd.f32 %v5278, %v5279
  %v5281 = vrot.slane %v5280, 1
  %v5282 = vadd.f32 %v5280, %v5281
  %vm5283 = vcmask 1040384
  %v5284 = vsel %vm5283, %v5021, %v5282
  %vm5285 = vcmask 254976
  %5286 = vst.msk [vmem:[%s3] sm:$0x3] %vm5285, %v5284
  // Predicated region
  $region10: #{resblock_forward.2} parent=0 // pred_check
    _
  $region11: #{resblock_forward.2} parent=0 // pred_check_branch
    %5288 = sbr.rel (0) target = $region13
  $region12: #{resblock_forward.2} parent=0 // pred_region
    _
  $region13: #{resblock_forward.2} parent=0 // pred_fallthru
    _
  // Predicated region
  $region14: #{resblock_forward.2} parent=0 // pred_check
    _
  $region15: #{resblock_forward.2} parent=0 // pred_check_branch
    %5290 = sbr.rel (0) target = $region17
  $region16: #{resblock_forward.2} parent=0 // pred_region
    _
  $region17: #{resblock_forward.2} parent=0 // pred_fallthru
    _
  // Predicated region
  $region18: #{resblock_forward.2} parent=0 // pred_check
    _
  $region19: #{resblock_forward.2} parent=0 // pred_check_branch
    %5292 = sbr.rel (0) target = $region21
  $region20: #{resblock_forward.2} parent=0 // pred_region
    _
  $region21: #{resblock_forward.2} parent=0 // pred_fallthru
    _
  // Predicated region
  $region22: #{resblock_forward.2} parent=0 // pred_check
    _
  $region23: #{resblock_forward.2} parent=0 // pred_check_branch
    %5294 = sbr.rel (0) target = $region25
  $region24: #{resblock_forward.2} parent=0 // pred_region
    _
  $region25: #{resblock_forward.2} parent=0 // pred_fallthru
    _

</llo_original>
